<compile_context>
chip_gen: v6e
topology: v6e:2x2x1
jax: 0.10.0
libtpu: 0.0.40
codegen_flags: <defaults>
</compile_context>

<pallas_src>
import jax
import jax.numpy as jnp
from jax.experimental import pallas as pl
from jax.experimental.pallas import tpu as pltpu


def _round_up(x, m):
    return (x + m - 1) // m * m


def _leaky_relu(x, slope=0.2):
    return jnp.where(x >= 0, x, slope * x)


def generator_kernel(x_ref,
                     w1_ref, b1_ref,
                     w2_ref, b2_ref,
                     w3_ref, b3_ref,
                     w4_ref, b4_ref,
                     out_ref):
    # Layers 1-3: small weights stay resident in VMEM (constant index maps) and
    # B is only a few sublanes of rows, so recomputing them for every N-tile of
    # layer 4 costs ~nothing next to the W4-tile DMA. This keeps the single
    # grid axis fully "parallel" (megacore-shardable) with no cross-step state.
    h = x_ref[...].astype(jnp.bfloat16)
    h = jnp.dot(h, w1_ref[...], preferred_element_type=jnp.float32)
    h = _leaky_relu(h + b1_ref[...]).astype(jnp.bfloat16)

    h = jnp.dot(h, w2_ref[...], preferred_element_type=jnp.float32)
    h = _leaky_relu(h + b2_ref[...]).astype(jnp.bfloat16)

    h = jnp.dot(h, w3_ref[...], preferred_element_type=jnp.float32)
    h = _leaky_relu(h + b3_ref[...]).astype(jnp.bfloat16)

    # Layer 4: only a (1024, TN) slice of W4 and (1, TN) slice of b4 per step.
    h = jnp.dot(h, w4_ref[...], preferred_element_type=jnp.float32)
    out_ref[...] = jnp.tanh(h + b4_ref[...])


def generator_forward(x, params, *, image_size, channels, tile_n=1024):
    """x: (B, latent_dims) f32. Returns (B, channels, image_size, image_size) f32."""
    (w1, b1), (w2, b2), (w3, b3), (w4, b4) = params
    B, latent = x.shape
    out_dim = image_size * image_size * channels

    # Pad B to a sublane multiple (removes masked vst on the output tile) and
    # out_dim to a lane-dense multiple of the N tile.
    b_pad = _round_up(max(B, 8), 8)
    tn = _round_up(min(tile_n, _round_up(out_dim, 128)), 128)
    out_pad = _round_up(out_dim, tn)
    n_steps = out_pad // tn

    if b_pad != B:
        x = jnp.pad(x, ((0, b_pad - B), (0, 0)))
    if out_pad != out_dim:
        w4 = jnp.pad(w4, ((0, 0), (0, out_pad - out_dim)))
        b4 = jnp.pad(b4, ((0, 0), (0, out_pad - out_dim)))

    def const_spec(shape):
        return pl.BlockSpec(shape, lambda j: (0, 0))

    in_specs = [
        const_spec((b_pad, latent)),                   # x        (resident)
        const_spec(w1.shape), const_spec(b1.shape),    # layer 1  (resident)
        const_spec(w2.shape), const_spec(b2.shape),    # layer 2  (resident)
        const_spec(w3.shape), const_spec(b3.shape),    # layer 3  (resident)
        pl.BlockSpec((1024, tn), lambda j: (0, j)),    # W4 tile  (pipelined)
        pl.BlockSpec((1, tn), lambda j: (0, j)),       # b4 tile
    ]
    out_spec = pl.BlockSpec((b_pad, tn), lambda j: (0, j))

    # VMEM budget from actual footprint: resident small layers + double-buffered
    # layer-4 / output tiles, with 2x headroom.  Never request the whole chip
    # (v7x only has 64 MiB physical).
    resident = (x.size * x.dtype.itemsize
                + sum(a.size * a.dtype.itemsize for a in (w1, b1, w2, b2, w3, b3)))
    per_tile = (1024 * tn * w4.dtype.itemsize
                + tn * b4.dtype.itemsize
                + b_pad * tn * 4)
    vmem_limit = int(min(48 << 20, max(16 << 20, 2 * (resident + 2 * per_tile))))

    flops = (2 * b_pad * n_steps * (latent * 256 + 256 * 512 + 512 * 1024)
             + 2 * b_pad * 1024 * out_pad)
    bytes_accessed = (resident
                      + 1024 * out_pad * w4.dtype.itemsize
                      + out_pad * b4.dtype.itemsize
                      + b_pad * out_pad * 4)

    flat = pl.pallas_call(
        generator_kernel,
        out_shape=jax.ShapeDtypeStruct((b_pad, out_pad), jnp.float32),
        grid_spec=pltpu.PrefetchScalarGridSpec(
            num_scalar_prefetch=0,
            grid=(n_steps,),
            in_specs=in_specs,
            out_specs=out_spec,
        ),
        compiler_params=pltpu.CompilerParams(
            dimension_semantics=("parallel",),
            vmem_limit_bytes=vmem_limit,
        ),
        cost_estimate=pl.CostEstimate(
            flops=flops,
            transcendentals=b_pad * out_pad,
            bytes_accessed=bytes_accessed,
        ),
    )(x, w1, b1, w2, b2, w3, b3, w4, b4)

    # Strip padding, then NCHW reshape exactly like `output.view(-1, C, H, W)`.
    return flat[:B, :out_dim].reshape(B, channels, image_size, image_size)


def init_generator_params(key, latent_dims, image_size, channels):
    """nn.Linear-style init (uniform +-1/sqrt(fan_in)).

    Weights are stored as (in_features, out_features) in bf16 so the HBM weight
    read (the kernel's dominant cost) is halved and feeds the MXU natively.
    Biases stay f32 (they live on the f32 VPU activation path).
    """
    dims = [latent_dims, 256, 512, 1024, image_size * image_size * channels]
    params = []
    for i in range(4):
        key, kw, kb = jax.random.split(key, 3)
        fan_in, fan_out = dims[i], dims[i + 1]
        bound = 1.0 / float(fan_in) ** 0.5
        w = jax.random.uniform(kw, (fan_in, fan_out), jnp.float32, -bound, bound)
        b = jax.random.uniform(kb, (1, fan_out), jnp.float32, -bound, bound)
        params.append((w.astype(jnp.bfloat16), b))
    return params


def generator_reference(x, params):
    """Pure-JAX reference with the same bf16-weight / f32-accumulate math."""
    (w1, b1), (w2, b2), (w3, b3), (w4, b4) = params
    h = x
    for w, b in ((w1, b1), (w2, b2), (w3, b3)):
        h = jnp.dot(h.astype(jnp.bfloat16), w, preferred_element_type=jnp.float32) + b
        h = jnp.where(h >= 0, h, 0.2 * h)
    h = jnp.dot(h.astype(jnp.bfloat16), w4, preferred_element_type=jnp.float32) + b4
    return jnp.tanh(h)


# TODO(synk): the module's Adam optimizer is training state, not part of forward;
# it is intentionally not implemented here.

if __name__ == "__main__":
    image_size = 16
    channels = 4
    latent_dims = 32
    batch = 2

    key = jax.random.PRNGKey(0)
    key, xkey = jax.random.split(key)
    x = jax.random.normal(xkey, (batch, latent_dims), jnp.float32)

    params = init_generator_params(key, latent_dims, image_size, channels)

    # tile_n=512 at this small size exercises a 2-step grid (tiled W4 index
    # maps + both v7x cores); default tile_n=1024 is used for realistic sizes.
    out = generator_forward(x, params, image_size=image_size, channels=channels,
                            tile_n=512)
    out = jax.block_until_ready(out)

    assert out.shape == (batch, channels, image_size, image_size), out.shape
    assert out.dtype == jnp.float32
    # Tanh output range sanity check.
    assert bool(jnp.all(jnp.abs(out) <= 1.0))

    # Numerical check against the pure-JAX reference (same bf16/f32 math).
    ref = generator_reference(x, params).reshape(batch, channels,
                                                 image_size, image_size)
    assert bool(jnp.allclose(out, ref, atol=1e-2, rtol=1e-2)), \
        float(jnp.max(jnp.abs(out - ref)))

    print("KERNEL_OK")
</pallas_src>

<mosaic_0001>
module attributes {stable_mosaic.version = 11 : i64} {
  func.func @generator_kernel(%arg0: i32, %arg1: memref<8x32xf32, #tpu.memory_space<vmem>>, %arg2: memref<32x256xbf16, #tpu.memory_space<vmem>>, %arg3: memref<1x256xf32, #tpu.memory_space<vmem>>, %arg4: memref<256x512xbf16, #tpu.memory_space<vmem>>, %arg5: memref<1x512xf32, #tpu.memory_space<vmem>>, %arg6: memref<512x1024xbf16, #tpu.memory_space<vmem>>, %arg7: memref<1x1024xf32, #tpu.memory_space<vmem>>, %arg8: memref<1024x512xbf16, #tpu.memory_space<vmem>>, %arg9: memref<1x512xf32, #tpu.memory_space<vmem>>, %arg10: memref<8x512xf32, #tpu.memory_space<vmem>>) attributes {dimension_semantics = [#tpu.dimension_semantics<parallel>], iteration_bounds = array<i64: 2>, scalar_prefetch = 0 : i64, scratch_operands = 0 : i64, tpu.core_type = #tpu.core_type<tc>, window_params = [{pipeline_mode = #tpu.pipeline_mode<synchronous>, transform_indices = @transform_0, window_bounds = array<i64: 8, 32>}, {pipeline_mode = #tpu.pipeline_mode<synchronous>, transform_indices = @transform_1, window_bounds = array<i64: 32, 256>}, {pipeline_mode = #tpu.pipeline_mode<synchronous>, transform_indices = @transform_2, window_bounds = array<i64: 1, 256>}, {pipeline_mode = #tpu.pipeline_mode<synchronous>, transform_indices = @transform_3, window_bounds = array<i64: 256, 512>}, {pipeline_mode = #tpu.pipeline_mode<synchronous>, transform_indices = @transform_4, window_bounds = array<i64: 1, 512>}, {pipeline_mode = #tpu.pipeline_mode<synchronous>, transform_indices = @transform_5, window_bounds = array<i64: 512, 1024>}, {pipeline_mode = #tpu.pipeline_mode<synchronous>, transform_indices = @transform_6, window_bounds = array<i64: 1, 1024>}, {transform_indices = @transform_7, window_bounds = array<i64: 1024, 512>}, {transform_indices = @transform_8, window_bounds = array<i64: 1, 512>}, {transform_indices = @transform_9, window_bounds = array<i64: 8, 512>}]} {
    %c0 = arith.constant 0 : index
    %c0_0 = arith.constant 0 : index
    %0 = vector.load %arg1[%c0, %c0_0] : memref<8x32xf32, #tpu.memory_space<vmem>>, vector<8x32xf32>
    %1 = arith.truncf %0 : vector<8x32xf32> to vector<8x32xbf16>
    %c0_1 = arith.constant 0 : index
    %c0_2 = arith.constant 0 : index
    %2 = vector.load %arg2[%c0_1, %c0_2] : memref<32x256xbf16, #tpu.memory_space<vmem>>, vector<32x256xbf16>
    %cst = arith.constant dense<0.000000e+00> : vector<8x256xf32>
    %3 = tpu.matmul %1, %2, %cst {dimension_numbers = #tpu.dot_dimension_numbers<[1], [0], [0], [1], [0, 0, 1, 1], [], []>} : vector<8x32xbf16>, vector<32x256xbf16>, vector<8x256xf32> -> vector<8x256xf32>
    %c0_3 = arith.constant 0 : index
    %c0_4 = arith.constant 0 : index
    %4 = vector.load %arg3[%c0_3, %c0_4] : memref<1x256xf32, #tpu.memory_space<vmem>>, vector<1x256xf32>
    %5 = vector.broadcast %4 : vector<1x256xf32> to vector<8x256xf32>
    %6 = arith.addf %3, %5 : vector<8x256xf32>
    %cst_5 = arith.constant 0.000000e+00 : f32
    %7 = vector.broadcast %cst_5 : f32 to vector<8x256xf32>
    %8 = arith.cmpf oge, %6, %7 : vector<8x256xf32>
    %cst_6 = arith.constant 2.000000e-01 : f32
    %9 = vector.broadcast %cst_6 : f32 to vector<8x256xf32>
    %10 = arith.mulf %9, %6 : vector<8x256xf32>
    %11 = arith.select %8, %6, %10 : vector<8x256xi1>, vector<8x256xf32>
    %12 = arith.truncf %11 : vector<8x256xf32> to vector<8x256xbf16>
    %c0_7 = arith.constant 0 : index
    %c0_8 = arith.constant 0 : index
    %13 = vector.load %arg4[%c0_7, %c0_8] : memref<256x512xbf16, #tpu.memory_space<vmem>>, vector<256x512xbf16>
    %cst_9 = arith.constant dense<0.000000e+00> : vector<8x512xf32>
    %14 = tpu.matmul %12, %13, %cst_9 {dimension_numbers = #tpu.dot_dimension_numbers<[1], [0], [0], [1], [0, 0, 1, 1], [], []>} : vector<8x256xbf16>, vector<256x512xbf16>, vector<8x512xf32> -> vector<8x512xf32>
    %c0_10 = arith.constant 0 : index
    %c0_11 = arith.constant 0 : index
    %15 = vector.load %arg5[%c0_10, %c0_11] : memref<1x512xf32, #tpu.memory_space<vmem>>, vector<1x512xf32>
    %16 = vector.broadcast %15 : vector<1x512xf32> to vector<8x512xf32>
    %17 = arith.addf %14, %16 : vector<8x512xf32>
    %cst_12 = arith.constant 0.000000e+00 : f32
    %18 = vector.broadcast %cst_12 : f32 to vector<8x512xf32>
    %19 = arith.cmpf oge, %17, %18 : vector<8x512xf32>
    %cst_13 = arith.constant 2.000000e-01 : f32
    %20 = vector.broadcast %cst_13 : f32 to vector<8x512xf32>
    %21 = arith.mulf %20, %17 : vector<8x512xf32>
    %22 = arith.select %19, %17, %21 : vector<8x512xi1>, vector<8x512xf32>
    %23 = arith.truncf %22 : vector<8x512xf32> to vector<8x512xbf16>
    %c0_14 = arith.constant 0 : index
    %c0_15 = arith.constant 0 : index
    %24 = vector.load %arg6[%c0_14, %c0_15] : memref<512x1024xbf16, #tpu.memory_space<vmem>>, vector<512x1024xbf16>
    %cst_16 = arith.constant dense<0.000000e+00> : vector<8x1024xf32>
    %25 = tpu.matmul %23, %24, %cst_16 {dimension_numbers = #tpu.dot_dimension_numbers<[1], [0], [0], [1], [0, 0, 1, 1], [], []>} : vector<8x512xbf16>, vector<512x1024xbf16>, vector<8x1024xf32> -> vector<8x1024xf32>
    %c0_17 = arith.constant 0 : index
    %c0_18 = arith.constant 0 : index
    %26 = vector.load %arg7[%c0_17, %c0_18] : memref<1x1024xf32, #tpu.memory_space<vmem>>, vector<1x1024xf32>
    %27 = vector.broadcast %26 : vector<1x1024xf32> to vector<8x1024xf32>
    %28 = arith.addf %25, %27 : vector<8x1024xf32>
    %cst_19 = arith.constant 0.000000e+00 : f32
    %29 = vector.broadcast %cst_19 : f32 to vector<8x1024xf32>
    %30 = arith.cmpf oge, %28, %29 : vector<8x1024xf32>
    %cst_20 = arith.constant 2.000000e-01 : f32
    %31 = vector.broadcast %cst_20 : f32 to vector<8x1024xf32>
    %32 = arith.mulf %31, %28 : vector<8x1024xf32>
    %33 = arith.select %30, %28, %32 : vector<8x1024xi1>, vector<8x1024xf32>
    %34 = arith.truncf %33 : vector<8x1024xf32> to vector<8x1024xbf16>
    %c0_21 = arith.constant 0 : index
    %c0_22 = arith.constant 0 : index
    %35 = vector.load %arg8[%c0_21, %c0_22] : memref<1024x512xbf16, #tpu.memory_space<vmem>>, vector<1024x512xbf16>
    %cst_23 = arith.constant dense<0.000000e+00> : vector<8x512xf32>
    %36 = tpu.matmul %34, %35, %cst_23 {dimension_numbers = #tpu.dot_dimension_numbers<[1], [0], [0], [1], [0, 0, 1, 1], [], []>} : vector<8x1024xbf16>, vector<1024x512xbf16>, vector<8x512xf32> -> vector<8x512xf32>
    %c0_24 = arith.constant 0 : index
    %c0_25 = arith.constant 0 : index
    %37 = vector.load %arg9[%c0_24, %c0_25] : memref<1x512xf32, #tpu.memory_space<vmem>>, vector<1x512xf32>
    %38 = vector.broadcast %37 : vector<1x512xf32> to vector<8x512xf32>
    %39 = arith.addf %36, %38 : vector<8x512xf32>
    %40 = math.tanh %39 : vector<8x512xf32>
    %c0_26 = arith.constant 0 : index
    %c0_27 = arith.constant 0 : index
    %41 = vector.load %arg10[%c0_26, %c0_27] : memref<8x512xf32, #tpu.memory_space<vmem>>, vector<8x512xf32>
    tpu.vector_store %arg10[%c0_26, %c0_27], %40 {strides = array<i32>} : memref<8x512xf32, #tpu.memory_space<vmem>>, vector<8x512xf32>,
    return
  }
  func.func @transform_0(%arg0: i32) -> (i32, i32) {
    %c0_i32 = arith.constant 0 : i32
    %c0_i32_0 = arith.constant 0 : i32
    %c0_i32_1 = arith.constant 0 : i32
    return %c0_i32, %c0_i32_0 : i32, i32
  }
  func.func @transform_1(%arg0: i32) -> (i32, i32) {
    %c0_i32 = arith.constant 0 : i32
    %c0_i32_0 = arith.constant 0 : i32
    %c0_i32_1 = arith.constant 0 : i32
    return %c0_i32, %c0_i32_0 : i32, i32
  }
  func.func @transform_2(%arg0: i32) -> (i32, i32) {
    %c0_i32 = arith.constant 0 : i32
    %c0_i32_0 = arith.constant 0 : i32
    %c0_i32_1 = arith.constant 0 : i32
    return %c0_i32, %c0_i32_0 : i32, i32
  }
  func.func @transform_3(%arg0: i32) -> (i32, i32) {
    %c0_i32 = arith.constant 0 : i32
    %c0_i32_0 = arith.constant 0 : i32
    %c0_i32_1 = arith.constant 0 : i32
    return %c0_i32, %c0_i32_0 : i32, i32
  }
  func.func @transform_4(%arg0: i32) -> (i32, i32) {
    %c0_i32 = arith.constant 0 : i32
    %c0_i32_0 = arith.constant 0 : i32
    %c0_i32_1 = arith.constant 0 : i32
    return %c0_i32, %c0_i32_0 : i32, i32
  }
  func.func @transform_5(%arg0: i32) -> (i32, i32) {
    %c0_i32 = arith.constant 0 : i32
    %c0_i32_0 = arith.constant 0 : i32
    %c0_i32_1 = arith.constant 0 : i32
    return %c0_i32, %c0_i32_0 : i32, i32
  }
  func.func @transform_6(%arg0: i32) -> (i32, i32) {
    %c0_i32 = arith.constant 0 : i32
    %c0_i32_0 = arith.constant 0 : i32
    %c0_i32_1 = arith.constant 0 : i32
    return %c0_i32, %c0_i32_0 : i32, i32
  }
  func.func @transform_7(%arg0: i32) -> (i32, i32) {
    %c0_i32 = arith.constant 0 : i32
    %c0_i32_0 = arith.constant 0 : i32
    return %c0_i32, %arg0 : i32, i32
  }
  func.func @transform_8(%arg0: i32) -> (i32, i32) {
    %c0_i32 = arith.constant 0 : i32
    %c0_i32_0 = arith.constant 0 : i32
    return %c0_i32, %arg0 : i32, i32
  }
  func.func @transform_9(%arg0: i32) -> (i32, i32) {
    %c0_i32 = arith.constant 0 : i32
    %c0_i32_0 = arith.constant 0 : i32
    return %c0_i32, %arg0 : i32, i32
  }
}

</mosaic_0001>

<llo_original>
// kernel: tpu_custom_call.1
$region0: #{tpu_custom_call.1}
  #allocation0 [shape = 'u32[]', space=smem, size = 0x4, offset = 0x4, fixed_abs, tag = 'smem constant byte address 0x4 - core index']
  #allocation1 [shape = 'u32[144,128]{1,0:T(1,128)}', space=vmem, size = 0x12000, scoped, tag = 'internal scratch']
  %s0 = inlined_call_operand.hbm [shape: f32[8,32], index: 0, kind: input, shape index: {}]
  %s1 = inlined_call_operand.hbm [shape: bf16[32,256], index: 1, kind: input, shape index: {}]
  %s2 = inlined_call_operand.hbm [shape: f32[1,256], index: 2, kind: input, shape index: {}]
  %s3 = inlined_call_operand.hbm [shape: bf16[256,512], index: 3, kind: input, shape index: {}]
  %s4 = inlined_call_operand.hbm [shape: f32[1,512], index: 4, kind: input, shape index: {}]
  %s5 = inlined_call_operand.hbm [shape: bf16[512,1024], index: 5, kind: input, shape index: {}]
  %s6 = inlined_call_operand.hbm [shape: f32[1,1024], index: 6, kind: input, shape index: {}]
  %s7 = inlined_call_operand.hbm [shape: bf16[1024,1024], index: 7, kind: input, shape index: {}]
  %s8 = inlined_call_operand.hbm [shape: f32[1,1024], index: 8, kind: input, shape index: {}]
  %s9 = inlined_call_operand.hbm [shape: f32[8,1024], index: 9, kind: output, shape index: {}]
  %s10 = sld [smem:[#allocation0]]
  $region105: #{tpu_custom_call.1} parent=0
    _
  %s12 = ssub.s32 1, %s10
  %s13 = scalar_select 0, %s12, %s10
  $region1: #{tpu_custom_call.1} parent=0
    #allocation2 [shape = 'u8[4096]{0}', space=vmem, size = 0x1000, scoped, tag = 'input window, operand 0, single buffered']
    #allocation3 [shape = 's32[2]{0}', space=sflag, size = 0x8, scoped, tag = 'scoped memory for tpu_custom_call.1']
    #allocation4 [shape = 's32[2]{0}', space=sflag, size = 0x8, scoped, tag = 'scoped memory for tpu_custom_call.1']
    #allocation5 [shape = 'u8[16384]{0}', space=vmem, size = 0x4000, scoped, tag = 'input window, operand 1, single buffered']
    #allocation6 [shape = 's32[1]{0}', space=sflag, size = 0x4, scoped, tag = 'scoped memory for tpu_custom_call.1']
    #allocation7 [shape = 'u8[1024]{0}', space=vmem, size = 0x400, scoped, tag = 'input window, operand 2, single buffered']
    #allocation8 [shape = 'u8[262144]{0}', space=vmem, size = 0x40000, scoped, tag = 'input window, operand 3, single buffered']
    #allocation9 [shape = 's32[1]{0}', space=sflag, size = 0x4, scoped, tag = 'scoped memory for tpu_custom_call.1']
    #allocation10 [shape = 'u8[2048]{0}', space=vmem, size = 0x800, scoped, tag = 'input window, operand 4, single buffered']
    #allocation11 [shape = 'u8[1048576]{0}', space=vmem, size = 0x100000, scoped, tag = 'input window, operand 5, single buffered']
    #allocation12 [shape = 's32[1]{0}', space=sflag, size = 0x4, scoped, tag = 'scoped memory for tpu_custom_call.1']
    #allocation13 [shape = 'u8[4096]{0}', space=vmem, size = 0x1000, scoped, tag = 'input window, operand 6, single buffered']
    #allocation14 [shape = 'u8[2097152]{0}', space=vmem, size = 0x200000, scoped, tag = 'input window, operand 7']
    #allocation15 [shape = 's32[2]{0}', space=sflag, size = 0x8, scoped, tag = 'scoped memory for tpu_custom_call.1']
    #allocation16 [shape = 'u8[4096]{0}', space=vmem, size = 0x1000, scoped, tag = 'input window, operand 8']
    #allocation17 [shape = 'u8[32768]{0}', space=vmem, size = 0x8000, scoped, tag = 'output window, operand 0']
    %14 = vsyncpa [#allocation3], 0
    %15 = vsyncpa [#allocation6], 0
    %16 = vsyncpa [#allocation9], 0
    %17 = vsyncpa [#allocation12], 0
    %18 = vsyncpa [#allocation15], 0
    %s19 = scalar_lea.sflag [#allocation15], 1
    %20 = vsyncpa %s19, 0
    %21 = vsyncpa [#allocation4], 0
    %s22 = scalar_lea.sflag [#allocation4], 1
    %23 = vsyncpa %s22, 0
    loop: start=0, step=1, limit=4
    $region2: #{tpu_custom_call.1} parent=1 // loop_pre_header
      _
    $region3: #{tpu_custom_call.1} parent=1 // loop_header
      %s25 = sphi 0, %s29
      %p26 = scmp.ge.s32.totalorder %s25, 4
      %s33 = sphi 0, %s33
      %s35 = sphi 0, %s33
      %s36 = sphi 0, %s35
      %s50 = sphi 0, %s36
      %s54 = sphi 0, %s54
      %s56 = sphi 0, %s54
      %s57 = sphi 0, %s56
      %s71 = sphi 0, %s57
      %s75 = sphi 0, %s75
      %s77 = sphi 0, %s75
      %s78 = sphi 0, %s77
      %s92 = sphi 0, %s78
      %s96 = sphi 0, %s96
      %s98 = sphi 0, %s96
      %s99 = sphi 0, %s98
      %s113 = sphi 0, %s99
      %s117 = sphi 0, %s117
      %s119 = sphi 0, %s117
      %s120 = sphi 0, %s119
      %s134 = sphi 0, %s120
      %s138 = sphi 0, %s138
      %s140 = sphi 0, %s138
      %s141 = sphi 0, %s140
      %s155 = sphi 0, %s141
      %s159 = sphi 0, %s159
      %s161 = sphi 0, %s159
      %s162 = sphi 0, %s161
      %s176 = sphi 0, %s162
      %s182 = sphi 0, %s184
      %s185 = sphi 0, %s182
      %s186 = sphi 0, %s185
      %s202 = sphi 0, %s186
      %s208 = sphi 0, %s210
      %s211 = sphi 0, %s208
      %s212 = sphi 0, %s211
      %s228 = sphi 0, %s212
      %s234 = sphi 0, %s236
      %s237 = sphi 0, %s234
      %s238 = sphi 0, %s237
      %s254 = sphi 0, %s238
    $region4: #{tpu_custom_call.1} parent=1 // loop_header_branch
      %28 = sbr.rel (%p26) target = $region8
    $region5: #{tpu_custom_call.1} parent=1 // loop_body
      %s30 = ssub.s32 %s25, 1
      %s31 = ssub.s32 %s25, 2
      %s32 = sadd.s32 %s25, 1
      %s34 = sadd.s32 %s33, 1
      %p37 = scmp.eq.s32.totalorder %s25, 1
      %p38 = scmp.ne.s32.totalorder %s33, %s35
      %p39 = scmp.eq.s32.totalorder %s25, 0
      %p40 = por %p38, %p39
      %p41 = scmp.ne.s32.totalorder %s33, %s35
      %p42 = scmp.eq.s32.totalorder %s30, 1
      %p43 = por %p41, %p42
      %p44 = scmp.ne.s32.totalorder %s35, %s36
      %p45 = scmp.eq.s32.totalorder %s30, 0
      %p46 = por %p44, %p45
      %p47 = scmp.ne.s32.totalorder %s35, %s36
      %p48 = scmp.eq.s32.totalorder %s31, 1
      %p49 = por %p47, %p48
      %p51 = scmp.ne.s32.totalorder %s36, %s50
      %p52 = scmp.eq.s32.totalorder %s31, 0
      %p53 = por %p51, %p52
      %s55 = sadd.s32 %s54, 1
      %p58 = scmp.eq.s32.totalorder %s25, 1
      %p59 = scmp.ne.s32.totalorder %s54, %s56
      %p60 = scmp.eq.s32.totalorder %s25, 0
      %p61 = por %p59, %p60
      %p62 = scmp.ne.s32.totalorder %s54, %s56
      %p63 = scmp.eq.s32.totalorder %s30, 1
      %p64 = por %p62, %p63
      %p65 = scmp.ne.s32.totalorder %s56, %s57
      %p66 = scmp.eq.s32.totalorder %s30, 0
      %p67 = por %p65, %p66
      %p68 = scmp.ne.s32.totalorder %s56, %s57
      %p69 = scmp.eq.s32.totalorder %s31, 1
      %p70 = por %p68, %p69
      %p72 = scmp.ne.s32.totalorder %s57, %s71
      %p73 = scmp.eq.s32.totalorder %s31, 0
      %p74 = por %p72, %p73
      %s76 = sadd.s32 %s75, 1
      %p79 = scmp.eq.s32.totalorder %s25, 1
      %p80 = scmp.ne.s32.totalorder %s75, %s77
      %p81 = scmp.eq.s32.totalorder %s25, 0
      %p82 = por %p80, %p81
      %p83 = scmp.ne.s32.totalorder %s75, %s77
      %p84 = scmp.eq.s32.totalorder %s30, 1
      %p85 = por %p83, %p84
      %p86 = scmp.ne.s32.totalorder %s77, %s78
      %p87 = scmp.eq.s32.totalorder %s30, 0
      %p88 = por %p86, %p87
      %p89 = scmp.ne.s32.totalorder %s77, %s78
      %p90 = scmp.eq.s32.totalorder %s31, 1
      %p91 = por %p89, %p90
      %p93 = scmp.ne.s32.totalorder %s78, %s92
      %p94 = scmp.eq.s32.totalorder %s31, 0
      %p95 = por %p93, %p94
      %s97 = sadd.s32 %s96, 1
      %p100 = scmp.eq.s32.totalorder %s25, 1
      %p101 = scmp.ne.s32.totalorder %s96, %s98
      %p102 = scmp.eq.s32.totalorder %s25, 0
      %p103 = por %p101, %p102
      %p104 = scmp.ne.s32.totalorder %s96, %s98
      %p105 = scmp.eq.s32.totalorder %s30, 1
      %p106 = por %p104, %p105
      %p107 = scmp.ne.s32.totalorder %s98, %s99
      %p108 = scmp.eq.s32.totalorder %s30, 0
      %p109 = por %p107, %p108
      %p110 = scmp.ne.s32.totalorder %s98, %s99
      %p111 = scmp.eq.s32.totalorder %s31, 1
      %p112 = por %p110, %p111
      %p114 = scmp.ne.s32.totalorder %s99, %s113
      %p115 = scmp.eq.s32.totalorder %s31, 0
      %p116 = por %p114, %p115
      %s118 = sadd.s32 %s117, 1
      %p121 = scmp.eq.s32.totalorder %s25, 1
      %p122 = scmp.ne.s32.totalorder %s117, %s119
      %p123 = scmp.eq.s32.totalorder %s25, 0
      %p124 = por %p122, %p123
      %p125 = scmp.ne.s32.totalorder %s117, %s119
      %p126 = scmp.eq.s32.totalorder %s30, 1
      %p127 = por %p125, %p126
      %p128 = scmp.ne.s32.totalorder %s119, %s120
      %p129 = scmp.eq.s32.totalorder %s30, 0
      %p130 = por %p128, %p129
      %p131 = scmp.ne.s32.totalorder %s119, %s120
      %p132 = scmp.eq.s32.totalorder %s31, 1
      %p133 = por %p131, %p132
      %p135 = scmp.ne.s32.totalorder %s120, %s134
      %p136 = scmp.eq.s32.totalorder %s31, 0
      %p137 = por %p135, %p136
      %s139 = sadd.s32 %s138, 1
      %p142 = scmp.eq.s32.totalorder %s25, 1
      %p143 = scmp.ne.s32.totalorder %s138, %s140
      %p144 = scmp.eq.s32.totalorder %s25, 0
      %p145 = por %p143, %p144
      %p146 = scmp.ne.s32.totalorder %s138, %s140
      %p147 = scmp.eq.s32.totalorder %s30, 1
      %p148 = por %p146, %p147
      %p149 = scmp.ne.s32.totalorder %s140, %s141
      %p150 = scmp.eq.s32.totalorder %s30, 0
      %p151 = por %p149, %p150
      %p152 = scmp.ne.s32.totalorder %s140, %s141
      %p153 = scmp.eq.s32.totalorder %s31, 1
      %p154 = por %p152, %p153
      %p156 = scmp.ne.s32.totalorder %s141, %s155
      %p157 = scmp.eq.s32.totalorder %s31, 0
      %p158 = por %p156, %p157
      %s160 = sadd.s32 %s159, 1
      %p163 = scmp.eq.s32.totalorder %s25, 1
      %p164 = scmp.ne.s32.totalorder %s159, %s161
      %p165 = scmp.eq.s32.totalorder %s25, 0
      %p166 = por %p164, %p165
      %p167 = scmp.ne.s32.totalorder %s159, %s161
      %p168 = scmp.eq.s32.totalorder %s30, 1
      %p169 = por %p167, %p168
      %p170 = scmp.ne.s32.totalorder %s161, %s162
      %p171 = scmp.eq.s32.totalorder %s30, 0
      %p172 = por %p170, %p171
      %p173 = scmp.ne.s32.totalorder %s161, %s162
      %p174 = scmp.eq.s32.totalorder %s31, 1
      %p175 = por %p173, %p174
      %p177 = scmp.ne.s32.totalorder %s162, %s176
      %p178 = scmp.eq.s32.totalorder %s31, 0
      %p179 = por %p177, %p178
      %s180 = ssub.s32 %s25, %s32
      %p181 = scmp.eq.s32.totalorder %s180, 0
      %s183 = sadd.s32 %s182, 1
      %s184 = scalar_select %p181, %s182, %s183
      %p187 = pneg %p181
      %p188 = scmp.eq.s32.totalorder %s25, 1
      %p189 = por %p187, %p188
      %p190 = scmp.ne.s32.totalorder %s182, %s185
      %p191 = scmp.eq.s32.totalorder %s25, 0
      %p192 = por %p190, %p191
      %p193 = scmp.ne.s32.totalorder %s182, %s185
      %p194 = scmp.eq.s32.totalorder %s30, 1
      %p195 = por %p193, %p194
      %p196 = scmp.ne.s32.totalorder %s185, %s186
      %p197 = scmp.eq.s32.totalorder %s30, 0
      %p198 = por %p196, %p197
      %p199 = scmp.ne.s32.totalorder %s185, %s186
      %p200 = scmp.eq.s32.totalorder %s31, 1
      %p201 = por %p199, %p200
      %p203 = scmp.ne.s32.totalorder %s186, %s202
      %p204 = scmp.eq.s32.totalorder %s31, 0
      %p205 = por %p203, %p204
      %s206 = ssub.s32 %s25, %s32
      %p207 = scmp.eq.s32.totalorder %s206, 0
      %s209 = sadd.s32 %s208, 1
      %s210 = scalar_select %p207, %s208, %s209
      %p213 = pneg %p207
      %p214 = scmp.eq.s32.totalorder %s25, 1
      %p215 = por %p213, %p214
      %p216 = scmp.ne.s32.totalorder %s208, %s211
      %p217 = scmp.eq.s32.totalorder %s25, 0
      %p218 = por %p216, %p217
      %p219 = scmp.ne.s32.totalorder %s208, %s211
      %p220 = scmp.eq.s32.totalorder %s30, 1
      %p221 = por %p219, %p220
      %p222 = scmp.ne.s32.totalorder %s211, %s212
      %p223 = scmp.eq.s32.totalorder %s30, 0
      %p224 = por %p222, %p223
      %p225 = scmp.ne.s32.totalorder %s211, %s212
      %p226 = scmp.eq.s32.totalorder %s31, 1
      %p227 = por %p225, %p226
      %p229 = scmp.ne.s32.totalorder %s212, %s228
      %p230 = scmp.eq.s32.totalorder %s31, 0
      %p231 = por %p229, %p230
      %s232 = ssub.s32 %s25, %s32
      %p233 = scmp.eq.s32.totalorder %s232, 0
      %s235 = sadd.s32 %s234, 1
      %s236 = scalar_select %p233, %s234, %s235
      %p239 = pneg %p233
      %p240 = scmp.eq.s32.totalorder %s25, 1
      %p241 = por %p239, %p240
      %p242 = scmp.ne.s32.totalorder %s234, %s237
      %p243 = scmp.eq.s32.totalorder %s25, 0
      %p244 = por %p242, %p243
      %p245 = scmp.ne.s32.totalorder %s234, %s237
      %p246 = scmp.eq.s32.totalorder %s30, 1
      %p247 = por %p245, %p246
      %p248 = scmp.ne.s32.totalorder %s237, %s238
      %p249 = scmp.eq.s32.totalorder %s30, 0
      %p250 = por %p248, %p249
      %p251 = scmp.ne.s32.totalorder %s237, %s238
      %p252 = scmp.eq.s32.totalorder %s31, 1
      %p253 = por %p251, %p252
      %p255 = scmp.ne.s32.totalorder %s238, %s254
      %p256 = scmp.eq.s32.totalorder %s31, 0
      %p257 = por %p255, %p256
      %p258 = scmp.le.s32.totalorder 1, %s25
      %p259 = scmp.lt.s32.totalorder %s25, 3
      %p260 = pnand %p258, %p259
      %p261 = pneg %p260
      // Predicated region
      $region9: #{tpu_custom_call.1} parent=5 // pred_check
        _
      $region10: #{tpu_custom_call.1} parent=5 // pred_check_branch
        %263 = sbr.rel (%p260) target = $region12
      $region11: #{tpu_custom_call.1} parent=5 // pred_region
        %s264 = ssub.s32 %s25, 1
        // Predicated region
        $region13: #{tpu_custom_call.1} parent=11 // pred_check
          %p265 = pneg %p46
        $region14: #{tpu_custom_call.1} parent=11 // pred_check_branch
          %267 = sbr.rel (%p265) target = $region16
        $region15: #{tpu_custom_call.1} parent=11 // pred_region
          %s269 = ssub.s32 128, 128
          %270 = vsyncadd [#allocation3], %s269
          %s272 = sshll.u32 [#allocation2], 4
          %s273 = int_to_ptr.vmem [resolvable:$true] %s272
          %275 = dma.hbm_to_vmem [thread:$0]  %s0, 128, %s273, [#allocation3]
        $region16: #{tpu_custom_call.1} parent=11 // pred_fallthru
          _
        // Predicated region
        $region17: #{tpu_custom_call.1} parent=11 // pred_check
          %p276 = pneg %p67
        $region18: #{tpu_custom_call.1} parent=11 // pred_check_branch
          %278 = sbr.rel (%p276) target = $region20
        $region19: #{tpu_custom_call.1} parent=11 // pred_region
          %s280 = ssub.s32 512, 512
          %281 = vsyncadd [#allocation6], %s280
          %s282 = sshll.u32 [#allocation5], 4
          %s283 = int_to_ptr.vmem [resolvable:$true] %s282
          %288 = dma.hbm_to_vmem [thread:$0]  %s1, 512, %s283, [#allocation6], 128, 128, 8
        $region20: #{tpu_custom_call.1} parent=11 // pred_fallthru
          _
        // Predicated region
        $region21: #{tpu_custom_call.1} parent=11 // pred_check
          %p289 = pneg %p88
        $region22: #{tpu_custom_call.1} parent=11 // pred_check_branch
          %291 = sbr.rel (%p289) target = $region24
        $region23: #{tpu_custom_call.1} parent=11 // pred_region
          %s293 = ssub.s32 32, 32
          %294 = vsyncadd [#allocation6], %s293
          %s296 = sshll.u32 [#allocation7], 4
          %s297 = int_to_ptr.vmem [resolvable:$true] %s296
          %299 = dma.hbm_to_vmem [thread:$0]  %s2, 32, %s297, [#allocation6]
        $region24: #{tpu_custom_call.1} parent=11 // pred_fallthru
          _
        // Predicated region
        $region25: #{tpu_custom_call.1} parent=11 // pred_check
          %p300 = pneg %p109
        $region26: #{tpu_custom_call.1} parent=11 // pred_check_branch
          %302 = sbr.rel (%p300) target = $region28
        $region27: #{tpu_custom_call.1} parent=11 // pred_region
          %s304 = ssub.s32 8192, 8192
          %305 = vsyncadd [#allocation9], %s304
          %s306 = sshll.u32 [#allocation8], 4
          %s307 = int_to_ptr.vmem [resolvable:$true] %s306
          %312 = dma.hbm_to_vmem [thread:$0]  %s3, 8192, %s307, [#allocation9], 256, 256, 16
        $region28: #{tpu_custom_call.1} parent=11 // pred_fallthru
          _
        // Predicated region
        $region29: #{tpu_custom_call.1} parent=11 // pred_check
          %p313 = pneg %p130
        $region30: #{tpu_custom_call.1} parent=11 // pred_check_branch
          %315 = sbr.rel (%p313) target = $region32
        $region31: #{tpu_custom_call.1} parent=11 // pred_region
          %s317 = ssub.s32 64, 64
          %318 = vsyncadd [#allocation9], %s317
          %s320 = sshll.u32 [#allocation10], 4
          %s321 = int_to_ptr.vmem [resolvable:$true] %s320
          %323 = dma.hbm_to_vmem [thread:$0]  %s4, 64, %s321, [#allocation9]
        $region32: #{tpu_custom_call.1} parent=11 // pred_fallthru
          _
        // Predicated region
        $region33: #{tpu_custom_call.1} parent=11 // pred_check
          %p324 = pneg %p151
        $region34: #{tpu_custom_call.1} parent=11 // pred_check_branch
          %326 = sbr.rel (%p324) target = $region36
        $region35: #{tpu_custom_call.1} parent=11 // pred_region
          %s328 = ssub.s32 32768, 32768
          %329 = vsyncadd [#allocation12], %s328
          %s330 = sshll.u32 [#allocation11], 4
          %s331 = int_to_ptr.vmem [resolvable:$true] %s330
          %336 = dma.hbm_to_vmem [thread:$0]  %s5, 32768, %s331, [#allocation12], 512, 512, 32
        $region36: #{tpu_custom_call.1} parent=11 // pred_fallthru
          _
        // Predicated region
        $region37: #{tpu_custom_call.1} parent=11 // pred_check
          %p337 = pneg %p172
        $region38: #{tpu_custom_call.1} parent=11 // pred_check_branch
          %339 = sbr.rel (%p337) target = $region40
        $region39: #{tpu_custom_call.1} parent=11 // pred_region
          %s341 = ssub.s32 128, 128
          %342 = vsyncadd [#allocation12], %s341
          %s344 = sshll.u32 [#allocation13], 4
          %s345 = int_to_ptr.vmem [resolvable:$true] %s344
          %347 = dma.hbm_to_vmem [thread:$0]  %s6, 128, %s345, [#allocation12]
        $region40: #{tpu_custom_call.1} parent=11 // pred_fallthru
          _
      $region12: #{tpu_custom_call.1} parent=5 // pred_fallthru
        _
      %p348 = scmp.lt.s32.totalorder %s25, 2
      // Predicated region
      $region41: #{tpu_custom_call.1} parent=5 // pred_check
        %p349 = pneg %p348
      $region42: #{tpu_custom_call.1} parent=5 // pred_check_branch
        %351 = sbr.rel (%p349) target = $region44
      $region43: #{tpu_custom_call.1} parent=5 // pred_region
        // Predicated region
        $region45: #{tpu_custom_call.1} parent=43 // pred_check
          %p352 = pneg %p192
        $region46: #{tpu_custom_call.1} parent=43 // pred_check_branch
          %354 = sbr.rel (%p352) target = $region48
        $region47: #{tpu_custom_call.1} parent=43 // pred_region
          %s355 = sand.u32 %s25, 1
          %s356 = scalar_lea.sflag [#allocation15], %s355
          %s357 = sand.u32 %s182, 1
          %s358 = smul.addr %s357, 2048
          %s359 = scalar_lea.vmem [#allocation14], %s358
          %s360 = smul.u32 4, %s25
          %s362 = ssub.s32 32768, 32768
          %363 = vsyncadd %s356, %s362
          %s364 = smul.addr %s360, 64
          %s365 = scalar_lea.hbm %s7, %s364
          %s366 = sshll.u32 %s359, 4
          %s367 = int_to_ptr.vmem [resolvable:$true] %s366
          %372 = dma.hbm_to_vmem [thread:$0]  %s365, 32768, %s367, %s356, 512, 256, 16
        $region48: #{tpu_custom_call.1} parent=43 // pred_fallthru
          _
        // Predicated region
        $region49: #{tpu_custom_call.1} parent=43 // pred_check
          %p373 = pneg %p218
        $region50: #{tpu_custom_call.1} parent=43 // pred_check_branch
          %375 = sbr.rel (%p373) target = $region52
        $region51: #{tpu_custom_call.1} parent=43 // pred_region
          %s376 = sand.u32 %s25, 1
          %s377 = scalar_lea.sflag [#allocation15], %s376
          %s378 = sand.u32 %s208, 1
          %s379 = smul.addr %s378, 4
          %s380 = scalar_lea.vmem [#allocation16], %s379
          %s381 = smul.u32 4, %s25
          %s383 = ssub.s32 64, 64
          %384 = vsyncadd %s377, %s383
          %s385 = smul.addr %s381, 16
          %s386 = scalar_lea.hbm %s8, %s385
          %s388 = sshll.u32 %s380, 4
          %s389 = int_to_ptr.vmem [resolvable:$true] %s388
          %391 = dma.hbm_to_vmem [thread:$0]  %s386, 64, %s389, %s377
        $region52: #{tpu_custom_call.1} parent=43 // pred_fallthru
          _
      $region44: #{tpu_custom_call.1} parent=5 // pred_fallthru
        _
      %p392 = scmp.le.s32.totalorder 1, %s25
      %p393 = scmp.lt.s32.totalorder %s25, 3
      %p394 = pnand %p392, %p393
      %p395 = pneg %p394
      // Predicated region
      $region53: #{tpu_custom_call.1} parent=5 // pred_check
        _
      $region54: #{tpu_custom_call.1} parent=5 // pred_check_branch
        %397 = sbr.rel (%p394) target = $region56
      $region55: #{tpu_custom_call.1} parent=5 // pred_region
        %s398 = ssub.s32 %s25, 1
        // Predicated region
        $region57: #{tpu_custom_call.1} parent=55 // pred_check
          %p399 = pneg %p46
        $region58: #{tpu_custom_call.1} parent=55 // pred_check_branch
          %401 = sbr.rel (%p399) target = $region60
        $region59: #{tpu_custom_call.1} parent=55 // pred_region
          %402 = dma.done [#allocation3], 128
        $region60: #{tpu_custom_call.1} parent=55 // pred_fallthru
          _
        // Predicated region
        $region61: #{tpu_custom_call.1} parent=55 // pred_check
          %p403 = pneg %p67
        $region62: #{tpu_custom_call.1} parent=55 // pred_check_branch
          %405 = sbr.rel (%p403) target = $region64
        $region63: #{tpu_custom_call.1} parent=55 // pred_region
          %406 = dma.done [#allocation6], 512
        $region64: #{tpu_custom_call.1} parent=55 // pred_fallthru
          _
        // Predicated region
        $region65: #{tpu_custom_call.1} parent=55 // pred_check
          %p407 = pneg %p88
        $region66: #{tpu_custom_call.1} parent=55 // pred_check_branch
          %409 = sbr.rel (%p407) target = $region68
        $region67: #{tpu_custom_call.1} parent=55 // pred_region
          %410 = dma.done [#allocation6], 32
        $region68: #{tpu_custom_call.1} parent=55 // pred_fallthru
          _
        // Predicated region
        $region69: #{tpu_custom_call.1} parent=55 // pred_check
          %p411 = pneg %p109
        $region70: #{tpu_custom_call.1} parent=55 // pred_check_branch
          %413 = sbr.rel (%p411) target = $region72
        $region71: #{tpu_custom_call.1} parent=55 // pred_region
          %414 = dma.done [#allocation9], 8192
        $region72: #{tpu_custom_call.1} parent=55 // pred_fallthru
          _
        // Predicated region
        $region73: #{tpu_custom_call.1} parent=55 // pred_check
          %p415 = pneg %p130
        $region74: #{tpu_custom_call.1} parent=55 // pred_check_branch
          %417 = sbr.rel (%p415) target = $region76
        $region75: #{tpu_custom_call.1} parent=55 // pred_region
          %418 = dma.done [#allocation9], 64
        $region76: #{tpu_custom_call.1} parent=55 // pred_fallthru
          _
        // Predicated region
        $region77: #{tpu_custom_call.1} parent=55 // pred_check
          %p419 = pneg %p151
        $region78: #{tpu_custom_call.1} parent=55 // pred_check_branch
          %421 = sbr.rel (%p419) target = $region80
        $region79: #{tpu_custom_call.1} parent=55 // pred_region
          %422 = dma.done [#allocation12], 32768
        $region80: #{tpu_custom_call.1} parent=55 // pred_fallthru
          _
        // Predicated region
        $region81: #{tpu_custom_call.1} parent=55 // pred_check
          %p423 = pneg %p172
        $region82: #{tpu_custom_call.1} parent=55 // pred_check_branch
          %425 = sbr.rel (%p423) target = $region84
        $region83: #{tpu_custom_call.1} parent=55 // pred_region
          %426 = dma.done [#allocation12], 128
        $region84: #{tpu_custom_call.1} parent=55 // pred_fallthru
          _
        %s427 = sand.u32 %s30, 1
        %s428 = scalar_lea.sflag [#allocation15], %s427
        %s429 = sand.u32 %s185, 1
        %s430 = smul.addr %s429, 2048
        %s431 = scalar_lea.vmem [#allocation14], %s430
        // Predicated region
        $region85: #{tpu_custom_call.1} parent=55 // pred_check
          %p432 = pneg %p198
        $region86: #{tpu_custom_call.1} parent=55 // pred_check_branch
          %434 = sbr.rel (%p432) target = $region88
        $region87: #{tpu_custom_call.1} parent=55 // pred_region
          %435 = dma.done %s428, 32768
        $region88: #{tpu_custom_call.1} parent=55 // pred_fallthru
          _
        %s436 = sand.u32 %s30, 1
        %s437 = scalar_lea.sflag [#allocation15], %s436
        %s438 = sand.u32 %s211, 1
        %s439 = smul.addr %s438, 4
        %s440 = scalar_lea.vmem [#allocation16], %s439
        // Predicated region
        $region89: #{tpu_custom_call.1} parent=55 // pred_check
          %p441 = pneg %p224
        $region90: #{tpu_custom_call.1} parent=55 // pred_check_branch
          %443 = sbr.rel (%p441) target = $region92
        $region91: #{tpu_custom_call.1} parent=55 // pred_region
          %444 = dma.done %s437, 64
        $region92: #{tpu_custom_call.1} parent=55 // pred_fallthru
          _
        %p445 = pneg %p46
        %p446 = pneg %p43
        %p447 = pneg %p67
        %p448 = pneg %p64
        %p449 = pneg %p88
        %p450 = pneg %p85
        %p451 = pneg %p109
        %p452 = pneg %p106
        %p453 = pneg %p130
        %p454 = pneg %p127
        %p455 = pneg %p151
        %p456 = pneg %p148
        %p457 = pneg %p172
        %p458 = pneg %p169
        %s459 = sand.u32 %s30, 1
        %s460 = scalar_lea.sflag [#allocation15], %s459
        %s461 = sand.u32 %s185, 1
        %s462 = smul.addr %s461, 2048
        %s463 = scalar_lea.vmem [#allocation14], %s462
        %p464 = pneg %p198
        %p465 = pneg %p195
        %s466 = sand.u32 %s30, 1
        %s467 = scalar_lea.sflag [#allocation15], %s466
        %s468 = sand.u32 %s211, 1
        %s469 = smul.addr %s468, 4
        %s470 = scalar_lea.vmem [#allocation16], %s469
        %p471 = pneg %p224
        %p472 = pneg %p221
        %p473 = pneg %p250
        %p474 = pneg %p247
        %s475 = sand.u32 %s237, 1
        %s476 = scalar_lea.sflag [#allocation4], %s475
        %s477 = sand.u32 %s237, 1
        %s478 = smul.addr %s477, 32
        %s479 = scalar_lea.vmem [#allocation17], %s478
        %s480 = smul.u32 4, %s30
        %s481 = smul.u32 4, %s30
        %s482 = smul.u32 4, %s30
        %v484 = vld [vmem:[#allocation2] sm:$0xff]
        %v485 = vpack.c.bf16 %v484, %v484
        %v486 = vld [vmem:[#allocation5] sm:$0xff]
        %v487 = vld [vmem:[#allocation5 + $0x8] sm:$0xff]
        %v488 = vld [vmem:[#allocation5 + $0x10] sm:$0xff]
        %v489 = vld [vmem:[#allocation5 + $0x18] sm:$0xff]
        %v490 = vld [vmem:[#allocation7] sm:$0x3]
        %v492 = vlaneseq
        %v493 = vshrl.u32 %v492, 7
        %v494 = vsub.s32 0, %v493
        %v495 = vrot.slane %v490, %v494
        %v496 = vlaneseq
        %v497 = vshrl.u32 %v496, 7
        %v498 = vsub.s32 1, %v497
        %v499 = vrot.slane %v490, %v498
        %v506 = vunpack.c.l.b16 %v486
        %v507 = vunpack.c.h.b16 %v486
        %v508 = vunpack.c.l.b16 %v487
        %v509 = vunpack.c.h.b16 %v487
        %v510 = vunpack.c.l.b16 %v488
        %v511 = vunpack.c.h.b16 %v488
        %v512 = vunpack.c.l.b16 %v489
        %v513 = vunpack.c.h.b16 %v489
        %v514 = vpack.c.b16 %v508, %v506
        %v515 = vpack.c.b16 %v509, %v507
        %v516 = vpack.c.b16 %v512, %v510
        %v517 = vpack.c.b16 %v513, %v511
        %vm522 = vcmask 261120
        %v524 = vsel %vm522, %v485, 0
        %526 = vmatprep.subr.bf16.mxu0 0
        %527 = vmatpush1.bf16.msra.mxu0 0
        %528 = vmatprep.subr.bf16.mxu0 0
        %529 = vmatpush1.bf16.msra.mxu0 0
        %530 = vmatprep.subr.bf16.mxu0 0
        %531 = vmatpush1.bf16.msra.mxu0 0
        %532 = vmatprep.subr.bf16.mxu0 0
        %533 = vmatpush1.bf16.msra.mxu0 0
        %534 = vmatprep.subr.bf16.mxu0 0
        %535 = vmatpush1.bf16.msra.mxu0 0
        %536 = vmatprep.subr.bf16.mxu0 0
        %537 = vmatpush1.bf16.msra.mxu0 0
        %538 = vmatprep.subr.bf16.mxu0 %v517
        %539 = vmatpush1.bf16.msra.mxu0 %v516
        %540 = vmatprep.subr.bf16.mxu0 %v515
        %541 = vmatpush1.bf16.msra.mxu0 %v514
        %542 = vmatprep.subr.bf16.mxu0 0
        %543 = vmatpush2.bf16.msra.mxu0 0
        %544 = vmatprep.subr.bf16.mxu0 0
        %545 = vmatpush2.bf16.msra.mxu0 0
        %546 = vmatprep.subr.bf16.mxu0 0
        %547 = vmatpush2.bf16.msra.mxu0 0
        %548 = vmatprep.subr.bf16.mxu0 0
        %549 = vmatpush2.bf16.msra.mxu0 0
        %550 = vmatprep.subr.bf16.mxu0 0
        %551 = vmatpush2.bf16.msra.mxu0 0
        %552 = vmatprep.subr.bf16.mxu0 0
        %553 = vmatpush2.bf16.msra.mxu0 0
        %554 = vmatprep.subr.bf16.mxu0 0
        %555 = vmatpush2.bf16.msra.mxu0 0
        %556 = vmatprep.subr.bf16.mxu0 0
        %557 = vmatpush2.bf16.msra.mxu0 0
        %558 = vmatprep.mubr.bf16.mxu0 0
        %559 = vmatmul.mubr.bf16.gmra.mxu0 %v524
        %v560 = vpop.f32.mrf.mxu0
        %v561 = vadd.f32 %v495, %v560
        %v562 = vpop.f32.mrf.mxu0
        %v563 = vadd.f32 %v499, %v562
        %v564 = vpop.f32.mrf.mxu0
        %v565 = vpop.f32.mrf.mxu0
        %566 = vdwg.mxu0
        %vm567 = vcmp.ge.f32.partialorder %v561, 0.0
        %vm568 = vcmp.ge.f32.partialorder %v563, 0.0
        %v569 = vmul.f32 %v561, 0.2
        %v570 = vmul.f32 %v563, 0.2
        %v571 = vsel %vm567, %v561, %v569
        %v572 = vsel %vm568, %v563, %v570
        %v573 = vpack.c.bf16 %v571, %v571
        %v574 = vpack.c.bf16 %v572, %v572
        %v575 = vld [vmem:[#allocation8] sm:$0xff]
        %v576 = vld [vmem:[#allocation8 + $0x8] sm:$0xff]
        %v577 = vld [vmem:[#allocation8 + $0x10] sm:$0xff]
        %v578 = vld [vmem:[#allocation8 + $0x18] sm:$0xff]
        %v579 = vld [vmem:[#allocation8 + $0x20] sm:$0xff]
        %v580 = vld [vmem:[#allocation8 + $0x28] sm:$0xff]
        %v581 = vld [vmem:[#allocation8 + $0x30] sm:$0xff]
        %v582 = vld [vmem:[#allocation8 + $0x38] sm:$0xff]
        %v583 = vld [vmem:[#allocation8 + $0x40] sm:$0xff]
        %v584 = vld [vmem:[#allocation8 + $0x48] sm:$0xff]
        %v585 = vld [vmem:[#allocation8 + $0x50] sm:$0xff]
        %v586 = vld [vmem:[#allocation8 + $0x58] sm:$0xff]
        %v587 = vld [vmem:[#allocation8 + $0x60] sm:$0xff]
        %v588 = vld [vmem:[#allocation8 + $0x68] sm:$0xff]
        %v589 = vld [vmem:[#allocation8 + $0x70] sm:$0xff]
        %v590 = vld [vmem:[#allocation8 + $0x78] sm:$0xff]
        %v591 = vld [vmem:[#allocation8 + $0x80] sm:$0xff]
        %v592 = vld [vmem:[#allocation8 + $0x88] sm:$0xff]
        %v593 = vld [vmem:[#allocation8 + $0x90] sm:$0xff]
        %v594 = vld [vmem:[#allocation8 + $0x98] sm:$0xff]
        %v595 = vld [vmem:[#allocation8 + $0xa0] sm:$0xff]
        %v596 = vld [vmem:[#allocation8 + $0xa8] sm:$0xff]
        %v597 = vld [vmem:[#allocation8 + $0xb0] sm:$0xff]
        %v598 = vld [vmem:[#allocation8 + $0xb8] sm:$0xff]
        %v599 = vld [vmem:[#allocation8 + $0xc0] sm:$0xff]
        %v600 = vld [vmem:[#allocation8 + $0xc8] sm:$0xff]
        %v601 = vld [vmem:[#allocation8 + $0xd0] sm:$0xff]
        %v602 = vld [vmem:[#allocation8 + $0xd8] sm:$0xff]
        %v603 = vld [vmem:[#allocation8 + $0xe0] sm:$0xff]
        %v604 = vld [vmem:[#allocation8 + $0xe8] sm:$0xff]
        %v605 = vld [vmem:[#allocation8 + $0xf0] sm:$0xff]
        %v606 = vld [vmem:[#allocation8 + $0xf8] sm:$0xff]
        %v607 = vld [vmem:[#allocation8 + $0x100] sm:$0xff]
        %v608 = vld [vmem:[#allocation8 + $0x108] sm:$0xff]
        %v609 = vld [vmem:[#allocation8 + $0x110] sm:$0xff]
        %v610 = vld [vmem:[#allocation8 + $0x118] sm:$0xff]
        %v611 = vld [vmem:[#allocation8 + $0x120] sm:$0xff]
        %v612 = vld [vmem:[#allocation8 + $0x128] sm:$0xff]
        %v613 = vld [vmem:[#allocation8 + $0x130] sm:$0xff]
        %v614 = vld [vmem:[#allocation8 + $0x138] sm:$0xff]
        %v615 = vld [vmem:[#allocation8 + $0x140] sm:$0xff]
        %v616 = vld [vmem:[#allocation8 + $0x148] sm:$0xff]
        %v617 = vld [vmem:[#allocation8 + $0x150] sm:$0xff]
        %v618 = vld [vmem:[#allocation8 + $0x158] sm:$0xff]
        %v619 = vld [vmem:[#allocation8 + $0x160] sm:$0xff]
        %v620 = vld [vmem:[#allocation8 + $0x168] sm:$0xff]
        %v621 = vld [vmem:[#allocation8 + $0x170] sm:$0xff]
        %v622 = vld [vmem:[#allocation8 + $0x178] sm:$0xff]
        %v623 = vld [vmem:[#allocation8 + $0x180] sm:$0xff]
        %v624 = vld [vmem:[#allocation8 + $0x188] sm:$0xff]
        %v625 = vld [vmem:[#allocation8 + $0x190] sm:$0xff]
        %v626 = vld [vmem:[#allocation8 + $0x198] sm:$0xff]
        %v627 = vld [vmem:[#allocation8 + $0x1a0] sm:$0xff]
        %v628 = vld [vmem:[#allocation8 + $0x1a8] sm:$0xff]
        %v629 = vld [vmem:[#allocation8 + $0x1b0] sm:$0xff]
        %v630 = vld [vmem:[#allocation8 + $0x1b8] sm:$0xff]
        %v631 = vld [vmem:[#allocation8 + $0x1c0] sm:$0xff]
        %v632 = vld [vmem:[#allocation8 + $0x1c8] sm:$0xff]
        %v633 = vld [vmem:[#allocation8 + $0x1d0] sm:$0xff]
        %v634 = vld [vmem:[#allocation8 + $0x1d8] sm:$0xff]
        %v635 = vld [vmem:[#allocation8 + $0x1e0] sm:$0xff]
        %v636 = vld [vmem:[#allocation8 + $0x1e8] sm:$0xff]
        %v637 = vld [vmem:[#allocation8 + $0x1f0] sm:$0xff]
        %v638 = vld [vmem:[#allocation8 + $0x1f8] sm:$0xff]
        %v639 = vld [vmem:[#allocation10] sm:$0xf]
        %v641 = vlaneseq
        %v642 = vshrl.u32 %v641, 7
        %v643 = vsub.s32 0, %v642
        %v644 = vrot.slane %v639, %v643
        %v645 = vlaneseq
        %v646 = vshrl.u32 %v645, 7
        %v647 = vsub.s32 1, %v646
        %v648 = vrot.slane %v639, %v647
        %v649 = vlaneseq
        %v650 = vshrl.u32 %v649, 7
        %v651 = vsub.s32 2, %v650
        %v652 = vrot.slane %v639, %v651
        %v653 = vlaneseq
        %v654 = vshrl.u32 %v653, 7
        %v655 = vsub.s32 3, %v654
        %v656 = vrot.slane %v639, %v655
        %v725 = vunpack.c.l.b16 %v575
        %v726 = vunpack.c.h.b16 %v575
        %v727 = vunpack.c.l.b16 %v576
        %v728 = vunpack.c.h.b16 %v576
        %v729 = vunpack.c.l.b16 %v577
        %v730 = vunpack.c.h.b16 %v577
        %v731 = vunpack.c.l.b16 %v578
        %v732 = vunpack.c.h.b16 %v578
        %v733 = vunpack.c.l.b16 %v579
        %v734 = vunpack.c.h.b16 %v579
        %v735 = vunpack.c.l.b16 %v580
        %v736 = vunpack.c.h.b16 %v580
        %v737 = vunpack.c.l.b16 %v581
        %v738 = vunpack.c.h.b16 %v581
        %v739 = vunpack.c.l.b16 %v582
        %v740 = vunpack.c.h.b16 %v582
        %v741 = vunpack.c.l.b16 %v583
        %v742 = vunpack.c.h.b16 %v583
        %v743 = vunpack.c.l.b16 %v584
        %v744 = vunpack.c.h.b16 %v584
        %v745 = vunpack.c.l.b16 %v585
        %v746 = vunpack.c.h.b16 %v585
        %v747 = vunpack.c.l.b16 %v586
        %v748 = vunpack.c.h.b16 %v586
        %v749 = vunpack.c.l.b16 %v587
        %v750 = vunpack.c.h.b16 %v587
        %v751 = vunpack.c.l.b16 %v588
        %v752 = vunpack.c.h.b16 %v588
        %v753 = vunpack.c.l.b16 %v589
        %v754 = vunpack.c.h.b16 %v589
        %v755 = vunpack.c.l.b16 %v590
        %v756 = vunpack.c.h.b16 %v590
        %v757 = vunpack.c.l.b16 %v591
        %v758 = vunpack.c.h.b16 %v591
        %v759 = vunpack.c.l.b16 %v592
        %v760 = vunpack.c.h.b16 %v592
        %v761 = vunpack.c.l.b16 %v593
        %v762 = vunpack.c.h.b16 %v593
        %v763 = vunpack.c.l.b16 %v594
        %v764 = vunpack.c.h.b16 %v594
        %v765 = vunpack.c.l.b16 %v595
        %v766 = vunpack.c.h.b16 %v595
        %v767 = vunpack.c.l.b16 %v596
        %v768 = vunpack.c.h.b16 %v596
        %v769 = vunpack.c.l.b16 %v597
        %v770 = vunpack.c.h.b16 %v597
        %v771 = vunpack.c.l.b16 %v598
        %v772 = vunpack.c.h.b16 %v598
        %v773 = vunpack.c.l.b16 %v599
        %v774 = vunpack.c.h.b16 %v599
        %v775 = vunpack.c.l.b16 %v600
        %v776 = vunpack.c.h.b16 %v600
        %v777 = vunpack.c.l.b16 %v601
        %v778 = vunpack.c.h.b16 %v601
        %v779 = vunpack.c.l.b16 %v602
        %v780 = vunpack.c.h.b16 %v602
        %v781 = vunpack.c.l.b16 %v603
        %v782 = vunpack.c.h.b16 %v603
        %v783 = vunpack.c.l.b16 %v604
        %v784 = vunpack.c.h.b16 %v604
        %v785 = vunpack.c.l.b16 %v605
        %v786 = vunpack.c.h.b16 %v605
        %v787 = vunpack.c.l.b16 %v606
        %v788 = vunpack.c.h.b16 %v606
        %v789 = vunpack.c.l.b16 %v607
        %v790 = vunpack.c.h.b16 %v607
        %v791 = vunpack.c.l.b16 %v608
        %v792 = vunpack.c.h.b16 %v608
        %v793 = vunpack.c.l.b16 %v609
        %v794 = vunpack.c.h.b16 %v609
        %v795 = vunpack.c.l.b16 %v610
        %v796 = vunpack.c.h.b16 %v610
        %v797 = vunpack.c.l.b16 %v611
        %v798 = vunpack.c.h.b16 %v611
        %v799 = vunpack.c.l.b16 %v612
        %v800 = vunpack.c.h.b16 %v612
        %v801 = vunpack.c.l.b16 %v613
        %v802 = vunpack.c.h.b16 %v613
        %v803 = vunpack.c.l.b16 %v614
        %v804 = vunpack.c.h.b16 %v614
        %v805 = vunpack.c.l.b16 %v615
        %v806 = vunpack.c.h.b16 %v615
        %v807 = vunpack.c.l.b16 %v616
        %v808 = vunpack.c.h.b16 %v616
        %v809 = vunpack.c.l.b16 %v617
        %v810 = vunpack.c.h.b16 %v617
        %v811 = vunpack.c.l.b16 %v618
        %v812 = vunpack.c.h.b16 %v618
        %v813 = vunpack.c.l.b16 %v619
        %v814 = vunpack.c.h.b16 %v619
        %v815 = vunpack.c.l.b16 %v620
        %v816 = vunpack.c.h.b16 %v620
        %v817 = vunpack.c.l.b16 %v621
        %v818 = vunpack.c.h.b16 %v621
        %v819 = vunpack.c.l.b16 %v622
        %v820 = vunpack.c.h.b16 %v622
        %v821 = vunpack.c.l.b16 %v623
        %v822 = vunpack.c.h.b16 %v623
        %v823 = vunpack.c.l.b16 %v624
        %v824 = vunpack.c.h.b16 %v624
        %v825 = vunpack.c.l.b16 %v625
        %v826 = vunpack.c.h.b16 %v625
        %v827 = vunpack.c.l.b16 %v626
        %v828 = vunpack.c.h.b16 %v626
        %v829 = vunpack.c.l.b16 %v627
        %v830 = vunpack.c.h.b16 %v627
        %v831 = vunpack.c.l.b16 %v628
        %v832 = vunpack.c.h.b16 %v628
        %v833 = vunpack.c.l.b16 %v629
        %v834 = vunpack.c.h.b16 %v629
        %v835 = vunpack.c.l.b16 %v630
        %v836 = vunpack.c.h.b16 %v630
        %v837 = vunpack.c.l.b16 %v631
        %v838 = vunpack.c.h.b16 %v631
        %v839 = vunpack.c.l.b16 %v632
        %v840 = vunpack.c.h.b16 %v632
        %v841 = vunpack.c.l.b16 %v633
        %v842 = vunpack.c.h.b16 %v633
        %v843 = vunpack.c.l.b16 %v634
        %v844 = vunpack.c.h.b16 %v634
        %v845 = vunpack.c.l.b16 %v635
        %v846 = vunpack.c.h.b16 %v635
        %v847 = vunpack.c.l.b16 %v636
        %v848 = vunpack.c.h.b16 %v636
        %v849 = vunpack.c.l.b16 %v637
        %v850 = vunpack.c.h.b16 %v637
        %v851 = vunpack.c.l.b16 %v638
        %v852 = vunpack.c.h.b16 %v638
        %v853 = vpack.c.b16 %v729, %v725
        %v854 = vpack.c.b16 %v730, %v726
        %v855 = vpack.c.b16 %v731, %v727
        %v856 = vpack.c.b16 %v732, %v728
        %v857 = vpack.c.b16 %v737, %v733
        %v858 = vpack.c.b16 %v738, %v734
        %v859 = vpack.c.b16 %v739, %v735
        %v860 = vpack.c.b16 %v740, %v736
        %v861 = vpack.c.b16 %v745, %v741
        %v862 = vpack.c.b16 %v746, %v742
        %v863 = vpack.c.b16 %v747, %v743
        %v864 = vpack.c.b16 %v748, %v744
        %v865 = vpack.c.b16 %v753, %v749
        %v866 = vpack.c.b16 %v754, %v750
        %v867 = vpack.c.b16 %v755, %v751
        %v868 = vpack.c.b16 %v756, %v752
        %v869 = vpack.c.b16 %v761, %v757
        %v870 = vpack.c.b16 %v762, %v758
        %v871 = vpack.c.b16 %v763, %v759
        %v872 = vpack.c.b16 %v764, %v760
        %v873 = vpack.c.b16 %v769, %v765
        %v874 = vpack.c.b16 %v770, %v766
        %v875 = vpack.c.b16 %v771, %v767
        %v876 = vpack.c.b16 %v772, %v768
        %v877 = vpack.c.b16 %v777, %v773
        %v878 = vpack.c.b16 %v778, %v774
        %v879 = vpack.c.b16 %v779, %v775
        %v880 = vpack.c.b16 %v780, %v776
        %v881 = vpack.c.b16 %v785, %v781
        %v882 = vpack.c.b16 %v786, %v782
        %v883 = vpack.c.b16 %v787, %v783
        %v884 = vpack.c.b16 %v788, %v784
        %v885 = vpack.c.b16 %v793, %v789
        %v886 = vpack.c.b16 %v794, %v790
        %v887 = vpack.c.b16 %v795, %v791
        %v888 = vpack.c.b16 %v796, %v792
        %v889 = vpack.c.b16 %v801, %v797
        %v890 = vpack.c.b16 %v802, %v798
        %v891 = vpack.c.b16 %v803, %v799
        %v892 = vpack.c.b16 %v804, %v800
        %v893 = vpack.c.b16 %v809, %v805
        %v894 = vpack.c.b16 %v810, %v806
        %v895 = vpack.c.b16 %v811, %v807
        %v896 = vpack.c.b16 %v812, %v808
        %v897 = vpack.c.b16 %v817, %v813
        %v898 = vpack.c.b16 %v818, %v814
        %v899 = vpack.c.b16 %v819, %v815
        %v900 = vpack.c.b16 %v820, %v816
        %v901 = vpack.c.b16 %v825, %v821
        %v902 = vpack.c.b16 %v826, %v822
        %v903 = vpack.c.b16 %v827, %v823
        %v904 = vpack.c.b16 %v828, %v824
        %v905 = vpack.c.b16 %v833, %v829
        %v906 = vpack.c.b16 %v834, %v830
        %v907 = vpack.c.b16 %v835, %v831
        %v908 = vpack.c.b16 %v836, %v832
        %v909 = vpack.c.b16 %v841, %v837
        %v910 = vpack.c.b16 %v842, %v838
        %v911 = vpack.c.b16 %v843, %v839
        %v912 = vpack.c.b16 %v844, %v840
        %v913 = vpack.c.b16 %v849, %v845
        %v914 = vpack.c.b16 %v850, %v846
        %v915 = vpack.c.b16 %v851, %v847
        %v916 = vpack.c.b16 %v852, %v848
        %981 = vmatprep.subr.bf16.mxu0 %v882
        %982 = vmatpush1.bf16.msra.mxu0 %v881
        %983 = vmatprep.subr.bf16.mxu0 %v878
        %984 = vmatpush1.bf16.msra.mxu0 %v877
        %985 = vmatprep.subr.bf16.mxu0 %v874
        %986 = vmatpush1.bf16.msra.mxu0 %v873
        %987 = vmatprep.subr.bf16.mxu0 %v870
        %988 = vmatpush1.bf16.msra.mxu0 %v869
        %989 = vmatprep.subr.bf16.mxu0 %v866
        %990 = vmatpush1.bf16.msra.mxu0 %v865
        %991 = vmatprep.subr.bf16.mxu0 %v862
        %992 = vmatpush1.bf16.msra.mxu0 %v861
        %993 = vmatprep.subr.bf16.mxu0 %v858
        %994 = vmatpush1.bf16.msra.mxu0 %v857
        %995 = vmatprep.subr.bf16.mxu0 %v854
        %996 = vmatpush1.bf16.msra.mxu0 %v853
        %997 = vmatprep.subr.bf16.mxu0 %v914
        %998 = vmatpush2.bf16.msra.mxu0 %v913
        %999 = vmatprep.subr.bf16.mxu0 %v910
        %1000 = vmatpush2.bf16.msra.mxu0 %v909
        %1001 = vmatprep.subr.bf16.mxu0 %v906
        %1002 = vmatpush2.bf16.msra.mxu0 %v905
        %1003 = vmatprep.subr.bf16.mxu0 %v902
        %1004 = vmatpush2.bf16.msra.mxu0 %v901
        %1005 = vmatprep.subr.bf16.mxu0 %v898
        %1006 = vmatpush2.bf16.msra.mxu0 %v897
        %1007 = vmatprep.subr.bf16.mxu0 %v894
        %1008 = vmatpush2.bf16.msra.mxu0 %v893
        %1009 = vmatprep.subr.bf16.mxu0 %v890
        %1010 = vmatpush2.bf16.msra.mxu0 %v889
        %1011 = vmatprep.subr.bf16.mxu0 %v886
        %1012 = vmatpush2.bf16.msra.mxu0 %v885
        %1013 = vmatprep.mubr.bf16.mxu0 %v574
        %1014 = vmatmul.mubr.bf16.gmra.mxu0 %v573
        %v1015 = vpop.f32.mrf.mxu0
        %v1016 = vadd.f32 %v644, %v1015
        %v1017 = vpop.f32.mrf.mxu0
        %v1018 = vadd.f32 %v648, %v1017
        %v1019 = vpop.f32.mrf.mxu0
        %v1020 = vpop.f32.mrf.mxu0
        %1021 = vdwg.mxu0
        %1022 = vmatprep.subr.bf16.mxu0 %v884
        %1023 = vmatpush1.bf16.msra.mxu0 %v883
        %1024 = vmatprep.subr.bf16.mxu0 %v880
        %1025 = vmatpush1.bf16.msra.mxu0 %v879
        %1026 = vmatprep.subr.bf16.mxu0 %v876
        %1027 = vmatpush1.bf16.msra.mxu0 %v875
        %1028 = vmatprep.subr.bf16.mxu0 %v872
        %1029 = vmatpush1.bf16.msra.mxu0 %v871
        %1030 = vmatprep.subr.bf16.mxu0 %v868
        %1031 = vmatpush1.bf16.msra.mxu0 %v867
        %1032 = vmatprep.subr.bf16.mxu0 %v864
        %1033 = vmatpush1.bf16.msra.mxu0 %v863
        %1034 = vmatprep.subr.bf16.mxu0 %v860
        %1035 = vmatpush1.bf16.msra.mxu0 %v859
        %1036 = vmatprep.subr.bf16.mxu0 %v856
        %1037 = vmatpush1.bf16.msra.mxu0 %v855
        %1038 = vmatprep.subr.bf16.mxu0 %v916
        %1039 = vmatpush2.bf16.msra.mxu0 %v915
        %1040 = vmatprep.subr.bf16.mxu0 %v912
        %1041 = vmatpush2.bf16.msra.mxu0 %v911
        %1042 = vmatprep.subr.bf16.mxu0 %v908
        %1043 = vmatpush2.bf16.msra.mxu0 %v907
        %1044 = vmatprep.subr.bf16.mxu0 %v904
        %1045 = vmatpush2.bf16.msra.mxu0 %v903
        %1046 = vmatprep.subr.bf16.mxu0 %v900
        %1047 = vmatpush2.bf16.msra.mxu0 %v899
        %1048 = vmatprep.subr.bf16.mxu0 %v896
        %1049 = vmatpush2.bf16.msra.mxu0 %v895
        %1050 = vmatprep.subr.bf16.mxu0 %v892
        %1051 = vmatpush2.bf16.msra.mxu0 %v891
        %1052 = vmatprep.subr.bf16.mxu0 %v888
        %1053 = vmatpush2.bf16.msra.mxu0 %v887
        %1054 = vmatprep.mubr.bf16.mxu0 %v574
        %1055 = vmatmul.mubr.bf16.gmra.mxu0 %v573
        %v1056 = vpop.f32.mrf.mxu0
        %v1057 = vadd.f32 %v652, %v1056
        %v1058 = vpop.f32.mrf.mxu0
        %v1059 = vadd.f32 %v656, %v1058
        %v1060 = vpop.f32.mrf.mxu0
        %v1061 = vpop.f32.mrf.mxu0
        %1062 = vdwg.mxu0
        %vm1063 = vcmp.ge.f32.partialorder %v1016, 0.0
        %vm1064 = vcmp.ge.f32.partialorder %v1018, 0.0
        %vm1065 = vcmp.ge.f32.partialorder %v1057, 0.0
        %vm1066 = vcmp.ge.f32.partialorder %v1059, 0.0
        %v1067 = vmul.f32 %v1016, 0.2
        %v1068 = vmul.f32 %v1018, 0.2
        %v1069 = vmul.f32 %v1057, 0.2
        %v1070 = vmul.f32 %v1059, 0.2
        %v1071 = vsel %vm1063, %v1016, %v1067
        %v1072 = vsel %vm1064, %v1018, %v1068
        %v1073 = vsel %vm1065, %v1057, %v1069
        %v1074 = vsel %vm1066, %v1059, %v1070
        %v1075 = vpack.c.bf16 %v1071, %v1071
        %v1076 = vpack.c.bf16 %v1072, %v1072
        %v1077 = vpack.c.bf16 %v1073, %v1073
        %v1078 = vpack.c.bf16 %v1074, %v1074
        %v1079 = vld [vmem:[#allocation11] sm:$0xff]
        %v1080 = vld [vmem:[#allocation11 + $0x8] sm:$0xff]
        %v1081 = vld [vmem:[#allocation11 + $0x10] sm:$0xff]
        %v1082 = vld [vmem:[#allocation11 + $0x18] sm:$0xff]
        %v1083 = vld [vmem:[#allocation11 + $0x20] sm:$0xff]
        %v1084 = vld [vmem:[#allocation11 + $0x28] sm:$0xff]
        %v1085 = vld [vmem:[#allocation11 + $0x30] sm:$0xff]
        %v1086 = vld [vmem:[#allocation11 + $0x38] sm:$0xff]
        %v1087 = vld [vmem:[#allocation11 + $0x40] sm:$0xff]
        %v1088 = vld [vmem:[#allocation11 + $0x48] sm:$0xff]
        %v1089 = vld [vmem:[#allocation11 + $0x50] sm:$0xff]
        %v1090 = vld [vmem:[#allocation11 + $0x58] sm:$0xff]
        %v1091 = vld [vmem:[#allocation11 + $0x60] sm:$0xff]
        %v1092 = vld [vmem:[#allocation11 + $0x68] sm:$0xff]
        %v1093 = vld [vmem:[#allocation11 + $0x70] sm:$0xff]
        %v1094 = vld [vmem:[#allocation11 + $0x78] sm:$0xff]
        %v1095 = vld [vmem:[#allocation11 + $0x80] sm:$0xff]
        %v1096 = vld [vmem:[#allocation11 + $0x88] sm:$0xff]
        %v1097 = vld [vmem:[#allocation11 + $0x90] sm:$0xff]
        %v1098 = vld [vmem:[#allocation11 + $0x98] sm:$0xff]
        %v1099 = vld [vmem:[#allocation11 + $0xa0] sm:$0xff]
        %v1100 = vld [vmem:[#allocation11 + $0xa8] sm:$0xff]
        %v1101 = vld [vmem:[#allocation11 + $0xb0] sm:$0xff]
        %v1102 = vld [vmem:[#allocation11 + $0xb8] sm:$0xff]
        %v1103 = vld [vmem:[#allocation11 + $0xc0] sm:$0xff]
        %v1104 = vld [vmem:[#allocation11 + $0xc8] sm:$0xff]
        %v1105 = vld [vmem:[#allocation11 + $0xd0] sm:$0xff]
        %v1106 = vld [vmem:[#allocation11 + $0xd8] sm:$0xff]
        %v1107 = vld [vmem:[#allocation11 + $0xe0] sm:$0xff]
        %v1108 = vld [vmem:[#allocation11 + $0xe8] sm:$0xff]
        %v1109 = vld [vmem:[#allocation11 + $0xf0] sm:$0xff]
        %v1110 = vld [vmem:[#allocation11 + $0xf8] sm:$0xff]
        %v1111 = vld [vmem:[#allocation11 + $0x100] sm:$0xff]
        %v1112 = vld [vmem:[#allocation11 + $0x108] sm:$0xff]
        %v1113 = vld [vmem:[#allocation11 + $0x110] sm:$0xff]
        %v1114 = vld [vmem:[#allocation11 + $0x118] sm:$0xff]
        %v1115 = vld [vmem:[#allocation11 + $0x120] sm:$0xff]
        %v1116 = vld [vmem:[#allocation11 + $0x128] sm:$0xff]
        %v1117 = vld [vmem:[#allocation11 + $0x130] sm:$0xff]
        %v1118 = vld [vmem:[#allocation11 + $0x138] sm:$0xff]
        %v1119 = vld [vmem:[#allocation11 + $0x140] sm:$0xff]
        %v1120 = vld [vmem:[#allocation11 + $0x148] sm:$0xff]
        %v1121 = vld [vmem:[#allocation11 + $0x150] sm:$0xff]
        %v1122 = vld [vmem:[#allocation11 + $0x158] sm:$0xff]
        %v1123 = vld [vmem:[#allocation11 + $0x160] sm:$0xff]
        %v1124 = vld [vmem:[#allocation11 + $0x168] sm:$0xff]
        %v1125 = vld [vmem:[#allocation11 + $0x170] sm:$0xff]
        %v1126 = vld [vmem:[#allocation11 + $0x178] sm:$0xff]
        %v1127 = vld [vmem:[#allocation11 + $0x180] sm:$0xff]
        %v1128 = vld [vmem:[#allocation11 + $0x188] sm:$0xff]
        %v1129 = vld [vmem:[#allocation11 + $0x190] sm:$0xff]
        %v1130 = vld [vmem:[#allocation11 + $0x198] sm:$0xff]
        %v1131 = vld [vmem:[#allocation11 + $0x1a0] sm:$0xff]
        %v1132 = vld [vmem:[#allocation11 + $0x1a8] sm:$0xff]
        %v1133 = vld [vmem:[#allocation11 + $0x1b0] sm:$0xff]
        %v1134 = vld [vmem:[#allocation11 + $0x1b8] sm:$0xff]
        %v1135 = vld [vmem:[#allocation11 + $0x1c0] sm:$0xff]
        %v1136 = vld [vmem:[#allocation11 + $0x1c8] sm:$0xff]
        %v1137 = vld [vmem:[#allocation11 + $0x1d0] sm:$0xff]
        %v1138 = vld [vmem:[#allocation11 + $0x1d8] sm:$0xff]
        %v1139 = vld [vmem:[#allocation11 + $0x1e0] sm:$0xff]
        %v1140 = vld [vmem:[#allocation11 + $0x1e8] sm:$0xff]
        %v1141 = vld [vmem:[#allocation11 + $0x1f0] sm:$0xff]
        %v1142 = vld [vmem:[#allocation11 + $0x1f8] sm:$0xff]
        %v1143 = vld [vmem:[#allocation11 + $0x200] sm:$0xff]
        %v1144 = vld [vmem:[#allocation11 + $0x208] sm:$0xff]
        %v1145 = vld [vmem:[#allocation11 + $0x210] sm:$0xff]
        %v1146 = vld [vmem:[#allocation11 + $0x218] sm:$0xff]
        %v1147 = vld [vmem:[#allocation11 + $0x220] sm:$0xff]
        %v1148 = vld [vmem:[#allocation11 + $0x228] sm:$0xff]
        %v1149 = vld [vmem:[#allocation11 + $0x230] sm:$0xff]
        %v1150 = vld [vmem:[#allocation11 + $0x238] sm:$0xff]
        %v1151 = vld [vmem:[#allocation11 + $0x240] sm:$0xff]
        %v1152 = vld [vmem:[#allocation11 + $0x248] sm:$0xff]
        %v1153 = vld [vmem:[#allocation11 + $0x250] sm:$0xff]
        %v1154 = vld [vmem:[#allocation11 + $0x258] sm:$0xff]
        %v1155 = vld [vmem:[#allocation11 + $0x260] sm:$0xff]
        %v1156 = vld [vmem:[#allocation11 + $0x268] sm:$0xff]
        %v1157 = vld [vmem:[#allocation11 + $0x270] sm:$0xff]
        %v1158 = vld [vmem:[#allocation11 + $0x278] sm:$0xff]
        %v1159 = vld [vmem:[#allocation11 + $0x280] sm:$0xff]
        %v1160 = vld [vmem:[#allocation11 + $0x288] sm:$0xff]
        %v1161 = vld [vmem:[#allocation11 + $0x290] sm:$0xff]
        %v1162 = vld [vmem:[#allocation11 + $0x298] sm:$0xff]
        %v1163 = vld [vmem:[#allocation11 + $0x2a0] sm:$0xff]
        %v1164 = vld [vmem:[#allocation11 + $0x2a8] sm:$0xff]
        %v1165 = vld [vmem:[#allocation11 + $0x2b0] sm:$0xff]
        %v1166 = vld [vmem:[#allocation11 + $0x2b8] sm:$0xff]
        %v1167 = vld [vmem:[#allocation11 + $0x2c0] sm:$0xff]
        %v1168 = vld [vmem:[#allocation11 + $0x2c8] sm:$0xff]
        %v1169 = vld [vmem:[#allocation11 + $0x2d0] sm:$0xff]
        %v1170 = vld [vmem:[#allocation11 + $0x2d8] sm:$0xff]
        %v1171 = vld [vmem:[#allocation11 + $0x2e0] sm:$0xff]
        %v1172 = vld [vmem:[#allocation11 + $0x2e8] sm:$0xff]
        %v1173 = vld [vmem:[#allocation11 + $0x2f0] sm:$0xff]
        %v1174 = vld [vmem:[#allocation11 + $0x2f8] sm:$0xff]
        %v1175 = vld [vmem:[#allocation11 + $0x300] sm:$0xff]
        %v1176 = vld [vmem:[#allocation11 + $0x308] sm:$0xff]
        %v1177 = vld [vmem:[#allocation11 + $0x310] sm:$0xff]
        %v1178 = vld [vmem:[#allocation11 + $0x318] sm:$0xff]
        %v1179 = vld [vmem:[#allocation11 + $0x320] sm:$0xff]
        %v1180 = vld [vmem:[#allocation11 + $0x328] sm:$0xff]
        %v1181 = vld [vmem:[#allocation11 + $0x330] sm:$0xff]
        %v1182 = vld [vmem:[#allocation11 + $0x338] sm:$0xff]
        %v1183 = vld [vmem:[#allocation11 + $0x340] sm:$0xff]
        %v1184 = vld [vmem:[#allocation11 + $0x348] sm:$0xff]
        %v1185 = vld [vmem:[#allocation11 + $0x350] sm:$0xff]
        %v1186 = vld [vmem:[#allocation11 + $0x358] sm:$0xff]
        %v1187 = vld [vmem:[#allocation11 + $0x360] sm:$0xff]
        %v1188 = vld [vmem:[#allocation11 + $0x368] sm:$0xff]
        %v1189 = vld [vmem:[#allocation11 + $0x370] sm:$0xff]
        %v1190 = vld [vmem:[#allocation11 + $0x378] sm:$0xff]
        %v1191 = vld [vmem:[#allocation11 + $0x380] sm:$0xff]
        %v1192 = vld [vmem:[#allocation11 + $0x388] sm:$0xff]
        %v1193 = vld [vmem:[#allocation11 + $0x390] sm:$0xff]
        %v1194 = vld [vmem:[#allocation11 + $0x398] sm:$0xff]
        %v1195 = vld [vmem:[#allocation11 + $0x3a0] sm:$0xff]
        %v1196 = vld [vmem:[#allocation11 + $0x3a8] sm:$0xff]
        %v1197 = vld [vmem:[#allocation11 + $0x3b0] sm:$0xff]
        %v1198 = vld [vmem:[#allocation11 + $0x3b8] sm:$0xff]
        %v1199 = vld [vmem:[#allocation11 + $0x3c0] sm:$0xff]
        %v1200 = vld [vmem:[#allocation11 + $0x3c8] sm:$0xff]
        %v1201 = vld [vmem:[#allocation11 + $0x3d0] sm:$0xff]
        %v1202 = vld [vmem:[#allocation11 + $0x3d8] sm:$0xff]
        %v1203 = vld [vmem:[#allocation11 + $0x3e0] sm:$0xff]
        %v1204 = vld [vmem:[#allocation11 + $0x3e8] sm:$0xff]
        %v1205 = vld [vmem:[#allocation11 + $0x3f0] sm:$0xff]
        %v1206 = vld [vmem:[#allocation11 + $0x3f8] sm:$0xff]
        %v1207 = vld [vmem:[#allocation11 + $0x400] sm:$0xff]
        %v1208 = vld [vmem:[#allocation11 + $0x408] sm:$0xff]
        %v1209 = vld [vmem:[#allocation11 + $0x410] sm:$0xff]
        %v1210 = vld [vmem:[#allocation11 + $0x418] sm:$0xff]
        %v1211 = vld [vmem:[#allocation11 + $0x420] sm:$0xff]
        %v1212 = vld [vmem:[#allocation11 + $0x428] sm:$0xff]
        %v1213 = vld [vmem:[#allocation11 + $0x430] sm:$0xff]
        %v1214 = vld [vmem:[#allocation11 + $0x438] sm:$0xff]
        %v1215 = vld [vmem:[#allocation11 + $0x440] sm:$0xff]
        %v1216 = vld [vmem:[#allocation11 + $0x448] sm:$0xff]
        %v1217 = vld [vmem:[#allocation11 + $0x450] sm:$0xff]
        %v1218 = vld [vmem:[#allocation11 + $0x458] sm:$0xff]
        %v1219 = vld [vmem:[#allocation11 + $0x460] sm:$0xff]
        %v1220 = vld [vmem:[#allocation11 + $0x468] sm:$0xff]
        %v1221 = vld [vmem:[#allocation11 + $0x470] sm:$0xff]
        %v1222 = vld [vmem:[#allocation11 + $0x478] sm:$0xff]
        %v1223 = vld [vmem:[#allocation11 + $0x480] sm:$0xff]
        %v1224 = vld [vmem:[#allocation11 + $0x488] sm:$0xff]
        %v1225 = vld [vmem:[#allocation11 + $0x490] sm:$0xff]
        %v1226 = vld [vmem:[#allocation11 + $0x498] sm:$0xff]
        %v1227 = vld [vmem:[#allocation11 + $0x4a0] sm:$0xff]
        %v1228 = vld [vmem:[#allocation11 + $0x4a8] sm:$0xff]
        %v1229 = vld [vmem:[#allocation11 + $0x4b0] sm:$0xff]
        %v1230 = vld [vmem:[#allocation11 + $0x4b8] sm:$0xff]
        %v1231 = vld [vmem:[#allocation11 + $0x4c0] sm:$0xff]
        %v1232 = vld [vmem:[#allocation11 + $0x4c8] sm:$0xff]
        %v1233 = vld [vmem:[#allocation11 + $0x4d0] sm:$0xff]
        %v1234 = vld [vmem:[#allocation11 + $0x4d8] sm:$0xff]
        %v1235 = vld [vmem:[#allocation11 + $0x4e0] sm:$0xff]
        %v1236 = vld [vmem:[#allocation11 + $0x4e8] sm:$0xff]
        %v1237 = vld [vmem:[#allocation11 + $0x4f0] sm:$0xff]
        %v1238 = vld [vmem:[#allocation11 + $0x4f8] sm:$0xff]
        %v1239 = vld [vmem:[#allocation11 + $0x500] sm:$0xff]
        %v1240 = vld [vmem:[#allocation11 + $0x508] sm:$0xff]
        %v1241 = vld [vmem:[#allocation11 + $0x510] sm:$0xff]
        %v1242 = vld [vmem:[#allocation11 + $0x518] sm:$0xff]
        %v1243 = vld [vmem:[#allocation11 + $0x520] sm:$0xff]
        %v1244 = vld [vmem:[#allocation11 + $0x528] sm:$0xff]
        %v1245 = vld [vmem:[#allocation11 + $0x530] sm:$0xff]
        %v1246 = vld [vmem:[#allocation11 + $0x538] sm:$0xff]
        %v1247 = vld [vmem:[#allocation11 + $0x540] sm:$0xff]
        %v1248 = vld [vmem:[#allocation11 + $0x548] sm:$0xff]
        %v1249 = vld [vmem:[#allocation11 + $0x550] sm:$0xff]
        %v1250 = vld [vmem:[#allocation11 + $0x558] sm:$0xff]
        %v1251 = vld [vmem:[#allocation11 + $0x560] sm:$0xff]
        %v1252 = vld [vmem:[#allocation11 + $0x568] sm:$0xff]
        %v1253 = vld [vmem:[#allocation11 + $0x570] sm:$0xff]
        %v1254 = vld [vmem:[#allocation11 + $0x578] sm:$0xff]
        %v1255 = vld [vmem:[#allocation11 + $0x580] sm:$0xff]
        %v1256 = vld [vmem:[#allocation11 + $0x588] sm:$0xff]
        %v1257 = vld [vmem:[#allocation11 + $0x590] sm:$0xff]
        %v1258 = vld [vmem:[#allocation11 + $0x598] sm:$0xff]
        %v1259 = vld [vmem:[#allocation11 + $0x5a0] sm:$0xff]
        %v1260 = vld [vmem:[#allocation11 + $0x5a8] sm:$0xff]
        %v1261 = vld [vmem:[#allocation11 + $0x5b0] sm:$0xff]
        %v1262 = vld [vmem:[#allocation11 + $0x5b8] sm:$0xff]
        %v1263 = vld [vmem:[#allocation11 + $0x5c0] sm:$0xff]
        %v1264 = vld [vmem:[#allocation11 + $0x5c8] sm:$0xff]
        %v1265 = vld [vmem:[#allocation11 + $0x5d0] sm:$0xff]
        %v1266 = vld [vmem:[#allocation11 + $0x5d8] sm:$0xff]
        %v1267 = vld [vmem:[#allocation11 + $0x5e0] sm:$0xff]
        %v1268 = vld [vmem:[#allocation11 + $0x5e8] sm:$0xff]
        %v1269 = vld [vmem:[#allocation11 + $0x5f0] sm:$0xff]
        %v1270 = vld [vmem:[#allocation11 + $0x5f8] sm:$0xff]
        %v1271 = vld [vmem:[#allocation11 + $0x600] sm:$0xff]
        %v1272 = vld [vmem:[#allocation11 + $0x608] sm:$0xff]
        %v1273 = vld [vmem:[#allocation11 + $0x610] sm:$0xff]
        %v1274 = vld [vmem:[#allocation11 + $0x618] sm:$0xff]
        %v1275 = vld [vmem:[#allocation11 + $0x620] sm:$0xff]
        %v1276 = vld [vmem:[#allocation11 + $0x628] sm:$0xff]
        %v1277 = vld [vmem:[#allocation11 + $0x630] sm:$0xff]
        %v1278 = vld [vmem:[#allocation11 + $0x638] sm:$0xff]
        %v1279 = vld [vmem:[#allocation11 + $0x640] sm:$0xff]
        %v1280 = vld [vmem:[#allocation11 + $0x648] sm:$0xff]
        %v1281 = vld [vmem:[#allocation11 + $0x650] sm:$0xff]
        %v1282 = vld [vmem:[#allocation11 + $0x658] sm:$0xff]
        %v1283 = vld [vmem:[#allocation11 + $0x660] sm:$0xff]
        %v1284 = vld [vmem:[#allocation11 + $0x668] sm:$0xff]
        %v1285 = vld [vmem:[#allocation11 + $0x670] sm:$0xff]
        %v1286 = vld [vmem:[#allocation11 + $0x678] sm:$0xff]
        %v1287 = vld [vmem:[#allocation11 + $0x680] sm:$0xff]
        %v1288 = vld [vmem:[#allocation11 + $0x688] sm:$0xff]
        %v1289 = vld [vmem:[#allocation11 + $0x690] sm:$0xff]
        %v1290 = vld [vmem:[#allocation11 + $0x698] sm:$0xff]
        %v1291 = vld [vmem:[#allocation11 + $0x6a0] sm:$0xff]
        %v1292 = vld [vmem:[#allocation11 + $0x6a8] sm:$0xff]
        %v1293 = vld [vmem:[#allocation11 + $0x6b0] sm:$0xff]
        %v1294 = vld [vmem:[#allocation11 + $0x6b8] sm:$0xff]
        %v1295 = vld [vmem:[#allocation11 + $0x6c0] sm:$0xff]
        %v1296 = vld [vmem:[#allocation11 + $0x6c8] sm:$0xff]
        %v1297 = vld [vmem:[#allocation11 + $0x6d0] sm:$0xff]
        %v1298 = vld [vmem:[#allocation11 + $0x6d8] sm:$0xff]
        %v1299 = vld [vmem:[#allocation11 + $0x6e0] sm:$0xff]
        %v1300 = vld [vmem:[#allocation11 + $0x6e8] sm:$0xff]
        %v1301 = vld [vmem:[#allocation11 + $0x6f0] sm:$0xff]
        %v1302 = vld [vmem:[#allocation11 + $0x6f8] sm:$0xff]
        %v1303 = vld [vmem:[#allocation11 + $0x700] sm:$0xff]
        %v1304 = vld [vmem:[#allocation11 + $0x708] sm:$0xff]
        %v1305 = vld [vmem:[#allocation11 + $0x710] sm:$0xff]
        %v1306 = vld [vmem:[#allocation11 + $0x718] sm:$0xff]
        %v1307 = vld [vmem:[#allocation11 + $0x720] sm:$0xff]
        %v1308 = vld [vmem:[#allocation11 + $0x728] sm:$0xff]
        %v1309 = vld [vmem:[#allocation11 + $0x730] sm:$0xff]
        %v1310 = vld [vmem:[#allocation11 + $0x738] sm:$0xff]
        %v1311 = vld [vmem:[#allocation11 + $0x740] sm:$0xff]
        %v1312 = vld [vmem:[#allocation11 + $0x748] sm:$0xff]
        %v1313 = vld [vmem:[#allocation11 + $0x750] sm:$0xff]
        %v1314 = vld [vmem:[#allocation11 + $0x758] sm:$0xff]
        %v1315 = vld [vmem:[#allocation11 + $0x760] sm:$0xff]
        %v1316 = vld [vmem:[#allocation11 + $0x768] sm:$0xff]
        %v1317 = vld [vmem:[#allocation11 + $0x770] sm:$0xff]
        %v1318 = vld [vmem:[#allocation11 + $0x778] sm:$0xff]
        %v1319 = vld [vmem:[#allocation11 + $0x780] sm:$0xff]
        %v1320 = vld [vmem:[#allocation11 + $0x788] sm:$0xff]
        %v1321 = vld [vmem:[#allocation11 + $0x790] sm:$0xff]
        %v1322 = vld [vmem:[#allocation11 + $0x798] sm:$0xff]
        %v1323 = vld [vmem:[#allocation11 + $0x7a0] sm:$0xff]
        %v1324 = vld [vmem:[#allocation11 + $0x7a8] sm:$0xff]
        %v1325 = vld [vmem:[#allocation11 + $0x7b0] sm:$0xff]
        %v1326 = vld [vmem:[#allocation11 + $0x7b8] sm:$0xff]
        %v1327 = vld [vmem:[#allocation11 + $0x7c0] sm:$0xff]
        %v1328 = vld [vmem:[#allocation11 + $0x7c8] sm:$0xff]
        %v1329 = vld [vmem:[#allocation11 + $0x7d0] sm:$0xff]
        %v1330 = vld [vmem:[#allocation11 + $0x7d8] sm:$0xff]
        %v1331 = vld [vmem:[#allocation11 + $0x7e0] sm:$0xff]
        %v1332 = vld [vmem:[#allocation11 + $0x7e8] sm:$0xff]
        %v1333 = vld [vmem:[#allocation11 + $0x7f0] sm:$0xff]
        %v1334 = vld [vmem:[#allocation11 + $0x7f8] sm:$0xff]
        %v1335 = vld [vmem:[#allocation13] sm:$0xff]
        %v1337 = vlaneseq
        %v1338 = vshrl.u32 %v1337, 7
        %v1339 = vsub.s32 0, %v1338
        %v1340 = vrot.slane %v1335, %v1339
        %v1341 = vlaneseq
        %v1342 = vshrl.u32 %v1341, 7
        %v1343 = vsub.s32 1, %v1342
        %v1344 = vrot.slane %v1335, %v1343
        %v1345 = vlaneseq
        %v1346 = vshrl.u32 %v1345, 7
        %v1347 = vsub.s32 2, %v1346
        %v1348 = vrot.slane %v1335, %v1347
        %v1349 = vlaneseq
        %v1350 = vshrl.u32 %v1349, 7
        %v1351 = vsub.s32 3, %v1350
        %v1352 = vrot.slane %v1335, %v1351
        %v1353 = vlaneseq
        %v1354 = vshrl.u32 %v1353, 7
        %v1355 = vsub.s32 4, %v1354
        %v1356 = vrot.slane %v1335, %v1355
        %v1357 = vlaneseq
        %v1358 = vshrl.u32 %v1357, 7
        %v1359 = vsub.s32 5, %v1358
        %v1360 = vrot.slane %v1335, %v1359
        %v1361 = vlaneseq
        %v1362 = vshrl.u32 %v1361, 7
        %v1363 = vsub.s32 6, %v1362
        %v1364 = vrot.slane %v1335, %v1363
        %v1365 = vlaneseq
        %v1366 = vshrl.u32 %v1365, 7
        %v1367 = vsub.s32 7, %v1366
        %v1368 = vrot.slane %v1335, %v1367
        %v1633 = vunpack.c.l.b16 %v1079
        %v1634 = vunpack.c.h.b16 %v1079
        %v1635 = vunpack.c.l.b16 %v1080
        %v1636 = vunpack.c.h.b16 %v1080
        %v1637 = vunpack.c.l.b16 %v1081
        %v1638 = vunpack.c.h.b16 %v1081
        %v1639 = vunpack.c.l.b16 %v1082
        %v1640 = vunpack.c.h.b16 %v1082
        %v1641 = vunpack.c.l.b16 %v1083
        %v1642 = vunpack.c.h.b16 %v1083
        %v1643 = vunpack.c.l.b16 %v1084
        %v1644 = vunpack.c.h.b16 %v1084
        %v1645 = vunpack.c.l.b16 %v1085
        %v1646 = vunpack.c.h.b16 %v1085
        %v1647 = vunpack.c.l.b16 %v1086
        %v1648 = vunpack.c.h.b16 %v1086
        %v1649 = vunpack.c.l.b16 %v1087
        %v1650 = vunpack.c.h.b16 %v1087
        %v1651 = vunpack.c.l.b16 %v1088
        %v1652 = vunpack.c.h.b16 %v1088
        %v1653 = vunpack.c.l.b16 %v1089
        %v1654 = vunpack.c.h.b16 %v1089
        %v1655 = vunpack.c.l.b16 %v1090
        %v1656 = vunpack.c.h.b16 %v1090
        %v1657 = vunpack.c.l.b16 %v1091
        %v1658 = vunpack.c.h.b16 %v1091
        %v1659 = vunpack.c.l.b16 %v1092
        %v1660 = vunpack.c.h.b16 %v1092
        %v1661 = vunpack.c.l.b16 %v1093
        %v1662 = vunpack.c.h.b16 %v1093
        %v1663 = vunpack.c.l.b16 %v1094
        %v1664 = vunpack.c.h.b16 %v1094
        %v1665 = vunpack.c.l.b16 %v1095
        %v1666 = vunpack.c.h.b16 %v1095
        %v1667 = vunpack.c.l.b16 %v1096
        %v1668 = vunpack.c.h.b16 %v1096
        %v1669 = vunpack.c.l.b16 %v1097
        %v1670 = vunpack.c.h.b16 %v1097
        %v1671 = vunpack.c.l.b16 %v1098
        %v1672 = vunpack.c.h.b16 %v1098
        %v1673 = vunpack.c.l.b16 %v1099
        %v1674 = vunpack.c.h.b16 %v1099
        %v1675 = vunpack.c.l.b16 %v1100
        %v1676 = vunpack.c.h.b16 %v1100
        %v1677 = vunpack.c.l.b16 %v1101
        %v1678 = vunpack.c.h.b16 %v1101
        %v1679 = vunpack.c.l.b16 %v1102
        %v1680 = vunpack.c.h.b16 %v1102
        %v1681 = vunpack.c.l.b16 %v1103
        %v1682 = vunpack.c.h.b16 %v1103
        %v1683 = vunpack.c.l.b16 %v1104
        %v1684 = vunpack.c.h.b16 %v1104
        %v1685 = vunpack.c.l.b16 %v1105
        %v1686 = vunpack.c.h.b16 %v1105
        %v1687 = vunpack.c.l.b16 %v1106
        %v1688 = vunpack.c.h.b16 %v1106
        %v1689 = vunpack.c.l.b16 %v1107
        %v1690 = vunpack.c.h.b16 %v1107
        %v1691 = vunpack.c.l.b16 %v1108
        %v1692 = vunpack.c.h.b16 %v1108
        %v1693 = vunpack.c.l.b16 %v1109
        %v1694 = vunpack.c.h.b16 %v1109
        %v1695 = vunpack.c.l.b16 %v1110
        %v1696 = vunpack.c.h.b16 %v1110
        %v1697 = vunpack.c.l.b16 %v1111
        %v1698 = vunpack.c.h.b16 %v1111
        %v1699 = vunpack.c.l.b16 %v1112
        %v1700 = vunpack.c.h.b16 %v1112
        %v1701 = vunpack.c.l.b16 %v1113
        %v1702 = vunpack.c.h.b16 %v1113
        %v1703 = vunpack.c.l.b16 %v1114
        %v1704 = vunpack.c.h.b16 %v1114
        %v1705 = vunpack.c.l.b16 %v1115
        %v1706 = vunpack.c.h.b16 %v1115
        %v1707 = vunpack.c.l.b16 %v1116
        %v1708 = vunpack.c.h.b16 %v1116
        %v1709 = vunpack.c.l.b16 %v1117
        %v1710 = vunpack.c.h.b16 %v1117
        %v1711 = vunpack.c.l.b16 %v1118
        %v1712 = vunpack.c.h.b16 %v1118
        %v1713 = vunpack.c.l.b16 %v1119
        %v1714 = vunpack.c.h.b16 %v1119
        %v1715 = vunpack.c.l.b16 %v1120
        %v1716 = vunpack.c.h.b16 %v1120
        %v1717 = vunpack.c.l.b16 %v1121
        %v1718 = vunpack.c.h.b16 %v1121
        %v1719 = vunpack.c.l.b16 %v1122
        %v1720 = vunpack.c.h.b16 %v1122
        %v1721 = vunpack.c.l.b16 %v1123
        %v1722 = vunpack.c.h.b16 %v1123
        %v1723 = vunpack.c.l.b16 %v1124
        %v1724 = vunpack.c.h.b16 %v1124
        %v1725 = vunpack.c.l.b16 %v1125
        %v1726 = vunpack.c.h.b16 %v1125
        %v1727 = vunpack.c.l.b16 %v1126
        %v1728 = vunpack.c.h.b16 %v1126
        %v1729 = vunpack.c.l.b16 %v1127
        %v1730 = vunpack.c.h.b16 %v1127
        %v1731 = vunpack.c.l.b16 %v1128
        %v1732 = vunpack.c.h.b16 %v1128
        %v1733 = vunpack.c.l.b16 %v1129
        %v1734 = vunpack.c.h.b16 %v1129
        %v1735 = vunpack.c.l.b16 %v1130
        %v1736 = vunpack.c.h.b16 %v1130
        %v1737 = vunpack.c.l.b16 %v1131
        %v1738 = vunpack.c.h.b16 %v1131
        %v1739 = vunpack.c.l.b16 %v1132
        %v1740 = vunpack.c.h.b16 %v1132
        %v1741 = vunpack.c.l.b16 %v1133
        %v1742 = vunpack.c.h.b16 %v1133
        %v1743 = vunpack.c.l.b16 %v1134
        %v1744 = vunpack.c.h.b16 %v1134
        %v1745 = vunpack.c.l.b16 %v1135
        %v1746 = vunpack.c.h.b16 %v1135
        %v1747 = vunpack.c.l.b16 %v1136
        %v1748 = vunpack.c.h.b16 %v1136
        %v1749 = vunpack.c.l.b16 %v1137
        %v1750 = vunpack.c.h.b16 %v1137
        %v1751 = vunpack.c.l.b16 %v1138
        %v1752 = vunpack.c.h.b16 %v1138
        %v1753 = vunpack.c.l.b16 %v1139
        %v1754 = vunpack.c.h.b16 %v1139
        %v1755 = vunpack.c.l.b16 %v1140
        %v1756 = vunpack.c.h.b16 %v1140
        %v1757 = vunpack.c.l.b16 %v1141
        %v1758 = vunpack.c.h.b16 %v1141
        %v1759 = vunpack.c.l.b16 %v1142
        %v1760 = vunpack.c.h.b16 %v1142
        %v1761 = vunpack.c.l.b16 %v1143
        %v1762 = vunpack.c.h.b16 %v1143
        %v1763 = vunpack.c.l.b16 %v1144
        %v1764 = vunpack.c.h.b16 %v1144
        %v1765 = vunpack.c.l.b16 %v1145
        %v1766 = vunpack.c.h.b16 %v1145
        %v1767 = vunpack.c.l.b16 %v1146
        %v1768 = vunpack.c.h.b16 %v1146
        %v1769 = vunpack.c.l.b16 %v1147
        %v1770 = vunpack.c.h.b16 %v1147
        %v1771 = vunpack.c.l.b16 %v1148
        %v1772 = vunpack.c.h.b16 %v1148
        %v1773 = vunpack.c.l.b16 %v1149
        %v1774 = vunpack.c.h.b16 %v1149
        %v1775 = vunpack.c.l.b16 %v1150
        %v1776 = vunpack.c.h.b16 %v1150
        %v1777 = vunpack.c.l.b16 %v1151
        %v1778 = vunpack.c.h.b16 %v1151
        %v1779 = vunpack.c.l.b16 %v1152
        %v1780 = vunpack.c.h.b16 %v1152
        %v1781 = vunpack.c.l.b16 %v1153
        %v1782 = vunpack.c.h.b16 %v1153
        %v1783 = vunpack.c.l.b16 %v1154
        %v1784 = vunpack.c.h.b16 %v1154
        %v1785 = vunpack.c.l.b16 %v1155
        %v1786 = vunpack.c.h.b16 %v1155
        %v1787 = vunpack.c.l.b16 %v1156
        %v1788 = vunpack.c.h.b16 %v1156
        %v1789 = vunpack.c.l.b16 %v1157
        %v1790 = vunpack.c.h.b16 %v1157
        %v1791 = vunpack.c.l.b16 %v1158
        %v1792 = vunpack.c.h.b16 %v1158
        %v1793 = vunpack.c.l.b16 %v1159
        %v1794 = vunpack.c.h.b16 %v1159
        %v1795 = vunpack.c.l.b16 %v1160
        %v1796 = vunpack.c.h.b16 %v1160
        %v1797 = vunpack.c.l.b16 %v1161
        %v1798 = vunpack.c.h.b16 %v1161
        %v1799 = vunpack.c.l.b16 %v1162
        %v1800 = vunpack.c.h.b16 %v1162
        %v1801 = vunpack.c.l.b16 %v1163
        %v1802 = vunpack.c.h.b16 %v1163
        %v1803 = vunpack.c.l.b16 %v1164
        %v1804 = vunpack.c.h.b16 %v1164
        %v1805 = vunpack.c.l.b16 %v1165
        %v1806 = vunpack.c.h.b16 %v1165
        %v1807 = vunpack.c.l.b16 %v1166
        %v1808 = vunpack.c.h.b16 %v1166
        %v1809 = vunpack.c.l.b16 %v1167
        %v1810 = vunpack.c.h.b16 %v1167
        %v1811 = vunpack.c.l.b16 %v1168
        %v1812 = vunpack.c.h.b16 %v1168
        %v1813 = vunpack.c.l.b16 %v1169
        %v1814 = vunpack.c.h.b16 %v1169
        %v1815 = vunpack.c.l.b16 %v1170
        %v1816 = vunpack.c.h.b16 %v1170
        %v1817 = vunpack.c.l.b16 %v1171
        %v1818 = vunpack.c.h.b16 %v1171
        %v1819 = vunpack.c.l.b16 %v1172
        %v1820 = vunpack.c.h.b16 %v1172
        %v1821 = vunpack.c.l.b16 %v1173
        %v1822 = vunpack.c.h.b16 %v1173
        %v1823 = vunpack.c.l.b16 %v1174
        %v1824 = vunpack.c.h.b16 %v1174
        %v1825 = vunpack.c.l.b16 %v1175
        %v1826 = vunpack.c.h.b16 %v1175
        %v1827 = vunpack.c.l.b16 %v1176
        %v1828 = vunpack.c.h.b16 %v1176
        %v1829 = vunpack.c.l.b16 %v1177
        %v1830 = vunpack.c.h.b16 %v1177
        %v1831 = vunpack.c.l.b16 %v1178
        %v1832 = vunpack.c.h.b16 %v1178
        %v1833 = vunpack.c.l.b16 %v1179
        %v1834 = vunpack.c.h.b16 %v1179
        %v1835 = vunpack.c.l.b16 %v1180
        %v1836 = vunpack.c.h.b16 %v1180
        %v1837 = vunpack.c.l.b16 %v1181
        %v1838 = vunpack.c.h.b16 %v1181
        %v1839 = vunpack.c.l.b16 %v1182
        %v1840 = vunpack.c.h.b16 %v1182
        %v1841 = vunpack.c.l.b16 %v1183
        %v1842 = vunpack.c.h.b16 %v1183
        %v1843 = vunpack.c.l.b16 %v1184
        %v1844 = vunpack.c.h.b16 %v1184
        %v1845 = vunpack.c.l.b16 %v1185
        %v1846 = vunpack.c.h.b16 %v1185
        %v1847 = vunpack.c.l.b16 %v1186
        %v1848 = vunpack.c.h.b16 %v1186
        %v1849 = vunpack.c.l.b16 %v1187
        %v1850 = vunpack.c.h.b16 %v1187
        %v1851 = vunpack.c.l.b16 %v1188
        %v1852 = vunpack.c.h.b16 %v1188
        %v1853 = vunpack.c.l.b16 %v1189
        %v1854 = vunpack.c.h.b16 %v1189
        %v1855 = vunpack.c.l.b16 %v1190
        %v1856 = vunpack.c.h.b16 %v1190
        %v1857 = vunpack.c.l.b16 %v1191
        %v1858 = vunpack.c.h.b16 %v1191
        %v1859 = vunpack.c.l.b16 %v1192
        %v1860 = vunpack.c.h.b16 %v1192
        %v1861 = vunpack.c.l.b16 %v1193
        %v1862 = vunpack.c.h.b16 %v1193
        %v1863 = vunpack.c.l.b16 %v1194
        %v1864 = vunpack.c.h.b16 %v1194
        %v1865 = vunpack.c.l.b16 %v1195
        %v1866 = vunpack.c.h.b16 %v1195
        %v1867 = vunpack.c.l.b16 %v1196
        %v1868 = vunpack.c.h.b16 %v1196
        %v1869 = vunpack.c.l.b16 %v1197
        %v1870 = vunpack.c.h.b16 %v1197
        %v1871 = vunpack.c.l.b16 %v1198
        %v1872 = vunpack.c.h.b16 %v1198
        %v1873 = vunpack.c.l.b16 %v1199
        %v1874 = vunpack.c.h.b16 %v1199
        %v1875 = vunpack.c.l.b16 %v1200
        %v1876 = vunpack.c.h.b16 %v1200
        %v1877 = vunpack.c.l.b16 %v1201
        %v1878 = vunpack.c.h.b16 %v1201
        %v1879 = vunpack.c.l.b16 %v1202
        %v1880 = vunpack.c.h.b16 %v1202
        %v1881 = vunpack.c.l.b16 %v1203
        %v1882 = vunpack.c.h.b16 %v1203
        %v1883 = vunpack.c.l.b16 %v1204
        %v1884 = vunpack.c.h.b16 %v1204
        %v1885 = vunpack.c.l.b16 %v1205
        %v1886 = vunpack.c.h.b16 %v1205
        %v1887 = vunpack.c.l.b16 %v1206
        %v1888 = vunpack.c.h.b16 %v1206
        %v1889 = vunpack.c.l.b16 %v1207
        %v1890 = vunpack.c.h.b16 %v1207
        %v1891 = vunpack.c.l.b16 %v1208
        %v1892 = vunpack.c.h.b16 %v1208
        %v1893 = vunpack.c.l.b16 %v1209
        %v1894 = vunpack.c.h.b16 %v1209
        %v1895 = vunpack.c.l.b16 %v1210
        %v1896 = vunpack.c.h.b16 %v1210
        %v1897 = vunpack.c.l.b16 %v1211
        %v1898 = vunpack.c.h.b16 %v1211
        %v1899 = vunpack.c.l.b16 %v1212
        %v1900 = vunpack.c.h.b16 %v1212
        %v1901 = vunpack.c.l.b16 %v1213
        %v1902 = vunpack.c.h.b16 %v1213
        %v1903 = vunpack.c.l.b16 %v1214
        %v1904 = vunpack.c.h.b16 %v1214
        %v1905 = vunpack.c.l.b16 %v1215
        %v1906 = vunpack.c.h.b16 %v1215
        %v1907 = vunpack.c.l.b16 %v1216
        %v1908 = vunpack.c.h.b16 %v1216
        %v1909 = vunpack.c.l.b16 %v1217
        %v1910 = vunpack.c.h.b16 %v1217
        %v1911 = vunpack.c.l.b16 %v1218
        %v1912 = vunpack.c.h.b16 %v1218
        %v1913 = vunpack.c.l.b16 %v1219
        %v1914 = vunpack.c.h.b16 %v1219
        %v1915 = vunpack.c.l.b16 %v1220
        %v1916 = vunpack.c.h.b16 %v1220
        %v1917 = vunpack.c.l.b16 %v1221
        %v1918 = vunpack.c.h.b16 %v1221
        %v1919 = vunpack.c.l.b16 %v1222
        %v1920 = vunpack.c.h.b16 %v1222
        %v1921 = vunpack.c.l.b16 %v1223
        %v1922 = vunpack.c.h.b16 %v1223
        %v1923 = vunpack.c.l.b16 %v1224
        %v1924 = vunpack.c.h.b16 %v1224
        %v1925 = vunpack.c.l.b16 %v1225
        %v1926 = vunpack.c.h.b16 %v1225
        %v1927 = vunpack.c.l.b16 %v1226
        %v1928 = vunpack.c.h.b16 %v1226
        %v1929 = vunpack.c.l.b16 %v1227
        %v1930 = vunpack.c.h.b16 %v1227
        %v1931 = vunpack.c.l.b16 %v1228
        %v1932 = vunpack.c.h.b16 %v1228
        %v1933 = vunpack.c.l.b16 %v1229
        %v1934 = vunpack.c.h.b16 %v1229
        %v1935 = vunpack.c.l.b16 %v1230
        %v1936 = vunpack.c.h.b16 %v1230
        %v1937 = vunpack.c.l.b16 %v1231
        %v1938 = vunpack.c.h.b16 %v1231
        %v1939 = vunpack.c.l.b16 %v1232
        %v1940 = vunpack.c.h.b16 %v1232
        %v1941 = vunpack.c.l.b16 %v1233
        %v1942 = vunpack.c.h.b16 %v1233
        %v1943 = vunpack.c.l.b16 %v1234
        %v1944 = vunpack.c.h.b16 %v1234
        %v1945 = vunpack.c.l.b16 %v1235
        %v1946 = vunpack.c.h.b16 %v1235
        %v1947 = vunpack.c.l.b16 %v1236
        %v1948 = vunpack.c.h.b16 %v1236
        %v1949 = vunpack.c.l.b16 %v1237
        %v1950 = vunpack.c.h.b16 %v1237
        %v1951 = vunpack.c.l.b16 %v1238
        %v1952 = vunpack.c.h.b16 %v1238
        %v1953 = vunpack.c.l.b16 %v1239
        %v1954 = vunpack.c.h.b16 %v1239
        %v1955 = vunpack.c.l.b16 %v1240
        %v1956 = vunpack.c.h.b16 %v1240
        %v1957 = vunpack.c.l.b16 %v1241
        %v1958 = vunpack.c.h.b16 %v1241
        %v1959 = vunpack.c.l.b16 %v1242
        %v1960 = vunpack.c.h.b16 %v1242
        %v1961 = vunpack.c.l.b16 %v1243
        %v1962 = vunpack.c.h.b16 %v1243
        %v1963 = vunpack.c.l.b16 %v1244
        %v1964 = vunpack.c.h.b16 %v1244
        %v1965 = vunpack.c.l.b16 %v1245
        %v1966 = vunpack.c.h.b16 %v1245
        %v1967 = vunpack.c.l.b16 %v1246
        %v1968 = vunpack.c.h.b16 %v1246
        %v1969 = vunpack.c.l.b16 %v1247
        %v1970 = vunpack.c.h.b16 %v1247
        %v1971 = vunpack.c.l.b16 %v1248
        %v1972 = vunpack.c.h.b16 %v1248
        %v1973 = vunpack.c.l.b16 %v1249
        %v1974 = vunpack.c.h.b16 %v1249
        %v1975 = vunpack.c.l.b16 %v1250
        %v1976 = vunpack.c.h.b16 %v1250
        %v1977 = vunpack.c.l.b16 %v1251
        %v1978 = vunpack.c.h.b16 %v1251
        %v1979 = vunpack.c.l.b16 %v1252
        %v1980 = vunpack.c.h.b16 %v1252
        %v1981 = vunpack.c.l.b16 %v1253
        %v1982 = vunpack.c.h.b16 %v1253
        %v1983 = vunpack.c.l.b16 %v1254
        %v1984 = vunpack.c.h.b16 %v1254
        %v1985 = vunpack.c.l.b16 %v1255
        %v1986 = vunpack.c.h.b16 %v1255
        %v1987 = vunpack.c.l.b16 %v1256
        %v1988 = vunpack.c.h.b16 %v1256
        %v1989 = vunpack.c.l.b16 %v1257
        %v1990 = vunpack.c.h.b16 %v1257
        %v1991 = vunpack.c.l.b16 %v1258
        %v1992 = vunpack.c.h.b16 %v1258
        %v1993 = vunpack.c.l.b16 %v1259
        %v1994 = vunpack.c.h.b16 %v1259
        %v1995 = vunpack.c.l.b16 %v1260
        %v1996 = vunpack.c.h.b16 %v1260
        %v1997 = vunpack.c.l.b16 %v1261
        %v1998 = vunpack.c.h.b16 %v1261
        %v1999 = vunpack.c.l.b16 %v1262
        %v2000 = vunpack.c.h.b16 %v1262
        %v2001 = vunpack.c.l.b16 %v1263
        %v2002 = vunpack.c.h.b16 %v1263
        %v2003 = vunpack.c.l.b16 %v1264
        %v2004 = vunpack.c.h.b16 %v1264
        %v2005 = vunpack.c.l.b16 %v1265
        %v2006 = vunpack.c.h.b16 %v1265
        %v2007 = vunpack.c.l.b16 %v1266
        %v2008 = vunpack.c.h.b16 %v1266
        %v2009 = vunpack.c.l.b16 %v1267
        %v2010 = vunpack.c.h.b16 %v1267
        %v2011 = vunpack.c.l.b16 %v1268
        %v2012 = vunpack.c.h.b16 %v1268
        %v2013 = vunpack.c.l.b16 %v1269
        %v2014 = vunpack.c.h.b16 %v1269
        %v2015 = vunpack.c.l.b16 %v1270
        %v2016 = vunpack.c.h.b16 %v1270
        %v2017 = vunpack.c.l.b16 %v1271
        %v2018 = vunpack.c.h.b16 %v1271
        %v2019 = vunpack.c.l.b16 %v1272
        %v2020 = vunpack.c.h.b16 %v1272
        %v2021 = vunpack.c.l.b16 %v1273
        %v2022 = vunpack.c.h.b16 %v1273
        %v2023 = vunpack.c.l.b16 %v1274
        %v2024 = vunpack.c.h.b16 %v1274
        %v2025 = vunpack.c.l.b16 %v1275
        %v2026 = vunpack.c.h.b16 %v1275
        %v2027 = vunpack.c.l.b16 %v1276
        %v2028 = vunpack.c.h.b16 %v1276
        %v2029 = vunpack.c.l.b16 %v1277
        %v2030 = vunpack.c.h.b16 %v1277
        %v2031 = vunpack.c.l.b16 %v1278
        %v2032 = vunpack.c.h.b16 %v1278
        %v2033 = vunpack.c.l.b16 %v1279
        %v2034 = vunpack.c.h.b16 %v1279
        %v2035 = vunpack.c.l.b16 %v1280
        %v2036 = vunpack.c.h.b16 %v1280
        %v2037 = vunpack.c.l.b16 %v1281
        %v2038 = vunpack.c.h.b16 %v1281
        %v2039 = vunpack.c.l.b16 %v1282
        %v2040 = vunpack.c.h.b16 %v1282
        %v2041 = vunpack.c.l.b16 %v1283
        %v2042 = vunpack.c.h.b16 %v1283
        %v2043 = vunpack.c.l.b16 %v1284
        %v2044 = vunpack.c.h.b16 %v1284
        %v2045 = vunpack.c.l.b16 %v1285
        %v2046 = vunpack.c.h.b16 %v1285
        %v2047 = vunpack.c.l.b16 %v1286
        %v2048 = vunpack.c.h.b16 %v1286
        %v2049 = vunpack.c.l.b16 %v1287
        %v2050 = vunpack.c.h.b16 %v1287
        %v2051 = vunpack.c.l.b16 %v1288
        %v2052 = vunpack.c.h.b16 %v1288
        %v2053 = vunpack.c.l.b16 %v1289
        %v2054 = vunpack.c.h.b16 %v1289
        %v2055 = vunpack.c.l.b16 %v1290
        %v2056 = vunpack.c.h.b16 %v1290
        %v2057 = vunpack.c.l.b16 %v1291
        %v2058 = vunpack.c.h.b16 %v1291
        %v2059 = vunpack.c.l.b16 %v1292
        %v2060 = vunpack.c.h.b16 %v1292
        %v2061 = vunpack.c.l.b16 %v1293
        %v2062 = vunpack.c.h.b16 %v1293
        %v2063 = vunpack.c.l.b16 %v1294
        %v2064 = vunpack.c.h.b16 %v1294
        %v2065 = vunpack.c.l.b16 %v1295
        %v2066 = vunpack.c.h.b16 %v1295
        %v2067 = vunpack.c.l.b16 %v1296
        %v2068 = vunpack.c.h.b16 %v1296
        %v2069 = vunpack.c.l.b16 %v1297
        %v2070 = vunpack.c.h.b16 %v1297
        %v2071 = vunpack.c.l.b16 %v1298
        %v2072 = vunpack.c.h.b16 %v1298
        %v2073 = vunpack.c.l.b16 %v1299
        %v2074 = vunpack.c.h.b16 %v1299
        %v2075 = vunpack.c.l.b16 %v1300
        %v2076 = vunpack.c.h.b16 %v1300
        %v2077 = vunpack.c.l.b16 %v1301
        %v2078 = vunpack.c.h.b16 %v1301
        %v2079 = vunpack.c.l.b16 %v1302
        %v2080 = vunpack.c.h.b16 %v1302
        %v2081 = vunpack.c.l.b16 %v1303
        %v2082 = vunpack.c.h.b16 %v1303
        %v2083 = vunpack.c.l.b16 %v1304
        %v2084 = vunpack.c.h.b16 %v1304
        %v2085 = vunpack.c.l.b16 %v1305
        %v2086 = vunpack.c.h.b16 %v1305
        %v2087 = vunpack.c.l.b16 %v1306
        %v2088 = vunpack.c.h.b16 %v1306
        %v2089 = vunpack.c.l.b16 %v1307
        %v2090 = vunpack.c.h.b16 %v1307
        %v2091 = vunpack.c.l.b16 %v1308
        %v2092 = vunpack.c.h.b16 %v1308
        %v2093 = vunpack.c.l.b16 %v1309
        %v2094 = vunpack.c.h.b16 %v1309
        %v2095 = vunpack.c.l.b16 %v1310
        %v2096 = vunpack.c.h.b16 %v1310
        %v2097 = vunpack.c.l.b16 %v1311
        %v2098 = vunpack.c.h.b16 %v1311
        %v2099 = vunpack.c.l.b16 %v1312
        %v2100 = vunpack.c.h.b16 %v1312
        %v2101 = vunpack.c.l.b16 %v1313
        %v2102 = vunpack.c.h.b16 %v1313
        %v2103 = vunpack.c.l.b16 %v1314
        %v2104 = vunpack.c.h.b16 %v1314
        %v2105 = vunpack.c.l.b16 %v1315
        %v2106 = vunpack.c.h.b16 %v1315
        %v2107 = vunpack.c.l.b16 %v1316
        %v2108 = vunpack.c.h.b16 %v1316
        %v2109 = vunpack.c.l.b16 %v1317
        %v2110 = vunpack.c.h.b16 %v1317
        %v2111 = vunpack.c.l.b16 %v1318
        %v2112 = vunpack.c.h.b16 %v1318
        %v2113 = vunpack.c.l.b16 %v1319
        %v2114 = vunpack.c.h.b16 %v1319
        %v2115 = vunpack.c.l.b16 %v1320
        %v2116 = vunpack.c.h.b16 %v1320
        %v2117 = vunpack.c.l.b16 %v1321
        %v2118 = vunpack.c.h.b16 %v1321
        %v2119 = vunpack.c.l.b16 %v1322
        %v2120 = vunpack.c.h.b16 %v1322
        %v2121 = vunpack.c.l.b16 %v1323
        %v2122 = vunpack.c.h.b16 %v1323
        %v2123 = vunpack.c.l.b16 %v1324
        %v2124 = vunpack.c.h.b16 %v1324
        %v2125 = vunpack.c.l.b16 %v1325
        %v2126 = vunpack.c.h.b16 %v1325
        %v2127 = vunpack.c.l.b16 %v1326
        %v2128 = vunpack.c.h.b16 %v1326
        %v2129 = vunpack.c.l.b16 %v1327
        %v2130 = vunpack.c.h.b16 %v1327
        %v2131 = vunpack.c.l.b16 %v1328
        %v2132 = vunpack.c.h.b16 %v1328
        %v2133 = vunpack.c.l.b16 %v1329
        %v2134 = vunpack.c.h.b16 %v1329
        %v2135 = vunpack.c.l.b16 %v1330
        %v2136 = vunpack.c.h.b16 %v1330
        %v2137 = vunpack.c.l.b16 %v1331
        %v2138 = vunpack.c.h.b16 %v1331
        %v2139 = vunpack.c.l.b16 %v1332
        %v2140 = vunpack.c.h.b16 %v1332
        %v2141 = vunpack.c.l.b16 %v1333
        %v2142 = vunpack.c.h.b16 %v1333
        %v2143 = vunpack.c.l.b16 %v1334
        %v2144 = vunpack.c.h.b16 %v1334
        %v2145 = vpack.c.b16 %v1641, %v1633
        %v2146 = vpack.c.b16 %v1642, %v1634
        %v2147 = vpack.c.b16 %v1643, %v1635
        %v2148 = vpack.c.b16 %v1644, %v1636
        %v2149 = vpack.c.b16 %v1645, %v1637
        %v2150 = vpack.c.b16 %v1646, %v1638
        %v2151 = vpack.c.b16 %v1647, %v1639
        %v2152 = vpack.c.b16 %v1648, %v1640
        %v2153 = vpack.c.b16 %v1657, %v1649
        %v2154 = vpack.c.b16 %v1658, %v1650
        %v2155 = vpack.c.b16 %v1659, %v1651
        %v2156 = vpack.c.b16 %v1660, %v1652
        %v2157 = vpack.c.b16 %v1661, %v1653
        %v2158 = vpack.c.b16 %v1662, %v1654
        %v2159 = vpack.c.b16 %v1663, %v1655
        %v2160 = vpack.c.b16 %v1664, %v1656
        %v2161 = vpack.c.b16 %v1673, %v1665
        %v2162 = vpack.c.b16 %v1674, %v1666
        %v2163 = vpack.c.b16 %v1675, %v1667
        %v2164 = vpack.c.b16 %v1676, %v1668
        %v2165 = vpack.c.b16 %v1677, %v1669
        %v2166 = vpack.c.b16 %v1678, %v1670
        %v2167 = vpack.c.b16 %v1679, %v1671
        %v2168 = vpack.c.b16 %v1680, %v1672
        %v2169 = vpack.c.b16 %v1689, %v1681
        %v2170 = vpack.c.b16 %v1690, %v1682
        %v2171 = vpack.c.b16 %v1691, %v1683
        %v2172 = vpack.c.b16 %v1692, %v1684
        %v2173 = vpack.c.b16 %v1693, %v1685
        %v2174 = vpack.c.b16 %v1694, %v1686
        %v2175 = vpack.c.b16 %v1695, %v1687
        %v2176 = vpack.c.b16 %v1696, %v1688
        %v2177 = vpack.c.b16 %v1705, %v1697
        %v2178 = vpack.c.b16 %v1706, %v1698
        %v2179 = vpack.c.b16 %v1707, %v1699
        %v2180 = vpack.c.b16 %v1708, %v1700
        %v2181 = vpack.c.b16 %v1709, %v1701
        %v2182 = vpack.c.b16 %v1710, %v1702
        %v2183 = vpack.c.b16 %v1711, %v1703
        %v2184 = vpack.c.b16 %v1712, %v1704
        %v2185 = vpack.c.b16 %v1721, %v1713
        %v2186 = vpack.c.b16 %v1722, %v1714
        %v2187 = vpack.c.b16 %v1723, %v1715
        %v2188 = vpack.c.b16 %v1724, %v1716
        %v2189 = vpack.c.b16 %v1725, %v1717
        %v2190 = vpack.c.b16 %v1726, %v1718
        %v2191 = vpack.c.b16 %v1727, %v1719
        %v2192 = vpack.c.b16 %v1728, %v1720
        %v2193 = vpack.c.b16 %v1737, %v1729
        %v2194 = vpack.c.b16 %v1738, %v1730
        %v2195 = vpack.c.b16 %v1739, %v1731
        %v2196 = vpack.c.b16 %v1740, %v1732
        %v2197 = vpack.c.b16 %v1741, %v1733
        %v2198 = vpack.c.b16 %v1742, %v1734
        %v2199 = vpack.c.b16 %v1743, %v1735
        %v2200 = vpack.c.b16 %v1744, %v1736
        %v2201 = vpack.c.b16 %v1753, %v1745
        %v2202 = vpack.c.b16 %v1754, %v1746
        %v2203 = vpack.c.b16 %v1755, %v1747
        %v2204 = vpack.c.b16 %v1756, %v1748
        %v2205 = vpack.c.b16 %v1757, %v1749
        %v2206 = vpack.c.b16 %v1758, %v1750
        %v2207 = vpack.c.b16 %v1759, %v1751
        %v2208 = vpack.c.b16 %v1760, %v1752
        %v2209 = vpack.c.b16 %v1769, %v1761
        %v2210 = vpack.c.b16 %v1770, %v1762
        %v2211 = vpack.c.b16 %v1771, %v1763
        %v2212 = vpack.c.b16 %v1772, %v1764
        %v2213 = vpack.c.b16 %v1773, %v1765
        %v2214 = vpack.c.b16 %v1774, %v1766
        %v2215 = vpack.c.b16 %v1775, %v1767
        %v2216 = vpack.c.b16 %v1776, %v1768
        %v2217 = vpack.c.b16 %v1785, %v1777
        %v2218 = vpack.c.b16 %v1786, %v1778
        %v2219 = vpack.c.b16 %v1787, %v1779
        %v2220 = vpack.c.b16 %v1788, %v1780
        %v2221 = vpack.c.b16 %v1789, %v1781
        %v2222 = vpack.c.b16 %v1790, %v1782
        %v2223 = vpack.c.b16 %v1791, %v1783
        %v2224 = vpack.c.b16 %v1792, %v1784
        %v2225 = vpack.c.b16 %v1801, %v1793
        %v2226 = vpack.c.b16 %v1802, %v1794
        %v2227 = vpack.c.b16 %v1803, %v1795
        %v2228 = vpack.c.b16 %v1804, %v1796
        %v2229 = vpack.c.b16 %v1805, %v1797
        %v2230 = vpack.c.b16 %v1806, %v1798
        %v2231 = vpack.c.b16 %v1807, %v1799
        %v2232 = vpack.c.b16 %v1808, %v1800
        %v2233 = vpack.c.b16 %v1817, %v1809
        %v2234 = vpack.c.b16 %v1818, %v1810
        %v2235 = vpack.c.b16 %v1819, %v1811
        %v2236 = vpack.c.b16 %v1820, %v1812
        %v2237 = vpack.c.b16 %v1821, %v1813
        %v2238 = vpack.c.b16 %v1822, %v1814
        %v2239 = vpack.c.b16 %v1823, %v1815
        %v2240 = vpack.c.b16 %v1824, %v1816
        %v2241 = vpack.c.b16 %v1833, %v1825
        %v2242 = vpack.c.b16 %v1834, %v1826
        %v2243 = vpack.c.b16 %v1835, %v1827
        %v2244 = vpack.c.b16 %v1836, %v1828
        %v2245 = vpack.c.b16 %v1837, %v1829
        %v2246 = vpack.c.b16 %v1838, %v1830
        %v2247 = vpack.c.b16 %v1839, %v1831
        %v2248 = vpack.c.b16 %v1840, %v1832
        %v2249 = vpack.c.b16 %v1849, %v1841
        %v2250 = vpack.c.b16 %v1850, %v1842
        %v2251 = vpack.c.b16 %v1851, %v1843
        %v2252 = vpack.c.b16 %v1852, %v1844
        %v2253 = vpack.c.b16 %v1853, %v1845
        %v2254 = vpack.c.b16 %v1854, %v1846
        %v2255 = vpack.c.b16 %v1855, %v1847
        %v2256 = vpack.c.b16 %v1856, %v1848
        %v2257 = vpack.c.b16 %v1865, %v1857
        %v2258 = vpack.c.b16 %v1866, %v1858
        %v2259 = vpack.c.b16 %v1867, %v1859
        %v2260 = vpack.c.b16 %v1868, %v1860
        %v2261 = vpack.c.b16 %v1869, %v1861
        %v2262 = vpack.c.b16 %v1870, %v1862
        %v2263 = vpack.c.b16 %v1871, %v1863
        %v2264 = vpack.c.b16 %v1872, %v1864
        %v2265 = vpack.c.b16 %v1881, %v1873
        %v2266 = vpack.c.b16 %v1882, %v1874
        %v2267 = vpack.c.b16 %v1883, %v1875
        %v2268 = vpack.c.b16 %v1884, %v1876
        %v2269 = vpack.c.b16 %v1885, %v1877
        %v2270 = vpack.c.b16 %v1886, %v1878
        %v2271 = vpack.c.b16 %v1887, %v1879
        %v2272 = vpack.c.b16 %v1888, %v1880
        %v2273 = vpack.c.b16 %v1897, %v1889
        %v2274 = vpack.c.b16 %v1898, %v1890
        %v2275 = vpack.c.b16 %v1899, %v1891
        %v2276 = vpack.c.b16 %v1900, %v1892
        %v2277 = vpack.c.b16 %v1901, %v1893
        %v2278 = vpack.c.b16 %v1902, %v1894
        %v2279 = vpack.c.b16 %v1903, %v1895
        %v2280 = vpack.c.b16 %v1904, %v1896
        %v2281 = vpack.c.b16 %v1913, %v1905
        %v2282 = vpack.c.b16 %v1914, %v1906
        %v2283 = vpack.c.b16 %v1915, %v1907
        %v2284 = vpack.c.b16 %v1916, %v1908
        %v2285 = vpack.c.b16 %v1917, %v1909
        %v2286 = vpack.c.b16 %v1918, %v1910
        %v2287 = vpack.c.b16 %v1919, %v1911
        %v2288 = vpack.c.b16 %v1920, %v1912
        %v2289 = vpack.c.b16 %v1929, %v1921
        %v2290 = vpack.c.b16 %v1930, %v1922
        %v2291 = vpack.c.b16 %v1931, %v1923
        %v2292 = vpack.c.b16 %v1932, %v1924
        %v2293 = vpack.c.b16 %v1933, %v1925
        %v2294 = vpack.c.b16 %v1934, %v1926
        %v2295 = vpack.c.b16 %v1935, %v1927
        %v2296 = vpack.c.b16 %v1936, %v1928
        %v2297 = vpack.c.b16 %v1945, %v1937
        %v2298 = vpack.c.b16 %v1946, %v1938
        %v2299 = vpack.c.b16 %v1947, %v1939
        %v2300 = vpack.c.b16 %v1948, %v1940
        %v2301 = vpack.c.b16 %v1949, %v1941
        %v2302 = vpack.c.b16 %v1950, %v1942
        %v2303 = vpack.c.b16 %v1951, %v1943
        %v2304 = vpack.c.b16 %v1952, %v1944
        %v2305 = vpack.c.b16 %v1961, %v1953
        %v2306 = vpack.c.b16 %v1962, %v1954
        %v2307 = vpack.c.b16 %v1963, %v1955
        %v2308 = vpack.c.b16 %v1964, %v1956
        %v2309 = vpack.c.b16 %v1965, %v1957
        %v2310 = vpack.c.b16 %v1966, %v1958
        %v2311 = vpack.c.b16 %v1967, %v1959
        %v2312 = vpack.c.b16 %v1968, %v1960
        %v2313 = vpack.c.b16 %v1977, %v1969
        %v2314 = vpack.c.b16 %v1978, %v1970
        %v2315 = vpack.c.b16 %v1979, %v1971
        %v2316 = vpack.c.b16 %v1980, %v1972
        %v2317 = vpack.c.b16 %v1981, %v1973
        %v2318 = vpack.c.b16 %v1982, %v1974
        %v2319 = vpack.c.b16 %v1983, %v1975
        %v2320 = vpack.c.b16 %v1984, %v1976
        %v2321 = vpack.c.b16 %v1993, %v1985
        %v2322 = vpack.c.b16 %v1994, %v1986
        %v2323 = vpack.c.b16 %v1995, %v1987
        %v2324 = vpack.c.b16 %v1996, %v1988
        %v2325 = vpack.c.b16 %v1997, %v1989
        %v2326 = vpack.c.b16 %v1998, %v1990
        %v2327 = vpack.c.b16 %v1999, %v1991
        %v2328 = vpack.c.b16 %v2000, %v1992
        %v2329 = vpack.c.b16 %v2009, %v2001
        %v2330 = vpack.c.b16 %v2010, %v2002
        %v2331 = vpack.c.b16 %v2011, %v2003
        %v2332 = vpack.c.b16 %v2012, %v2004
        %v2333 = vpack.c.b16 %v2013, %v2005
        %v2334 = vpack.c.b16 %v2014, %v2006
        %v2335 = vpack.c.b16 %v2015, %v2007
        %v2336 = vpack.c.b16 %v2016, %v2008
        %v2337 = vpack.c.b16 %v2025, %v2017
        %v2338 = vpack.c.b16 %v2026, %v2018
        %v2339 = vpack.c.b16 %v2027, %v2019
        %v2340 = vpack.c.b16 %v2028, %v2020
        %v2341 = vpack.c.b16 %v2029, %v2021
        %v2342 = vpack.c.b16 %v2030, %v2022
        %v2343 = vpack.c.b16 %v2031, %v2023
        %v2344 = vpack.c.b16 %v2032, %v2024
        %v2345 = vpack.c.b16 %v2041, %v2033
        %v2346 = vpack.c.b16 %v2042, %v2034
        %v2347 = vpack.c.b16 %v2043, %v2035
        %v2348 = vpack.c.b16 %v2044, %v2036
        %v2349 = vpack.c.b16 %v2045, %v2037
        %v2350 = vpack.c.b16 %v2046, %v2038
        %v2351 = vpack.c.b16 %v2047, %v2039
        %v2352 = vpack.c.b16 %v2048, %v2040
        %v2353 = vpack.c.b16 %v2057, %v2049
        %v2354 = vpack.c.b16 %v2058, %v2050
        %v2355 = vpack.c.b16 %v2059, %v2051
        %v2356 = vpack.c.b16 %v2060, %v2052
        %v2357 = vpack.c.b16 %v2061, %v2053
        %v2358 = vpack.c.b16 %v2062, %v2054
        %v2359 = vpack.c.b16 %v2063, %v2055
        %v2360 = vpack.c.b16 %v2064, %v2056
        %v2361 = vpack.c.b16 %v2073, %v2065
        %v2362 = vpack.c.b16 %v2074, %v2066
        %v2363 = vpack.c.b16 %v2075, %v2067
        %v2364 = vpack.c.b16 %v2076, %v2068
        %v2365 = vpack.c.b16 %v2077, %v2069
        %v2366 = vpack.c.b16 %v2078, %v2070
        %v2367 = vpack.c.b16 %v2079, %v2071
        %v2368 = vpack.c.b16 %v2080, %v2072
        %v2369 = vpack.c.b16 %v2089, %v2081
        %v2370 = vpack.c.b16 %v2090, %v2082
        %v2371 = vpack.c.b16 %v2091, %v2083
        %v2372 = vpack.c.b16 %v2092, %v2084
        %v2373 = vpack.c.b16 %v2093, %v2085
        %v2374 = vpack.c.b16 %v2094, %v2086
        %v2375 = vpack.c.b16 %v2095, %v2087
        %v2376 = vpack.c.b16 %v2096, %v2088
        %v2377 = vpack.c.b16 %v2105, %v2097
        %v2378 = vpack.c.b16 %v2106, %v2098
        %v2379 = vpack.c.b16 %v2107, %v2099
        %v2380 = vpack.c.b16 %v2108, %v2100
        %v2381 = vpack.c.b16 %v2109, %v2101
        %v2382 = vpack.c.b16 %v2110, %v2102
        %v2383 = vpack.c.b16 %v2111, %v2103
        %v2384 = vpack.c.b16 %v2112, %v2104
        %v2385 = vpack.c.b16 %v2121, %v2113
        %v2386 = vpack.c.b16 %v2122, %v2114
        %v2387 = vpack.c.b16 %v2123, %v2115
        %v2388 = vpack.c.b16 %v2124, %v2116
        %v2389 = vpack.c.b16 %v2125, %v2117
        %v2390 = vpack.c.b16 %v2126, %v2118
        %v2391 = vpack.c.b16 %v2127, %v2119
        %v2392 = vpack.c.b16 %v2128, %v2120
        %v2393 = vpack.c.b16 %v2137, %v2129
        %v2394 = vpack.c.b16 %v2138, %v2130
        %v2395 = vpack.c.b16 %v2139, %v2131
        %v2396 = vpack.c.b16 %v2140, %v2132
        %v2397 = vpack.c.b16 %v2141, %v2133
        %v2398 = vpack.c.b16 %v2142, %v2134
        %v2399 = vpack.c.b16 %v2143, %v2135
        %v2400 = vpack.c.b16 %v2144, %v2136
        %2657 = vmatprep.subr.bf16.mxu0 %v2202
        %2658 = vmatpush1.bf16.msra.mxu0 %v2201
        %2659 = vmatprep.subr.bf16.mxu0 %v2194
        %2660 = vmatpush1.bf16.msra.mxu0 %v2193
        %2661 = vmatprep.subr.bf16.mxu0 %v2186
        %2662 = vmatpush1.bf16.msra.mxu0 %v2185
        %2663 = vmatprep.subr.bf16.mxu0 %v2178
        %2664 = vmatpush1.bf16.msra.mxu0 %v2177
        %2665 = vmatprep.subr.bf16.mxu0 %v2170
        %2666 = vmatpush1.bf16.msra.mxu0 %v2169
        %2667 = vmatprep.subr.bf16.mxu0 %v2162
        %2668 = vmatpush1.bf16.msra.mxu0 %v2161
        %2669 = vmatprep.subr.bf16.mxu0 %v2154
        %2670 = vmatpush1.bf16.msra.mxu0 %v2153
        %2671 = vmatprep.subr.bf16.mxu0 %v2146
        %2672 = vmatpush1.bf16.msra.mxu0 %v2145
        %2673 = vmatprep.subr.bf16.mxu0 %v2266
        %2674 = vmatpush2.bf16.msra.mxu0 %v2265
        %2675 = vmatprep.subr.bf16.mxu0 %v2258
        %2676 = vmatpush2.bf16.msra.mxu0 %v2257
        %2677 = vmatprep.subr.bf16.mxu0 %v2250
        %2678 = vmatpush2.bf16.msra.mxu0 %v2249
        %2679 = vmatprep.subr.bf16.mxu0 %v2242
        %2680 = vmatpush2.bf16.msra.mxu0 %v2241
        %2681 = vmatprep.subr.bf16.mxu0 %v2234
        %2682 = vmatpush2.bf16.msra.mxu0 %v2233
        %2683 = vmatprep.subr.bf16.mxu0 %v2226
        %2684 = vmatpush2.bf16.msra.mxu0 %v2225
        %2685 = vmatprep.subr.bf16.mxu0 %v2218
        %2686 = vmatpush2.bf16.msra.mxu0 %v2217
        %2687 = vmatprep.subr.bf16.mxu0 %v2210
        %2688 = vmatpush2.bf16.msra.mxu0 %v2209
        %2689 = vmatprep.mubr.bf16.mxu0 %v1076
        %2690 = vmatmul.mubr.bf16.gmra.mxu0 %v1075
        %v2691 = vpop.f32.mrf.mxu0
        %v2692 = vadd.f32 %v1340, %v2691
        %v2693 = vpop.f32.mrf.mxu0
        %v2694 = vadd.f32 %v1344, %v2693
        %v2695 = vpop.f32.mrf.mxu0
        %v2696 = vpop.f32.mrf.mxu0
        %2697 = vdwg.mxu0
        %2698 = vmatprep.subr.bf16.mxu0 %v2330
        %2699 = vmatpush1.bf16.msra.mxu0 %v2329
        %2700 = vmatprep.subr.bf16.mxu0 %v2322
        %2701 = vmatpush1.bf16.msra.mxu0 %v2321
        %2702 = vmatprep.subr.bf16.mxu0 %v2314
        %2703 = vmatpush1.bf16.msra.mxu0 %v2313
        %2704 = vmatprep.subr.bf16.mxu0 %v2306
        %2705 = vmatpush1.bf16.msra.mxu0 %v2305
        %2706 = vmatprep.subr.bf16.mxu0 %v2298
        %2707 = vmatpush1.bf16.msra.mxu0 %v2297
        %2708 = vmatprep.subr.bf16.mxu0 %v2290
        %2709 = vmatpush1.bf16.msra.mxu0 %v2289
        %2710 = vmatprep.subr.bf16.mxu0 %v2282
        %2711 = vmatpush1.bf16.msra.mxu0 %v2281
        %2712 = vmatprep.subr.bf16.mxu0 %v2274
        %2713 = vmatpush1.bf16.msra.mxu0 %v2273
        %2714 = vmatprep.subr.bf16.mxu0 %v2394
        %2715 = vmatpush2.bf16.msra.mxu0 %v2393
        %2716 = vmatprep.subr.bf16.mxu0 %v2386
        %2717 = vmatpush2.bf16.msra.mxu0 %v2385
        %2718 = vmatprep.subr.bf16.mxu0 %v2378
        %2719 = vmatpush2.bf16.msra.mxu0 %v2377
        %2720 = vmatprep.subr.bf16.mxu0 %v2370
        %2721 = vmatpush2.bf16.msra.mxu0 %v2369
        %2722 = vmatprep.subr.bf16.mxu0 %v2362
        %2723 = vmatpush2.bf16.msra.mxu0 %v2361
        %2724 = vmatprep.subr.bf16.mxu0 %v2354
        %2725 = vmatpush2.bf16.msra.mxu0 %v2353
        %2726 = vmatprep.subr.bf16.mxu0 %v2346
        %2727 = vmatpush2.bf16.msra.mxu0 %v2345
        %2728 = vmatprep.subr.bf16.mxu0 %v2338
        %2729 = vmatpush2.bf16.msra.mxu0 %v2337
        %2730 = vmatprep.mubr.bf16.mxu0 %v1078
        %2731 = vmatmul.mubr.bf16.gmra.mxu0 %v1077
        %v2732 = vpop.f32.mrf.mxu0
        %v2733 = vadd.f32 %v2692, %v2732
        %v2734 = vpop.f32.mrf.mxu0
        %v2735 = vadd.f32 %v2694, %v2734
        %v2736 = vpop.f32.mrf.mxu0
        %v2737 = vpop.f32.mrf.mxu0
        %2738 = vdwg.mxu0
        %2739 = vmatprep.subr.bf16.mxu0 %v2204
        %2740 = vmatpush1.bf16.msra.mxu0 %v2203
        %2741 = vmatprep.subr.bf16.mxu0 %v2196
        %2742 = vmatpush1.bf16.msra.mxu0 %v2195
        %2743 = vmatprep.subr.bf16.mxu0 %v2188
        %2744 = vmatpush1.bf16.msra.mxu0 %v2187
        %2745 = vmatprep.subr.bf16.mxu0 %v2180
        %2746 = vmatpush1.bf16.msra.mxu0 %v2179
        %2747 = vmatprep.subr.bf16.mxu0 %v2172
        %2748 = vmatpush1.bf16.msra.mxu0 %v2171
        %2749 = vmatprep.subr.bf16.mxu0 %v2164
        %2750 = vmatpush1.bf16.msra.mxu0 %v2163
        %2751 = vmatprep.subr.bf16.mxu0 %v2156
        %2752 = vmatpush1.bf16.msra.mxu0 %v2155
        %2753 = vmatprep.subr.bf16.mxu0 %v2148
        %2754 = vmatpush1.bf16.msra.mxu0 %v2147
        %2755 = vmatprep.subr.bf16.mxu0 %v2268
        %2756 = vmatpush2.bf16.msra.mxu0 %v2267
        %2757 = vmatprep.subr.bf16.mxu0 %v2260
        %2758 = vmatpush2.bf16.msra.mxu0 %v2259
        %2759 = vmatprep.subr.bf16.mxu0 %v2252
        %2760 = vmatpush2.bf16.msra.mxu0 %v2251
        %2761 = vmatprep.subr.bf16.mxu0 %v2244
        %2762 = vmatpush2.bf16.msra.mxu0 %v2243
        %2763 = vmatprep.subr.bf16.mxu0 %v2236
        %2764 = vmatpush2.bf16.msra.mxu0 %v2235
        %2765 = vmatprep.subr.bf16.mxu0 %v2228
        %2766 = vmatpush2.bf16.msra.mxu0 %v2227
        %2767 = vmatprep.subr.bf16.mxu0 %v2220
        %2768 = vmatpush2.bf16.msra.mxu0 %v2219
        %2769 = vmatprep.subr.bf16.mxu0 %v2212
        %2770 = vmatpush2.bf16.msra.mxu0 %v2211
        %2771 = vmatprep.mubr.bf16.mxu0 %v1076
        %2772 = vmatmul.mubr.bf16.gmra.mxu0 %v1075
        %v2773 = vpop.f32.mrf.mxu0
        %v2774 = vadd.f32 %v1348, %v2773
        %v2775 = vpop.f32.mrf.mxu0
        %v2776 = vadd.f32 %v1352, %v2775
        %v2777 = vpop.f32.mrf.mxu0
        %v2778 = vpop.f32.mrf.mxu0
        %2779 = vdwg.mxu0
        %2780 = vmatprep.subr.bf16.mxu0 %v2332
        %2781 = vmatpush1.bf16.msra.mxu0 %v2331
        %2782 = vmatprep.subr.bf16.mxu0 %v2324
        %2783 = vmatpush1.bf16.msra.mxu0 %v2323
        %2784 = vmatprep.subr.bf16.mxu0 %v2316
        %2785 = vmatpush1.bf16.msra.mxu0 %v2315
        %2786 = vmatprep.subr.bf16.mxu0 %v2308
        %2787 = vmatpush1.bf16.msra.mxu0 %v2307
        %2788 = vmatprep.subr.bf16.mxu0 %v2300
        %2789 = vmatpush1.bf16.msra.mxu0 %v2299
        %2790 = vmatprep.subr.bf16.mxu0 %v2292
        %2791 = vmatpush1.bf16.msra.mxu0 %v2291
        %2792 = vmatprep.subr.bf16.mxu0 %v2284
        %2793 = vmatpush1.bf16.msra.mxu0 %v2283
        %2794 = vmatprep.subr.bf16.mxu0 %v2276
        %2795 = vmatpush1.bf16.msra.mxu0 %v2275
        %2796 = vmatprep.subr.bf16.mxu0 %v2396
        %2797 = vmatpush2.bf16.msra.mxu0 %v2395
        %2798 = vmatprep.subr.bf16.mxu0 %v2388
        %2799 = vmatpush2.bf16.msra.mxu0 %v2387
        %2800 = vmatprep.subr.bf16.mxu0 %v2380
        %2801 = vmatpush2.bf16.msra.mxu0 %v2379
        %2802 = vmatprep.subr.bf16.mxu0 %v2372
        %2803 = vmatpush2.bf16.msra.mxu0 %v2371
        %2804 = vmatprep.subr.bf16.mxu0 %v2364
        %2805 = vmatpush2.bf16.msra.mxu0 %v2363
        %2806 = vmatprep.subr.bf16.mxu0 %v2356
        %2807 = vmatpush2.bf16.msra.mxu0 %v2355
        %2808 = vmatprep.subr.bf16.mxu0 %v2348
        %2809 = vmatpush2.bf16.msra.mxu0 %v2347
        %2810 = vmatprep.subr.bf16.mxu0 %v2340
        %2811 = vmatpush2.bf16.msra.mxu0 %v2339
        %2812 = vmatprep.mubr.bf16.mxu0 %v1078
        %2813 = vmatmul.mubr.bf16.gmra.mxu0 %v1077
        %v2814 = vpop.f32.mrf.mxu0
        %v2815 = vadd.f32 %v2774, %v2814
        %v2816 = vpop.f32.mrf.mxu0
        %v2817 = vadd.f32 %v2776, %v2816
        %v2818 = vpop.f32.mrf.mxu0
        %v2819 = vpop.f32.mrf.mxu0
        %2820 = vdwg.mxu0
        %2821 = vmatprep.subr.bf16.mxu0 %v2206
        %2822 = vmatpush1.bf16.msra.mxu0 %v2205
        %2823 = vmatprep.subr.bf16.mxu0 %v2198
        %2824 = vmatpush1.bf16.msra.mxu0 %v2197
        %2825 = vmatprep.subr.bf16.mxu0 %v2190
        %2826 = vmatpush1.bf16.msra.mxu0 %v2189
        %2827 = vmatprep.subr.bf16.mxu0 %v2182
        %2828 = vmatpush1.bf16.msra.mxu0 %v2181
        %2829 = vmatprep.subr.bf16.mxu0 %v2174
        %2830 = vmatpush1.bf16.msra.mxu0 %v2173
        %2831 = vmatprep.subr.bf16.mxu0 %v2166
        %2832 = vmatpush1.bf16.msra.mxu0 %v2165
        %2833 = vmatprep.subr.bf16.mxu0 %v2158
        %2834 = vmatpush1.bf16.msra.mxu0 %v2157
        %2835 = vmatprep.subr.bf16.mxu0 %v2150
        %2836 = vmatpush1.bf16.msra.mxu0 %v2149
        %2837 = vmatprep.subr.bf16.mxu0 %v2270
        %2838 = vmatpush2.bf16.msra.mxu0 %v2269
        %2839 = vmatprep.subr.bf16.mxu0 %v2262
        %2840 = vmatpush2.bf16.msra.mxu0 %v2261
        %2841 = vmatprep.subr.bf16.mxu0 %v2254
        %2842 = vmatpush2.bf16.msra.mxu0 %v2253
        %2843 = vmatprep.subr.bf16.mxu0 %v2246
        %2844 = vmatpush2.bf16.msra.mxu0 %v2245
        %2845 = vmatprep.subr.bf16.mxu0 %v2238
        %2846 = vmatpush2.bf16.msra.mxu0 %v2237
        %2847 = vmatprep.subr.bf16.mxu0 %v2230
        %2848 = vmatpush2.bf16.msra.mxu0 %v2229
        %2849 = vmatprep.subr.bf16.mxu0 %v2222
        %2850 = vmatpush2.bf16.msra.mxu0 %v2221
        %2851 = vmatprep.subr.bf16.mxu0 %v2214
        %2852 = vmatpush2.bf16.msra.mxu0 %v2213
        %2853 = vmatprep.mubr.bf16.mxu0 %v1076
        %2854 = vmatmul.mubr.bf16.gmra.mxu0 %v1075
        %v2855 = vpop.f32.mrf.mxu0
        %v2856 = vadd.f32 %v1356, %v2855
        %v2857 = vpop.f32.mrf.mxu0
        %v2858 = vadd.f32 %v1360, %v2857
        %v2859 = vpop.f32.mrf.mxu0
        %v2860 = vpop.f32.mrf.mxu0
        %2861 = vdwg.mxu0
        %2862 = vmatprep.subr.bf16.mxu0 %v2334
        %2863 = vmatpush1.bf16.msra.mxu0 %v2333
        %2864 = vmatprep.subr.bf16.mxu0 %v2326
        %2865 = vmatpush1.bf16.msra.mxu0 %v2325
        %2866 = vmatprep.subr.bf16.mxu0 %v2318
        %2867 = vmatpush1.bf16.msra.mxu0 %v2317
        %2868 = vmatprep.subr.bf16.mxu0 %v2310
        %2869 = vmatpush1.bf16.msra.mxu0 %v2309
        %2870 = vmatprep.subr.bf16.mxu0 %v2302
        %2871 = vmatpush1.bf16.msra.mxu0 %v2301
        %2872 = vmatprep.subr.bf16.mxu0 %v2294
        %2873 = vmatpush1.bf16.msra.mxu0 %v2293
        %2874 = vmatprep.subr.bf16.mxu0 %v2286
        %2875 = vmatpush1.bf16.msra.mxu0 %v2285
        %2876 = vmatprep.subr.bf16.mxu0 %v2278
        %2877 = vmatpush1.bf16.msra.mxu0 %v2277
        %2878 = vmatprep.subr.bf16.mxu0 %v2398
        %2879 = vmatpush2.bf16.msra.mxu0 %v2397
        %2880 = vmatprep.subr.bf16.mxu0 %v2390
        %2881 = vmatpush2.bf16.msra.mxu0 %v2389
        %2882 = vmatprep.subr.bf16.mxu0 %v2382
        %2883 = vmatpush2.bf16.msra.mxu0 %v2381
        %2884 = vmatprep.subr.bf16.mxu0 %v2374
        %2885 = vmatpush2.bf16.msra.mxu0 %v2373
        %2886 = vmatprep.subr.bf16.mxu0 %v2366
        %2887 = vmatpush2.bf16.msra.mxu0 %v2365
        %2888 = vmatprep.subr.bf16.mxu0 %v2358
        %2889 = vmatpush2.bf16.msra.mxu0 %v2357
        %2890 = vmatprep.subr.bf16.mxu0 %v2350
        %2891 = vmatpush2.bf16.msra.mxu0 %v2349
        %2892 = vmatprep.subr.bf16.mxu0 %v2342
        %2893 = vmatpush2.bf16.msra.mxu0 %v2341
        %2894 = vmatprep.mubr.bf16.mxu0 %v1078
        %2895 = vmatmul.mubr.bf16.gmra.mxu0 %v1077
        %v2896 = vpop.f32.mrf.mxu0
        %v2897 = vadd.f32 %v2856, %v2896
        %v2898 = vpop.f32.mrf.mxu0
        %v2899 = vadd.f32 %v2858, %v2898
        %v2900 = vpop.f32.mrf.mxu0
        %v2901 = vpop.f32.mrf.mxu0
        %2902 = vdwg.mxu0
        %2903 = vmatprep.subr.bf16.mxu0 %v2208
        %2904 = vmatpush1.bf16.msra.mxu0 %v2207
        %2905 = vmatprep.subr.bf16.mxu0 %v2200
        %2906 = vmatpush1.bf16.msra.mxu0 %v2199
        %2907 = vmatprep.subr.bf16.mxu0 %v2192
        %2908 = vmatpush1.bf16.msra.mxu0 %v2191
        %2909 = vmatprep.subr.bf16.mxu0 %v2184
        %2910 = vmatpush1.bf16.msra.mxu0 %v2183
        %2911 = vmatprep.subr.bf16.mxu0 %v2176
        %2912 = vmatpush1.bf16.msra.mxu0 %v2175
        %2913 = vmatprep.subr.bf16.mxu0 %v2168
        %2914 = vmatpush1.bf16.msra.mxu0 %v2167
        %2915 = vmatprep.subr.bf16.mxu0 %v2160
        %2916 = vmatpush1.bf16.msra.mxu0 %v2159
        %2917 = vmatprep.subr.bf16.mxu0 %v2152
        %2918 = vmatpush1.bf16.msra.mxu0 %v2151
        %2919 = vmatprep.subr.bf16.mxu0 %v2272
        %2920 = vmatpush2.bf16.msra.mxu0 %v2271
        %2921 = vmatprep.subr.bf16.mxu0 %v2264
        %2922 = vmatpush2.bf16.msra.mxu0 %v2263
        %2923 = vmatprep.subr.bf16.mxu0 %v2256
        %2924 = vmatpush2.bf16.msra.mxu0 %v2255
        %2925 = vmatprep.subr.bf16.mxu0 %v2248
        %2926 = vmatpush2.bf16.msra.mxu0 %v2247
        %2927 = vmatprep.subr.bf16.mxu0 %v2240
        %2928 = vmatpush2.bf16.msra.mxu0 %v2239
        %2929 = vmatprep.subr.bf16.mxu0 %v2232
        %2930 = vmatpush2.bf16.msra.mxu0 %v2231
        %2931 = vmatprep.subr.bf16.mxu0 %v2224
        %2932 = vmatpush2.bf16.msra.mxu0 %v2223
        %2933 = vmatprep.subr.bf16.mxu0 %v2216
        %2934 = vmatpush2.bf16.msra.mxu0 %v2215
        %2935 = vmatprep.mubr.bf16.mxu0 %v1076
        %2936 = vmatmul.mubr.bf16.gmra.mxu0 %v1075
        %v2937 = vpop.f32.mrf.mxu0
        %v2938 = vadd.f32 %v1364, %v2937
        %v2939 = vpop.f32.mrf.mxu0
        %v2940 = vadd.f32 %v1368, %v2939
        %v2941 = vpop.f32.mrf.mxu0
        %v2942 = vpop.f32.mrf.mxu0
        %2943 = vdwg.mxu0
        %2944 = vmatprep.subr.bf16.mxu0 %v2336
        %2945 = vmatpush1.bf16.msra.mxu0 %v2335
        %2946 = vmatprep.subr.bf16.mxu0 %v2328
        %2947 = vmatpush1.bf16.msra.mxu0 %v2327
        %2948 = vmatprep.subr.bf16.mxu0 %v2320
        %2949 = vmatpush1.bf16.msra.mxu0 %v2319
        %2950 = vmatprep.subr.bf16.mxu0 %v2312
        %2951 = vmatpush1.bf16.msra.mxu0 %v2311
        %2952 = vmatprep.subr.bf16.mxu0 %v2304
        %2953 = vmatpush1.bf16.msra.mxu0 %v2303
        %2954 = vmatprep.subr.bf16.mxu0 %v2296
        %2955 = vmatpush1.bf16.msra.mxu0 %v2295
        %2956 = vmatprep.subr.bf16.mxu0 %v2288
        %2957 = vmatpush1.bf16.msra.mxu0 %v2287
        %2958 = vmatprep.subr.bf16.mxu0 %v2280
        %2959 = vmatpush1.bf16.msra.mxu0 %v2279
        %2960 = vmatprep.subr.bf16.mxu0 %v2400
        %2961 = vmatpush2.bf16.msra.mxu0 %v2399
        %2962 = vmatprep.subr.bf16.mxu0 %v2392
        %2963 = vmatpush2.bf16.msra.mxu0 %v2391
        %2964 = vmatprep.subr.bf16.mxu0 %v2384
        %2965 = vmatpush2.bf16.msra.mxu0 %v2383
        %2966 = vmatprep.subr.bf16.mxu0 %v2376
        %2967 = vmatpush2.bf16.msra.mxu0 %v2375
        %2968 = vmatprep.subr.bf16.mxu0 %v2368
        %2969 = vmatpush2.bf16.msra.mxu0 %v2367
        %2970 = vmatprep.subr.bf16.mxu0 %v2360
        %2971 = vmatpush2.bf16.msra.mxu0 %v2359
        %2972 = vmatprep.subr.bf16.mxu0 %v2352
        %2973 = vmatpush2.bf16.msra.mxu0 %v2351
        %2974 = vmatprep.subr.bf16.mxu0 %v2344
        %2975 = vmatpush2.bf16.msra.mxu0 %v2343
        %2976 = vmatprep.mubr.bf16.mxu0 %v1078
        %2977 = vmatmul.mubr.bf16.gmra.mxu0 %v1077
        %v2978 = vpop.f32.mrf.mxu0
        %v2979 = vadd.f32 %v2938, %v2978
        %v2980 = vpop.f32.mrf.mxu0
        %v2981 = vadd.f32 %v2940, %v2980
        %v2982 = vpop.f32.mrf.mxu0
        %v2983 = vpop.f32.mrf.mxu0
        %2984 = vdwg.mxu0
        %vm2985 = vcmp.ge.f32.partialorder %v2733, 0.0
        %vm2986 = vcmp.ge.f32.partialorder %v2735, 0.0
        %vm2987 = vcmp.ge.f32.partialorder %v2815, 0.0
        %vm2988 = vcmp.ge.f32.partialorder %v2817, 0.0
        %vm2989 = vcmp.ge.f32.partialorder %v2897, 0.0
        %vm2990 = vcmp.ge.f32.partialorder %v2899, 0.0
        %vm2991 = vcmp.ge.f32.partialorder %v2979, 0.0
        %vm2992 = vcmp.ge.f32.partialorder %v2981, 0.0
        %v2993 = vmul.f32 %v2733, 0.2
        %v2994 = vmul.f32 %v2735, 0.2
        %v2995 = vmul.f32 %v2815, 0.2
        %v2996 = vmul.f32 %v2817, 0.2
        %v2997 = vmul.f32 %v2897, 0.2
        %v2998 = vmul.f32 %v2899, 0.2
        %v2999 = vmul.f32 %v2979, 0.2
        %v3000 = vmul.f32 %v2981, 0.2
        %v3001 = vsel %vm2985, %v2733, %v2993
        %v3002 = vsel %vm2986, %v2735, %v2994
        %v3003 = vsel %vm2987, %v2815, %v2995
        %v3004 = vsel %vm2988, %v2817, %v2996
        %v3005 = vsel %vm2989, %v2897, %v2997
        %v3006 = vsel %vm2990, %v2899, %v2998
        %v3007 = vsel %vm2991, %v2979, %v2999
        %v3008 = vsel %vm2992, %v2981, %v3000
        %v3009 = vpack.c.bf16 %v3001, %v3001
        %v3010 = vpack.c.bf16 %v3002, %v3002
        %v3011 = vpack.c.bf16 %v3003, %v3003
        %v3012 = vpack.c.bf16 %v3004, %v3004
        %v3013 = vpack.c.bf16 %v3005, %v3005
        %v3014 = vpack.c.bf16 %v3006, %v3006
        %v3015 = vpack.c.bf16 %v3007, %v3007
        %v3016 = vpack.c.bf16 %v3008, %v3008
        %v3017 = vld [vmem:[%s431] sm:$0xff]
        %v3018 = vld [vmem:[%s431 + $0x8] sm:$0xff]
        %v3019 = vld [vmem:[%s431 + $0x10] sm:$0xff]
        %v3020 = vld [vmem:[%s431 + $0x18] sm:$0xff]
        %v3021 = vld [vmem:[%s431 + $0x20] sm:$0xff]
        %v3022 = vld [vmem:[%s431 + $0x28] sm:$0xff]
        %v3023 = vld [vmem:[%s431 + $0x30] sm:$0xff]
        %v3024 = vld [vmem:[%s431 + $0x38] sm:$0xff]
        %v3025 = vld [vmem:[%s431 + $0x40] sm:$0xff]
        %v3026 = vld [vmem:[%s431 + $0x48] sm:$0xff]
        %v3027 = vld [vmem:[%s431 + $0x50] sm:$0xff]
        %v3028 = vld [vmem:[%s431 + $0x58] sm:$0xff]
        %v3029 = vld [vmem:[%s431 + $0x60] sm:$0xff]
        %v3030 = vld [vmem:[%s431 + $0x68] sm:$0xff]
        %v3031 = vld [vmem:[%s431 + $0x70] sm:$0xff]
        %v3032 = vld [vmem:[%s431 + $0x78] sm:$0xff]
        %v3033 = vld [vmem:[%s431 + $0x80] sm:$0xff]
        %v3034 = vld [vmem:[%s431 + $0x88] sm:$0xff]
        %v3035 = vld [vmem:[%s431 + $0x90] sm:$0xff]
        %v3036 = vld [vmem:[%s431 + $0x98] sm:$0xff]
        %v3037 = vld [vmem:[%s431 + $0xa0] sm:$0xff]
        %v3038 = vld [vmem:[%s431 + $0xa8] sm:$0xff]
        %v3039 = vld [vmem:[%s431 + $0xb0] sm:$0xff]
        %v3040 = vld [vmem:[%s431 + $0xb8] sm:$0xff]
        %v3041 = vld [vmem:[%s431 + $0xc0] sm:$0xff]
        %v3042 = vld [vmem:[%s431 + $0xc8] sm:$0xff]
        %v3043 = vld [vmem:[%s431 + $0xd0] sm:$0xff]
        %v3044 = vld [vmem:[%s431 + $0xd8] sm:$0xff]
        %v3045 = vld [vmem:[%s431 + $0xe0] sm:$0xff]
        %v3046 = vld [vmem:[%s431 + $0xe8] sm:$0xff]
        %v3047 = vld [vmem:[%s431 + $0xf0] sm:$0xff]
        %v3048 = vld [vmem:[%s431 + $0xf8] sm:$0xff]
        %v3049 = vld [vmem:[%s431 + $0x100] sm:$0xff]
        %v3050 = vld [vmem:[%s431 + $0x108] sm:$0xff]
        %v3051 = vld [vmem:[%s431 + $0x110] sm:$0xff]
        %v3052 = vld [vmem:[%s431 + $0x118] sm:$0xff]
        %v3053 = vld [vmem:[%s431 + $0x120] sm:$0xff]
        %v3054 = vld [vmem:[%s431 + $0x128] sm:$0xff]
        %v3055 = vld [vmem:[%s431 + $0x130] sm:$0xff]
        %v3056 = vld [vmem:[%s431 + $0x138] sm:$0xff]
        %v3057 = vld [vmem:[%s431 + $0x140] sm:$0xff]
        %v3058 = vld [vmem:[%s431 + $0x148] sm:$0xff]
        %v3059 = vld [vmem:[%s431 + $0x150] sm:$0xff]
        %v3060 = vld [vmem:[%s431 + $0x158] sm:$0xff]
        %v3061 = vld [vmem:[%s431 + $0x160] sm:$0xff]
        %v3062 = vld [vmem:[%s431 + $0x168] sm:$0xff]
        %v3063 = vld [vmem:[%s431 + $0x170] sm:$0xff]
        %v3064 = vld [vmem:[%s431 + $0x178] sm:$0xff]
        %v3065 = vld [vmem:[%s431 + $0x180] sm:$0xff]
        %v3066 = vld [vmem:[%s431 + $0x188] sm:$0xff]
        %v3067 = vld [vmem:[%s431 + $0x190] sm:$0xff]
        %v3068 = vld [vmem:[%s431 + $0x198] sm:$0xff]
        %v3069 = vld [vmem:[%s431 + $0x1a0] sm:$0xff]
        %v3070 = vld [vmem:[%s431 + $0x1a8] sm:$0xff]
        %v3071 = vld [vmem:[%s431 + $0x1b0] sm:$0xff]
        %v3072 = vld [vmem:[%s431 + $0x1b8] sm:$0xff]
        %v3073 = vld [vmem:[%s431 + $0x1c0] sm:$0xff]
        %v3074 = vld [vmem:[%s431 + $0x1c8] sm:$0xff]
        %v3075 = vld [vmem:[%s431 + $0x1d0] sm:$0xff]
        %v3076 = vld [vmem:[%s431 + $0x1d8] sm:$0xff]
        %v3077 = vld [vmem:[%s431 + $0x1e0] sm:$0xff]
        %v3078 = vld [vmem:[%s431 + $0x1e8] sm:$0xff]
        %v3079 = vld [vmem:[%s431 + $0x1f0] sm:$0xff]
        %v3080 = vld [vmem:[%s431 + $0x1f8] sm:$0xff]
        %v3081 = vld [vmem:[%s431 + $0x200] sm:$0xff]
        %v3082 = vld [vmem:[%s431 + $0x208] sm:$0xff]
        %v3083 = vld [vmem:[%s431 + $0x210] sm:$0xff]
        %v3084 = vld [vmem:[%s431 + $0x218] sm:$0xff]
        %v3085 = vld [vmem:[%s431 + $0x220] sm:$0xff]
        %v3086 = vld [vmem:[%s431 + $0x228] sm:$0xff]
        %v3087 = vld [vmem:[%s431 + $0x230] sm:$0xff]
        %v3088 = vld [vmem:[%s431 + $0x238] sm:$0xff]
        %v3089 = vld [vmem:[%s431 + $0x240] sm:$0xff]
        %v3090 = vld [vmem:[%s431 + $0x248] sm:$0xff]
        %v3091 = vld [vmem:[%s431 + $0x250] sm:$0xff]
        %v3092 = vld [vmem:[%s431 + $0x258] sm:$0xff]
        %v3093 = vld [vmem:[%s431 + $0x260] sm:$0xff]
        %v3094 = vld [vmem:[%s431 + $0x268] sm:$0xff]
        %v3095 = vld [vmem:[%s431 + $0x270] sm:$0xff]
        %v3096 = vld [vmem:[%s431 + $0x278] sm:$0xff]
        %v3097 = vld [vmem:[%s431 + $0x280] sm:$0xff]
        %v3098 = vld [vmem:[%s431 + $0x288] sm:$0xff]
        %v3099 = vld [vmem:[%s431 + $0x290] sm:$0xff]
        %v3100 = vld [vmem:[%s431 + $0x298] sm:$0xff]
        %v3101 = vld [vmem:[%s431 + $0x2a0] sm:$0xff]
        %v3102 = vld [vmem:[%s431 + $0x2a8] sm:$0xff]
        %v3103 = vld [vmem:[%s431 + $0x2b0] sm:$0xff]
        %v3104 = vld [vmem:[%s431 + $0x2b8] sm:$0xff]
        %v3105 = vld [vmem:[%s431 + $0x2c0] sm:$0xff]
        %v3106 = vld [vmem:[%s431 + $0x2c8] sm:$0xff]
        %v3107 = vld [vmem:[%s431 + $0x2d0] sm:$0xff]
        %v3108 = vld [vmem:[%s431 + $0x2d8] sm:$0xff]
        %v3109 = vld [vmem:[%s431 + $0x2e0] sm:$0xff]
        %v3110 = vld [vmem:[%s431 + $0x2e8] sm:$0xff]
        %v3111 = vld [vmem:[%s431 + $0x2f0] sm:$0xff]
        %v3112 = vld [vmem:[%s431 + $0x2f8] sm:$0xff]
        %v3113 = vld [vmem:[%s431 + $0x300] sm:$0xff]
        %v3114 = vld [vmem:[%s431 + $0x308] sm:$0xff]
        %v3115 = vld [vmem:[%s431 + $0x310] sm:$0xff]
        %v3116 = vld [vmem:[%s431 + $0x318] sm:$0xff]
        %v3117 = vld [vmem:[%s431 + $0x320] sm:$0xff]
        %v3118 = vld [vmem:[%s431 + $0x328] sm:$0xff]
        %v3119 = vld [vmem:[%s431 + $0x330] sm:$0xff]
        %v3120 = vld [vmem:[%s431 + $0x338] sm:$0xff]
        %v3121 = vld [vmem:[%s431 + $0x340] sm:$0xff]
        %v3122 = vld [vmem:[%s431 + $0x348] sm:$0xff]
        %v3123 = vld [vmem:[%s431 + $0x350] sm:$0xff]
        %v3124 = vld [vmem:[%s431 + $0x358] sm:$0xff]
        %v3125 = vld [vmem:[%s431 + $0x360] sm:$0xff]
        %v3126 = vld [vmem:[%s431 + $0x368] sm:$0xff]
        %v3127 = vld [vmem:[%s431 + $0x370] sm:$0xff]
        %v3128 = vld [vmem:[%s431 + $0x378] sm:$0xff]
        %v3129 = vld [vmem:[%s431 + $0x380] sm:$0xff]
        %v3130 = vld [vmem:[%s431 + $0x388] sm:$0xff]
        %v3131 = vld [vmem:[%s431 + $0x390] sm:$0xff]
        %v3132 = vld [vmem:[%s431 + $0x398] sm:$0xff]
        %v3133 = vld [vmem:[%s431 + $0x3a0] sm:$0xff]
        %v3134 = vld [vmem:[%s431 + $0x3a8] sm:$0xff]
        %v3135 = vld [vmem:[%s431 + $0x3b0] sm:$0xff]
        %v3136 = vld [vmem:[%s431 + $0x3b8] sm:$0xff]
        %v3137 = vld [vmem:[%s431 + $0x3c0] sm:$0xff]
        %v3138 = vld [vmem:[%s431 + $0x3c8] sm:$0xff]
        %v3139 = vld [vmem:[%s431 + $0x3d0] sm:$0xff]
        %v3140 = vld [vmem:[%s431 + $0x3d8] sm:$0xff]
        %v3141 = vld [vmem:[%s431 + $0x3e0] sm:$0xff]
        %v3142 = vld [vmem:[%s431 + $0x3e8] sm:$0xff]
        %v3143 = vld [vmem:[%s431 + $0x3f0] sm:$0xff]
        %v3144 = vld [vmem:[%s431 + $0x3f8] sm:$0xff]
        %v3145 = vld [vmem:[%s431 + $0x400] sm:$0xff]
        %v3146 = vld [vmem:[%s431 + $0x408] sm:$0xff]
        %v3147 = vld [vmem:[%s431 + $0x410] sm:$0xff]
        %v3148 = vld [vmem:[%s431 + $0x418] sm:$0xff]
        %v3149 = vld [vmem:[%s431 + $0x420] sm:$0xff]
        %v3150 = vld [vmem:[%s431 + $0x428] sm:$0xff]
        %v3151 = vld [vmem:[%s431 + $0x430] sm:$0xff]
        %v3152 = vld [vmem:[%s431 + $0x438] sm:$0xff]
        %v3153 = vld [vmem:[%s431 + $0x440] sm:$0xff]
        %v3154 = vld [vmem:[%s431 + $0x448] sm:$0xff]
        %v3155 = vld [vmem:[%s431 + $0x450] sm:$0xff]
        %v3156 = vld [vmem:[%s431 + $0x458] sm:$0xff]
        %v3157 = vld [vmem:[%s431 + $0x460] sm:$0xff]
        %v3158 = vld [vmem:[%s431 + $0x468] sm:$0xff]
        %v3159 = vld [vmem:[%s431 + $0x470] sm:$0xff]
        %v3160 = vld [vmem:[%s431 + $0x478] sm:$0xff]
        %v3161 = vld [vmem:[%s431 + $0x480] sm:$0xff]
        %v3162 = vld [vmem:[%s431 + $0x488] sm:$0xff]
        %v3163 = vld [vmem:[%s431 + $0x490] sm:$0xff]
        %v3164 = vld [vmem:[%s431 + $0x498] sm:$0xff]
        %v3165 = vld [vmem:[%s431 + $0x4a0] sm:$0xff]
        %v3166 = vld [vmem:[%s431 + $0x4a8] sm:$0xff]
        %v3167 = vld [vmem:[%s431 + $0x4b0] sm:$0xff]
        %v3168 = vld [vmem:[%s431 + $0x4b8] sm:$0xff]
        %v3169 = vld [vmem:[%s431 + $0x4c0] sm:$0xff]
        %v3170 = vld [vmem:[%s431 + $0x4c8] sm:$0xff]
        %v3171 = vld [vmem:[%s431 + $0x4d0] sm:$0xff]
        %v3172 = vld [vmem:[%s431 + $0x4d8] sm:$0xff]
        %v3173 = vld [vmem:[%s431 + $0x4e0] sm:$0xff]
        %v3174 = vld [vmem:[%s431 + $0x4e8] sm:$0xff]
        %v3175 = vld [vmem:[%s431 + $0x4f0] sm:$0xff]
        %v3176 = vld [vmem:[%s431 + $0x4f8] sm:$0xff]
        %v3177 = vld [vmem:[%s431 + $0x500] sm:$0xff]
        %v3178 = vld [vmem:[%s431 + $0x508] sm:$0xff]
        %v3179 = vld [vmem:[%s431 + $0x510] sm:$0xff]
        %v3180 = vld [vmem:[%s431 + $0x518] sm:$0xff]
        %v3181 = vld [vmem:[%s431 + $0x520] sm:$0xff]
        %v3182 = vld [vmem:[%s431 + $0x528] sm:$0xff]
        %v3183 = vld [vmem:[%s431 + $0x530] sm:$0xff]
        %v3184 = vld [vmem:[%s431 + $0x538] sm:$0xff]
        %v3185 = vld [vmem:[%s431 + $0x540] sm:$0xff]
        %v3186 = vld [vmem:[%s431 + $0x548] sm:$0xff]
        %v3187 = vld [vmem:[%s431 + $0x550] sm:$0xff]
        %v3188 = vld [vmem:[%s431 + $0x558] sm:$0xff]
        %v3189 = vld [vmem:[%s431 + $0x560] sm:$0xff]
        %v3190 = vld [vmem:[%s431 + $0x568] sm:$0xff]
        %v3191 = vld [vmem:[%s431 + $0x570] sm:$0xff]
        %v3192 = vld [vmem:[%s431 + $0x578] sm:$0xff]
        %v3193 = vld [vmem:[%s431 + $0x580] sm:$0xff]
        %v3194 = vld [vmem:[%s431 + $0x588] sm:$0xff]
        %v3195 = vld [vmem:[%s431 + $0x590] sm:$0xff]
        %v3196 = vld [vmem:[%s431 + $0x598] sm:$0xff]
        %v3197 = vld [vmem:[%s431 + $0x5a0] sm:$0xff]
        %v3198 = vld [vmem:[%s431 + $0x5a8] sm:$0xff]
        %v3199 = vld [vmem:[%s431 + $0x5b0] sm:$0xff]
        %v3200 = vld [vmem:[%s431 + $0x5b8] sm:$0xff]
        %v3201 = vld [vmem:[%s431 + $0x5c0] sm:$0xff]
        %v3202 = vld [vmem:[%s431 + $0x5c8] sm:$0xff]
        %v3203 = vld [vmem:[%s431 + $0x5d0] sm:$0xff]
        %v3204 = vld [vmem:[%s431 + $0x5d8] sm:$0xff]
        %v3205 = vld [vmem:[%s431 + $0x5e0] sm:$0xff]
        %v3206 = vld [vmem:[%s431 + $0x5e8] sm:$0xff]
        %v3207 = vld [vmem:[%s431 + $0x5f0] sm:$0xff]
        %v3208 = vld [vmem:[%s431 + $0x5f8] sm:$0xff]
        %v3209 = vld [vmem:[%s431 + $0x600] sm:$0xff]
        %v3210 = vld [vmem:[%s431 + $0x608] sm:$0xff]
        %v3211 = vld [vmem:[%s431 + $0x610] sm:$0xff]
        %v3212 = vld [vmem:[%s431 + $0x618] sm:$0xff]
        %v3213 = vld [vmem:[%s431 + $0x620] sm:$0xff]
        %v3214 = vld [vmem:[%s431 + $0x628] sm:$0xff]
        %v3215 = vld [vmem:[%s431 + $0x630] sm:$0xff]
        %v3216 = vld [vmem:[%s431 + $0x638] sm:$0xff]
        %v3217 = vld [vmem:[%s431 + $0x640] sm:$0xff]
        %v3218 = vld [vmem:[%s431 + $0x648] sm:$0xff]
        %v3219 = vld [vmem:[%s431 + $0x650] sm:$0xff]
        %v3220 = vld [vmem:[%s431 + $0x658] sm:$0xff]
        %v3221 = vld [vmem:[%s431 + $0x660] sm:$0xff]
        %v3222 = vld [vmem:[%s431 + $0x668] sm:$0xff]
        %v3223 = vld [vmem:[%s431 + $0x670] sm:$0xff]
        %v3224 = vld [vmem:[%s431 + $0x678] sm:$0xff]
        %v3225 = vld [vmem:[%s431 + $0x680] sm:$0xff]
        %v3226 = vld [vmem:[%s431 + $0x688] sm:$0xff]
        %v3227 = vld [vmem:[%s431 + $0x690] sm:$0xff]
        %v3228 = vld [vmem:[%s431 + $0x698] sm:$0xff]
        %v3229 = vld [vmem:[%s431 + $0x6a0] sm:$0xff]
        %v3230 = vld [vmem:[%s431 + $0x6a8] sm:$0xff]
        %v3231 = vld [vmem:[%s431 + $0x6b0] sm:$0xff]
        %v3232 = vld [vmem:[%s431 + $0x6b8] sm:$0xff]
        %v3233 = vld [vmem:[%s431 + $0x6c0] sm:$0xff]
        %v3234 = vld [vmem:[%s431 + $0x6c8] sm:$0xff]
        %v3235 = vld [vmem:[%s431 + $0x6d0] sm:$0xff]
        %v3236 = vld [vmem:[%s431 + $0x6d8] sm:$0xff]
        %v3237 = vld [vmem:[%s431 + $0x6e0] sm:$0xff]
        %v3238 = vld [vmem:[%s431 + $0x6e8] sm:$0xff]
        %v3239 = vld [vmem:[%s431 + $0x6f0] sm:$0xff]
        %v3240 = vld [vmem:[%s431 + $0x6f8] sm:$0xff]
        %v3241 = vld [vmem:[%s431 + $0x700] sm:$0xff]
        %v3242 = vld [vmem:[%s431 + $0x708] sm:$0xff]
        %v3243 = vld [vmem:[%s431 + $0x710] sm:$0xff]
        %v3244 = vld [vmem:[%s431 + $0x718] sm:$0xff]
        %v3245 = vld [vmem:[%s431 + $0x720] sm:$0xff]
        %v3246 = vld [vmem:[%s431 + $0x728] sm:$0xff]
        %v3247 = vld [vmem:[%s431 + $0x730] sm:$0xff]
        %v3248 = vld [vmem:[%s431 + $0x738] sm:$0xff]
        %v3249 = vld [vmem:[%s431 + $0x740] sm:$0xff]
        %v3250 = vld [vmem:[%s431 + $0x748] sm:$0xff]
        %v3251 = vld [vmem:[%s431 + $0x750] sm:$0xff]
        %v3252 = vld [vmem:[%s431 + $0x758] sm:$0xff]
        %v3253 = vld [vmem:[%s431 + $0x760] sm:$0xff]
        %v3254 = vld [vmem:[%s431 + $0x768] sm:$0xff]
        %v3255 = vld [vmem:[%s431 + $0x770] sm:$0xff]
        %v3256 = vld [vmem:[%s431 + $0x778] sm:$0xff]
        %v3257 = vld [vmem:[%s431 + $0x780] sm:$0xff]
        %v3258 = vld [vmem:[%s431 + $0x788] sm:$0xff]
        %v3259 = vld [vmem:[%s431 + $0x790] sm:$0xff]
        %v3260 = vld [vmem:[%s431 + $0x798] sm:$0xff]
        %v3261 = vld [vmem:[%s431 + $0x7a0] sm:$0xff]
        %v3262 = vld [vmem:[%s431 + $0x7a8] sm:$0xff]
        %v3263 = vld [vmem:[%s431 + $0x7b0] sm:$0xff]
        %v3264 = vld [vmem:[%s431 + $0x7b8] sm:$0xff]
        %v3265 = vld [vmem:[%s431 + $0x7c0] sm:$0xff]
        %v3266 = vld [vmem:[%s431 + $0x7c8] sm:$0xff]
        %v3267 = vld [vmem:[%s431 + $0x7d0] sm:$0xff]
        %v3268 = vld [vmem:[%s431 + $0x7d8] sm:$0xff]
        %v3269 = vld [vmem:[%s431 + $0x7e0] sm:$0xff]
        %v3270 = vld [vmem:[%s431 + $0x7e8] sm:$0xff]
        %v3271 = vld [vmem:[%s431 + $0x7f0] sm:$0xff]
        %v3272 = vld [vmem:[%s431 + $0x7f8] sm:$0xff]
        %v3273 = vld [vmem:[%s440] sm:$0xf]
        %v3275 = vlaneseq
        %v3276 = vshrl.u32 %v3275, 7
        %v3277 = vsub.s32 0, %v3276
        %v3278 = vrot.slane %v3273, %v3277
        %v3279 = vlaneseq
        %v3280 = vshrl.u32 %v3279, 7
        %v3281 = vsub.s32 1, %v3280
        %v3282 = vrot.slane %v3273, %v3281
        %v3283 = vlaneseq
        %v3284 = vshrl.u32 %v3283, 7
        %v3285 = vsub.s32 2, %v3284
        %v3286 = vrot.slane %v3273, %v3285
        %v3287 = vlaneseq
        %v3288 = vshrl.u32 %v3287, 7
        %v3289 = vsub.s32 3, %v3288
        %v3290 = vrot.slane %v3273, %v3289
        %v3551 = vunpack.c.l.b16 %v3017
        %v3552 = vunpack.c.h.b16 %v3017
        %v3553 = vunpack.c.l.b16 %v3018
        %v3554 = vunpack.c.h.b16 %v3018
        %v3555 = vunpack.c.l.b16 %v3019
        %v3556 = vunpack.c.h.b16 %v3019
        %v3557 = vunpack.c.l.b16 %v3020
        %v3558 = vunpack.c.h.b16 %v3020
        %v3559 = vunpack.c.l.b16 %v3021
        %v3560 = vunpack.c.h.b16 %v3021
        %v3561 = vunpack.c.l.b16 %v3022
        %v3562 = vunpack.c.h.b16 %v3022
        %v3563 = vunpack.c.l.b16 %v3023
        %v3564 = vunpack.c.h.b16 %v3023
        %v3565 = vunpack.c.l.b16 %v3024
        %v3566 = vunpack.c.h.b16 %v3024
        %v3567 = vunpack.c.l.b16 %v3025
        %v3568 = vunpack.c.h.b16 %v3025
        %v3569 = vunpack.c.l.b16 %v3026
        %v3570 = vunpack.c.h.b16 %v3026
        %v3571 = vunpack.c.l.b16 %v3027
        %v3572 = vunpack.c.h.b16 %v3027
        %v3573 = vunpack.c.l.b16 %v3028
        %v3574 = vunpack.c.h.b16 %v3028
        %v3575 = vunpack.c.l.b16 %v3029
        %v3576 = vunpack.c.h.b16 %v3029
        %v3577 = vunpack.c.l.b16 %v3030
        %v3578 = vunpack.c.h.b16 %v3030
        %v3579 = vunpack.c.l.b16 %v3031
        %v3580 = vunpack.c.h.b16 %v3031
        %v3581 = vunpack.c.l.b16 %v3032
        %v3582 = vunpack.c.h.b16 %v3032
        %v3583 = vunpack.c.l.b16 %v3033
        %v3584 = vunpack.c.h.b16 %v3033
        %v3585 = vunpack.c.l.b16 %v3034
        %v3586 = vunpack.c.h.b16 %v3034
        %v3587 = vunpack.c.l.b16 %v3035
        %v3588 = vunpack.c.h.b16 %v3035
        %v3589 = vunpack.c.l.b16 %v3036
        %v3590 = vunpack.c.h.b16 %v3036
        %v3591 = vunpack.c.l.b16 %v3037
        %v3592 = vunpack.c.h.b16 %v3037
        %v3593 = vunpack.c.l.b16 %v3038
        %v3594 = vunpack.c.h.b16 %v3038
        %v3595 = vunpack.c.l.b16 %v3039
        %v3596 = vunpack.c.h.b16 %v3039
        %v3597 = vunpack.c.l.b16 %v3040
        %v3598 = vunpack.c.h.b16 %v3040
        %v3599 = vunpack.c.l.b16 %v3041
        %v3600 = vunpack.c.h.b16 %v3041
        %v3601 = vunpack.c.l.b16 %v3042
        %v3602 = vunpack.c.h.b16 %v3042
        %v3603 = vunpack.c.l.b16 %v3043
        %v3604 = vunpack.c.h.b16 %v3043
        %v3605 = vunpack.c.l.b16 %v3044
        %v3606 = vunpack.c.h.b16 %v3044
        %v3607 = vunpack.c.l.b16 %v3045
        %v3608 = vunpack.c.h.b16 %v3045
        %v3609 = vunpack.c.l.b16 %v3046
        %v3610 = vunpack.c.h.b16 %v3046
        %v3611 = vunpack.c.l.b16 %v3047
        %v3612 = vunpack.c.h.b16 %v3047
        %v3613 = vunpack.c.l.b16 %v3048
        %v3614 = vunpack.c.h.b16 %v3048
        %v3615 = vunpack.c.l.b16 %v3049
        %v3616 = vunpack.c.h.b16 %v3049
        %v3617 = vunpack.c.l.b16 %v3050
        %v3618 = vunpack.c.h.b16 %v3050
        %v3619 = vunpack.c.l.b16 %v3051
        %v3620 = vunpack.c.h.b16 %v3051
        %v3621 = vunpack.c.l.b16 %v3052
        %v3622 = vunpack.c.h.b16 %v3052
        %v3623 = vunpack.c.l.b16 %v3053
        %v3624 = vunpack.c.h.b16 %v3053
        %v3625 = vunpack.c.l.b16 %v3054
        %v3626 = vunpack.c.h.b16 %v3054
        %v3627 = vunpack.c.l.b16 %v3055
        %v3628 = vunpack.c.h.b16 %v3055
        %v3629 = vunpack.c.l.b16 %v3056
        %v3630 = vunpack.c.h.b16 %v3056
        %v3631 = vunpack.c.l.b16 %v3057
        %v3632 = vunpack.c.h.b16 %v3057
        %v3633 = vunpack.c.l.b16 %v3058
        %v3634 = vunpack.c.h.b16 %v3058
        %v3635 = vunpack.c.l.b16 %v3059
        %v3636 = vunpack.c.h.b16 %v3059
        %v3637 = vunpack.c.l.b16 %v3060
        %v3638 = vunpack.c.h.b16 %v3060
        %v3639 = vunpack.c.l.b16 %v3061
        %v3640 = vunpack.c.h.b16 %v3061
        %v3641 = vunpack.c.l.b16 %v3062
        %v3642 = vunpack.c.h.b16 %v3062
        %v3643 = vunpack.c.l.b16 %v3063
        %v3644 = vunpack.c.h.b16 %v3063
        %v3645 = vunpack.c.l.b16 %v3064
        %v3646 = vunpack.c.h.b16 %v3064
        %v3647 = vunpack.c.l.b16 %v3065
        %v3648 = vunpack.c.h.b16 %v3065
        %v3649 = vunpack.c.l.b16 %v3066
        %v3650 = vunpack.c.h.b16 %v3066
        %v3651 = vunpack.c.l.b16 %v3067
        %v3652 = vunpack.c.h.b16 %v3067
        %v3653 = vunpack.c.l.b16 %v3068
        %v3654 = vunpack.c.h.b16 %v3068
        %v3655 = vunpack.c.l.b16 %v3069
        %v3656 = vunpack.c.h.b16 %v3069
        %v3657 = vunpack.c.l.b16 %v3070
        %v3658 = vunpack.c.h.b16 %v3070
        %v3659 = vunpack.c.l.b16 %v3071
        %v3660 = vunpack.c.h.b16 %v3071
        %v3661 = vunpack.c.l.b16 %v3072
        %v3662 = vunpack.c.h.b16 %v3072
        %v3663 = vunpack.c.l.b16 %v3073
        %v3664 = vunpack.c.h.b16 %v3073
        %v3665 = vunpack.c.l.b16 %v3074
        %v3666 = vunpack.c.h.b16 %v3074
        %v3667 = vunpack.c.l.b16 %v3075
        %v3668 = vunpack.c.h.b16 %v3075
        %v3669 = vunpack.c.l.b16 %v3076
        %v3670 = vunpack.c.h.b16 %v3076
        %v3671 = vunpack.c.l.b16 %v3077
        %v3672 = vunpack.c.h.b16 %v3077
        %v3673 = vunpack.c.l.b16 %v3078
        %v3674 = vunpack.c.h.b16 %v3078
        %v3675 = vunpack.c.l.b16 %v3079
        %v3676 = vunpack.c.h.b16 %v3079
        %v3677 = vunpack.c.l.b16 %v3080
        %v3678 = vunpack.c.h.b16 %v3080
        %v3679 = vunpack.c.l.b16 %v3081
        %v3680 = vunpack.c.h.b16 %v3081
        %v3681 = vunpack.c.l.b16 %v3082
        %v3682 = vunpack.c.h.b16 %v3082
        %v3683 = vunpack.c.l.b16 %v3083
        %v3684 = vunpack.c.h.b16 %v3083
        %v3685 = vunpack.c.l.b16 %v3084
        %v3686 = vunpack.c.h.b16 %v3084
        %v3687 = vunpack.c.l.b16 %v3085
        %v3688 = vunpack.c.h.b16 %v3085
        %v3689 = vunpack.c.l.b16 %v3086
        %v3690 = vunpack.c.h.b16 %v3086
        %v3691 = vunpack.c.l.b16 %v3087
        %v3692 = vunpack.c.h.b16 %v3087
        %v3693 = vunpack.c.l.b16 %v3088
        %v3694 = vunpack.c.h.b16 %v3088
        %v3695 = vunpack.c.l.b16 %v3089
        %v3696 = vunpack.c.h.b16 %v3089
        %v3697 = vunpack.c.l.b16 %v3090
        %v3698 = vunpack.c.h.b16 %v3090
        %v3699 = vunpack.c.l.b16 %v3091
        %v3700 = vunpack.c.h.b16 %v3091
        %v3701 = vunpack.c.l.b16 %v3092
        %v3702 = vunpack.c.h.b16 %v3092
        %v3703 = vunpack.c.l.b16 %v3093
        %v3704 = vunpack.c.h.b16 %v3093
        %v3705 = vunpack.c.l.b16 %v3094
        %v3706 = vunpack.c.h.b16 %v3094
        %v3707 = vunpack.c.l.b16 %v3095
        %v3708 = vunpack.c.h.b16 %v3095
        %v3709 = vunpack.c.l.b16 %v3096
        %v3710 = vunpack.c.h.b16 %v3096
        %v3711 = vunpack.c.l.b16 %v3097
        %v3712 = vunpack.c.h.b16 %v3097
        %v3713 = vunpack.c.l.b16 %v3098
        %v3714 = vunpack.c.h.b16 %v3098
        %v3715 = vunpack.c.l.b16 %v3099
        %v3716 = vunpack.c.h.b16 %v3099
        %v3717 = vunpack.c.l.b16 %v3100
        %v3718 = vunpack.c.h.b16 %v3100
        %v3719 = vunpack.c.l.b16 %v3101
        %v3720 = vunpack.c.h.b16 %v3101
        %v3721 = vunpack.c.l.b16 %v3102
        %v3722 = vunpack.c.h.b16 %v3102
        %v3723 = vunpack.c.l.b16 %v3103
        %v3724 = vunpack.c.h.b16 %v3103
        %v3725 = vunpack.c.l.b16 %v3104
        %v3726 = vunpack.c.h.b16 %v3104
        %v3727 = vunpack.c.l.b16 %v3105
        %v3728 = vunpack.c.h.b16 %v3105
        %v3729 = vunpack.c.l.b16 %v3106
        %v3730 = vunpack.c.h.b16 %v3106
        %v3731 = vunpack.c.l.b16 %v3107
        %v3732 = vunpack.c.h.b16 %v3107
        %v3733 = vunpack.c.l.b16 %v3108
        %v3734 = vunpack.c.h.b16 %v3108
        %v3735 = vunpack.c.l.b16 %v3109
        %v3736 = vunpack.c.h.b16 %v3109
        %v3737 = vunpack.c.l.b16 %v3110
        %v3738 = vunpack.c.h.b16 %v3110
        %v3739 = vunpack.c.l.b16 %v3111
        %v3740 = vunpack.c.h.b16 %v3111
        %v3741 = vunpack.c.l.b16 %v3112
        %v3742 = vunpack.c.h.b16 %v3112
        %v3743 = vunpack.c.l.b16 %v3113
        %v3744 = vunpack.c.h.b16 %v3113
        %v3745 = vunpack.c.l.b16 %v3114
        %v3746 = vunpack.c.h.b16 %v3114
        %v3747 = vunpack.c.l.b16 %v3115
        %v3748 = vunpack.c.h.b16 %v3115
        %v3749 = vunpack.c.l.b16 %v3116
        %v3750 = vunpack.c.h.b16 %v3116
        %v3751 = vunpack.c.l.b16 %v3117
        %v3752 = vunpack.c.h.b16 %v3117
        %v3753 = vunpack.c.l.b16 %v3118
        %v3754 = vunpack.c.h.b16 %v3118
        %v3755 = vunpack.c.l.b16 %v3119
        %v3756 = vunpack.c.h.b16 %v3119
        %v3757 = vunpack.c.l.b16 %v3120
        %v3758 = vunpack.c.h.b16 %v3120
        %v3759 = vunpack.c.l.b16 %v3121
        %v3760 = vunpack.c.h.b16 %v3121
        %v3761 = vunpack.c.l.b16 %v3122
        %v3762 = vunpack.c.h.b16 %v3122
        %v3763 = vunpack.c.l.b16 %v3123
        %v3764 = vunpack.c.h.b16 %v3123
        %v3765 = vunpack.c.l.b16 %v3124
        %v3766 = vunpack.c.h.b16 %v3124
        %v3767 = vunpack.c.l.b16 %v3125
        %v3768 = vunpack.c.h.b16 %v3125
        %v3769 = vunpack.c.l.b16 %v3126
        %v3770 = vunpack.c.h.b16 %v3126
        %v3771 = vunpack.c.l.b16 %v3127
        %v3772 = vunpack.c.h.b16 %v3127
        %v3773 = vunpack.c.l.b16 %v3128
        %v3774 = vunpack.c.h.b16 %v3128
        %v3775 = vunpack.c.l.b16 %v3129
        %v3776 = vunpack.c.h.b16 %v3129
        %v3777 = vunpack.c.l.b16 %v3130
        %v3778 = vunpack.c.h.b16 %v3130
        %v3779 = vunpack.c.l.b16 %v3131
        %v3780 = vunpack.c.h.b16 %v3131
        %v3781 = vunpack.c.l.b16 %v3132
        %v3782 = vunpack.c.h.b16 %v3132
        %v3783 = vunpack.c.l.b16 %v3133
        %v3784 = vunpack.c.h.b16 %v3133
        %v3785 = vunpack.c.l.b16 %v3134
        %v3786 = vunpack.c.h.b16 %v3134
        %v3787 = vunpack.c.l.b16 %v3135
        %v3788 = vunpack.c.h.b16 %v3135
        %v3789 = vunpack.c.l.b16 %v3136
        %v3790 = vunpack.c.h.b16 %v3136
        %v3791 = vunpack.c.l.b16 %v3137
        %v3792 = vunpack.c.h.b16 %v3137
        %v3793 = vunpack.c.l.b16 %v3138
        %v3794 = vunpack.c.h.b16 %v3138
        %v3795 = vunpack.c.l.b16 %v3139
        %v3796 = vunpack.c.h.b16 %v3139
        %v3797 = vunpack.c.l.b16 %v3140
        %v3798 = vunpack.c.h.b16 %v3140
        %v3799 = vunpack.c.l.b16 %v3141
        %v3800 = vunpack.c.h.b16 %v3141
        %v3801 = vunpack.c.l.b16 %v3142
        %v3802 = vunpack.c.h.b16 %v3142
        %v3803 = vunpack.c.l.b16 %v3143
        %v3804 = vunpack.c.h.b16 %v3143
        %v3805 = vunpack.c.l.b16 %v3144
        %v3806 = vunpack.c.h.b16 %v3144
        %v3807 = vunpack.c.l.b16 %v3145
        %v3808 = vunpack.c.h.b16 %v3145
        %v3809 = vunpack.c.l.b16 %v3146
        %v3810 = vunpack.c.h.b16 %v3146
        %v3811 = vunpack.c.l.b16 %v3147
        %v3812 = vunpack.c.h.b16 %v3147
        %v3813 = vunpack.c.l.b16 %v3148
        %v3814 = vunpack.c.h.b16 %v3148
        %v3815 = vunpack.c.l.b16 %v3149
        %v3816 = vunpack.c.h.b16 %v3149
        %v3817 = vunpack.c.l.b16 %v3150
        %v3818 = vunpack.c.h.b16 %v3150
        %v3819 = vunpack.c.l.b16 %v3151
        %v3820 = vunpack.c.h.b16 %v3151
        %v3821 = vunpack.c.l.b16 %v3152
        %v3822 = vunpack.c.h.b16 %v3152
        %v3823 = vunpack.c.l.b16 %v3153
        %v3824 = vunpack.c.h.b16 %v3153
        %v3825 = vunpack.c.l.b16 %v3154
        %v3826 = vunpack.c.h.b16 %v3154
        %v3827 = vunpack.c.l.b16 %v3155
        %v3828 = vunpack.c.h.b16 %v3155
        %v3829 = vunpack.c.l.b16 %v3156
        %v3830 = vunpack.c.h.b16 %v3156
        %v3831 = vunpack.c.l.b16 %v3157
        %v3832 = vunpack.c.h.b16 %v3157
        %v3833 = vunpack.c.l.b16 %v3158
        %v3834 = vunpack.c.h.b16 %v3158
        %v3835 = vunpack.c.l.b16 %v3159
        %v3836 = vunpack.c.h.b16 %v3159
        %v3837 = vunpack.c.l.b16 %v3160
        %v3838 = vunpack.c.h.b16 %v3160
        %v3839 = vunpack.c.l.b16 %v3161
        %v3840 = vunpack.c.h.b16 %v3161
        %v3841 = vunpack.c.l.b16 %v3162
        %v3842 = vunpack.c.h.b16 %v3162
        %v3843 = vunpack.c.l.b16 %v3163
        %v3844 = vunpack.c.h.b16 %v3163
        %v3845 = vunpack.c.l.b16 %v3164
        %v3846 = vunpack.c.h.b16 %v3164
        %v3847 = vunpack.c.l.b16 %v3165
        %v3848 = vunpack.c.h.b16 %v3165
        %v3849 = vunpack.c.l.b16 %v3166
        %v3850 = vunpack.c.h.b16 %v3166
        %v3851 = vunpack.c.l.b16 %v3167
        %v3852 = vunpack.c.h.b16 %v3167
        %v3853 = vunpack.c.l.b16 %v3168
        %v3854 = vunpack.c.h.b16 %v3168
        %v3855 = vunpack.c.l.b16 %v3169
        %v3856 = vunpack.c.h.b16 %v3169
        %v3857 = vunpack.c.l.b16 %v3170
        %v3858 = vunpack.c.h.b16 %v3170
        %v3859 = vunpack.c.l.b16 %v3171
        %v3860 = vunpack.c.h.b16 %v3171
        %v3861 = vunpack.c.l.b16 %v3172
        %v3862 = vunpack.c.h.b16 %v3172
        %v3863 = vunpack.c.l.b16 %v3173
        %v3864 = vunpack.c.h.b16 %v3173
        %v3865 = vunpack.c.l.b16 %v3174
        %v3866 = vunpack.c.h.b16 %v3174
        %v3867 = vunpack.c.l.b16 %v3175
        %v3868 = vunpack.c.h.b16 %v3175
        %v3869 = vunpack.c.l.b16 %v3176
        %v3870 = vunpack.c.h.b16 %v3176
        %v3871 = vunpack.c.l.b16 %v3177
        %v3872 = vunpack.c.h.b16 %v3177
        %v3873 = vunpack.c.l.b16 %v3178
        %v3874 = vunpack.c.h.b16 %v3178
        %v3875 = vunpack.c.l.b16 %v3179
        %v3876 = vunpack.c.h.b16 %v3179
        %v3877 = vunpack.c.l.b16 %v3180
        %v3878 = vunpack.c.h.b16 %v3180
        %v3879 = vunpack.c.l.b16 %v3181
        %v3880 = vunpack.c.h.b16 %v3181
        %v3881 = vunpack.c.l.b16 %v3182
        %v3882 = vunpack.c.h.b16 %v3182
        %v3883 = vunpack.c.l.b16 %v3183
        %v3884 = vunpack.c.h.b16 %v3183
        %v3885 = vunpack.c.l.b16 %v3184
        %v3886 = vunpack.c.h.b16 %v3184
        %v3887 = vunpack.c.l.b16 %v3185
        %v3888 = vunpack.c.h.b16 %v3185
        %v3889 = vunpack.c.l.b16 %v3186
        %v3890 = vunpack.c.h.b16 %v3186
        %v3891 = vunpack.c.l.b16 %v3187
        %v3892 = vunpack.c.h.b16 %v3187
        %v3893 = vunpack.c.l.b16 %v3188
        %v3894 = vunpack.c.h.b16 %v3188
        %v3895 = vunpack.c.l.b16 %v3189
        %v3896 = vunpack.c.h.b16 %v3189
        %v3897 = vunpack.c.l.b16 %v3190
        %v3898 = vunpack.c.h.b16 %v3190
        %v3899 = vunpack.c.l.b16 %v3191
        %v3900 = vunpack.c.h.b16 %v3191
        %v3901 = vunpack.c.l.b16 %v3192
        %v3902 = vunpack.c.h.b16 %v3192
        %v3903 = vunpack.c.l.b16 %v3193
        %v3904 = vunpack.c.h.b16 %v3193
        %v3905 = vunpack.c.l.b16 %v3194
        %v3906 = vunpack.c.h.b16 %v3194
        %v3907 = vunpack.c.l.b16 %v3195
        %v3908 = vunpack.c.h.b16 %v3195
        %v3909 = vunpack.c.l.b16 %v3196
        %v3910 = vunpack.c.h.b16 %v3196
        %v3911 = vunpack.c.l.b16 %v3197
        %v3912 = vunpack.c.h.b16 %v3197
        %v3913 = vunpack.c.l.b16 %v3198
        %v3914 = vunpack.c.h.b16 %v3198
        %v3915 = vunpack.c.l.b16 %v3199
        %v3916 = vunpack.c.h.b16 %v3199
        %v3917 = vunpack.c.l.b16 %v3200
        %v3918 = vunpack.c.h.b16 %v3200
        %v3919 = vunpack.c.l.b16 %v3201
        %v3920 = vunpack.c.h.b16 %v3201
        %v3921 = vunpack.c.l.b16 %v3202
        %v3922 = vunpack.c.h.b16 %v3202
        %v3923 = vunpack.c.l.b16 %v3203
        %v3924 = vunpack.c.h.b16 %v3203
        %v3925 = vunpack.c.l.b16 %v3204
        %v3926 = vunpack.c.h.b16 %v3204
        %v3927 = vunpack.c.l.b16 %v3205
        %v3928 = vunpack.c.h.b16 %v3205
        %v3929 = vunpack.c.l.b16 %v3206
        %v3930 = vunpack.c.h.b16 %v3206
        %v3931 = vunpack.c.l.b16 %v3207
        %v3932 = vunpack.c.h.b16 %v3207
        %v3933 = vunpack.c.l.b16 %v3208
        %v3934 = vunpack.c.h.b16 %v3208
        %v3935 = vunpack.c.l.b16 %v3209
        %v3936 = vunpack.c.h.b16 %v3209
        %v3937 = vunpack.c.l.b16 %v3210
        %v3938 = vunpack.c.h.b16 %v3210
        %v3939 = vunpack.c.l.b16 %v3211
        %v3940 = vunpack.c.h.b16 %v3211
        %v3941 = vunpack.c.l.b16 %v3212
        %v3942 = vunpack.c.h.b16 %v3212
        %v3943 = vunpack.c.l.b16 %v3213
        %v3944 = vunpack.c.h.b16 %v3213
        %v3945 = vunpack.c.l.b16 %v3214
        %v3946 = vunpack.c.h.b16 %v3214
        %v3947 = vunpack.c.l.b16 %v3215
        %v3948 = vunpack.c.h.b16 %v3215
        %v3949 = vunpack.c.l.b16 %v3216
        %v3950 = vunpack.c.h.b16 %v3216
        %v3951 = vunpack.c.l.b16 %v3217
        %v3952 = vunpack.c.h.b16 %v3217
        %v3953 = vunpack.c.l.b16 %v3218
        %v3954 = vunpack.c.h.b16 %v3218
        %v3955 = vunpack.c.l.b16 %v3219
        %v3956 = vunpack.c.h.b16 %v3219
        %v3957 = vunpack.c.l.b16 %v3220
        %v3958 = vunpack.c.h.b16 %v3220
        %v3959 = vunpack.c.l.b16 %v3221
        %v3960 = vunpack.c.h.b16 %v3221
        %v3961 = vunpack.c.l.b16 %v3222
        %v3962 = vunpack.c.h.b16 %v3222
        %v3963 = vunpack.c.l.b16 %v3223
        %v3964 = vunpack.c.h.b16 %v3223
        %v3965 = vunpack.c.l.b16 %v3224
        %v3966 = vunpack.c.h.b16 %v3224
        %v3967 = vunpack.c.l.b16 %v3225
        %v3968 = vunpack.c.h.b16 %v3225
        %v3969 = vunpack.c.l.b16 %v3226
        %v3970 = vunpack.c.h.b16 %v3226
        %v3971 = vunpack.c.l.b16 %v3227
        %v3972 = vunpack.c.h.b16 %v3227
        %v3973 = vunpack.c.l.b16 %v3228
        %v3974 = vunpack.c.h.b16 %v3228
        %v3975 = vunpack.c.l.b16 %v3229
        %v3976 = vunpack.c.h.b16 %v3229
        %v3977 = vunpack.c.l.b16 %v3230
        %v3978 = vunpack.c.h.b16 %v3230
        %v3979 = vunpack.c.l.b16 %v3231
        %v3980 = vunpack.c.h.b16 %v3231
        %v3981 = vunpack.c.l.b16 %v3232
        %v3982 = vunpack.c.h.b16 %v3232
        %v3983 = vunpack.c.l.b16 %v3233
        %v3984 = vunpack.c.h.b16 %v3233
        %v3985 = vunpack.c.l.b16 %v3234
        %v3986 = vunpack.c.h.b16 %v3234
        %v3987 = vunpack.c.l.b16 %v3235
        %v3988 = vunpack.c.h.b16 %v3235
        %v3989 = vunpack.c.l.b16 %v3236
        %v3990 = vunpack.c.h.b16 %v3236
        %v3991 = vunpack.c.l.b16 %v3237
        %v3992 = vunpack.c.h.b16 %v3237
        %v3993 = vunpack.c.l.b16 %v3238
        %v3994 = vunpack.c.h.b16 %v3238
        %v3995 = vunpack.c.l.b16 %v3239
        %v3996 = vunpack.c.h.b16 %v3239
        %v3997 = vunpack.c.l.b16 %v3240
        %v3998 = vunpack.c.h.b16 %v3240
        %v3999 = vunpack.c.l.b16 %v3241
        %v4000 = vunpack.c.h.b16 %v3241
        %v4001 = vunpack.c.l.b16 %v3242
        %v4002 = vunpack.c.h.b16 %v3242
        %v4003 = vunpack.c.l.b16 %v3243
        %v4004 = vunpack.c.h.b16 %v3243
        %v4005 = vunpack.c.l.b16 %v3244
        %v4006 = vunpack.c.h.b16 %v3244
        %v4007 = vunpack.c.l.b16 %v3245
        %v4008 = vunpack.c.h.b16 %v3245
        %v4009 = vunpack.c.l.b16 %v3246
        %v4010 = vunpack.c.h.b16 %v3246
        %v4011 = vunpack.c.l.b16 %v3247
        %v4012 = vunpack.c.h.b16 %v3247
        %v4013 = vunpack.c.l.b16 %v3248
        %v4014 = vunpack.c.h.b16 %v3248
        %v4015 = vunpack.c.l.b16 %v3249
        %v4016 = vunpack.c.h.b16 %v3249
        %v4017 = vunpack.c.l.b16 %v3250
        %v4018 = vunpack.c.h.b16 %v3250
        %v4019 = vunpack.c.l.b16 %v3251
        %v4020 = vunpack.c.h.b16 %v3251
        %v4021 = vunpack.c.l.b16 %v3252
        %v4022 = vunpack.c.h.b16 %v3252
        %v4023 = vunpack.c.l.b16 %v3253
        %v4024 = vunpack.c.h.b16 %v3253
        %v4025 = vunpack.c.l.b16 %v3254
        %v4026 = vunpack.c.h.b16 %v3254
        %v4027 = vunpack.c.l.b16 %v3255
        %v4028 = vunpack.c.h.b16 %v3255
        %v4029 = vunpack.c.l.b16 %v3256
        %v4030 = vunpack.c.h.b16 %v3256
        %v4031 = vunpack.c.l.b16 %v3257
        %v4032 = vunpack.c.h.b16 %v3257
        %v4033 = vunpack.c.l.b16 %v3258
        %v4034 = vunpack.c.h.b16 %v3258
        %v4035 = vunpack.c.l.b16 %v3259
        %v4036 = vunpack.c.h.b16 %v3259
        %v4037 = vunpack.c.l.b16 %v3260
        %v4038 = vunpack.c.h.b16 %v3260
        %v4039 = vunpack.c.l.b16 %v3261
        %v4040 = vunpack.c.h.b16 %v3261
        %v4041 = vunpack.c.l.b16 %v3262
        %v4042 = vunpack.c.h.b16 %v3262
        %v4043 = vunpack.c.l.b16 %v3263
        %v4044 = vunpack.c.h.b16 %v3263
        %v4045 = vunpack.c.l.b16 %v3264
        %v4046 = vunpack.c.h.b16 %v3264
        %v4047 = vunpack.c.l.b16 %v3265
        %v4048 = vunpack.c.h.b16 %v3265
        %v4049 = vunpack.c.l.b16 %v3266
        %v4050 = vunpack.c.h.b16 %v3266
        %v4051 = vunpack.c.l.b16 %v3267
        %v4052 = vunpack.c.h.b16 %v3267
        %v4053 = vunpack.c.l.b16 %v3268
        %v4054 = vunpack.c.h.b16 %v3268
        %v4055 = vunpack.c.l.b16 %v3269
        %v4056 = vunpack.c.h.b16 %v3269
        %v4057 = vunpack.c.l.b16 %v3270
        %v4058 = vunpack.c.h.b16 %v3270
        %v4059 = vunpack.c.l.b16 %v3271
        %v4060 = vunpack.c.h.b16 %v3271
        %v4061 = vunpack.c.l.b16 %v3272
        %v4062 = vunpack.c.h.b16 %v3272
        %v4063 = vpack.c.b16 %v3555, %v3551
        %v4064 = vpack.c.b16 %v3556, %v3552
        %v4065 = vpack.c.b16 %v3557, %v3553
        %v4066 = vpack.c.b16 %v3558, %v3554
        %v4067 = vpack.c.b16 %v3563, %v3559
        %v4068 = vpack.c.b16 %v3564, %v3560
        %v4069 = vpack.c.b16 %v3565, %v3561
        %v4070 = vpack.c.b16 %v3566, %v3562
        %v4071 = vpack.c.b16 %v3571, %v3567
        %v4072 = vpack.c.b16 %v3572, %v3568
        %v4073 = vpack.c.b16 %v3573, %v3569
        %v4074 = vpack.c.b16 %v3574, %v3570
        %v4075 = vpack.c.b16 %v3579, %v3575
        %v4076 = vpack.c.b16 %v3580, %v3576
        %v4077 = vpack.c.b16 %v3581, %v3577
        %v4078 = vpack.c.b16 %v3582, %v3578
        %v4079 = vpack.c.b16 %v3587, %v3583
        %v4080 = vpack.c.b16 %v3588, %v3584
        %v4081 = vpack.c.b16 %v3589, %v3585
        %v4082 = vpack.c.b16 %v3590, %v3586
        %v4083 = vpack.c.b16 %v3595, %v3591
        %v4084 = vpack.c.b16 %v3596, %v3592
        %v4085 = vpack.c.b16 %v3597, %v3593
        %v4086 = vpack.c.b16 %v3598, %v3594
        %v4087 = vpack.c.b16 %v3603, %v3599
        %v4088 = vpack.c.b16 %v3604, %v3600
        %v4089 = vpack.c.b16 %v3605, %v3601
        %v4090 = vpack.c.b16 %v3606, %v3602
        %v4091 = vpack.c.b16 %v3611, %v3607
        %v4092 = vpack.c.b16 %v3612, %v3608
        %v4093 = vpack.c.b16 %v3613, %v3609
        %v4094 = vpack.c.b16 %v3614, %v3610
        %v4095 = vpack.c.b16 %v3619, %v3615
        %v4096 = vpack.c.b16 %v3620, %v3616
        %v4097 = vpack.c.b16 %v3621, %v3617
        %v4098 = vpack.c.b16 %v3622, %v3618
        %v4099 = vpack.c.b16 %v3627, %v3623
        %v4100 = vpack.c.b16 %v3628, %v3624
        %v4101 = vpack.c.b16 %v3629, %v3625
        %v4102 = vpack.c.b16 %v3630, %v3626
        %v4103 = vpack.c.b16 %v3635, %v3631
        %v4104 = vpack.c.b16 %v3636, %v3632
        %v4105 = vpack.c.b16 %v3637, %v3633
        %v4106 = vpack.c.b16 %v3638, %v3634
        %v4107 = vpack.c.b16 %v3643, %v3639
        %v4108 = vpack.c.b16 %v3644, %v3640
        %v4109 = vpack.c.b16 %v3645, %v3641
        %v4110 = vpack.c.b16 %v3646, %v3642
        %v4111 = vpack.c.b16 %v3651, %v3647
        %v4112 = vpack.c.b16 %v3652, %v3648
        %v4113 = vpack.c.b16 %v3653, %v3649
        %v4114 = vpack.c.b16 %v3654, %v3650
        %v4115 = vpack.c.b16 %v3659, %v3655
        %v4116 = vpack.c.b16 %v3660, %v3656
        %v4117 = vpack.c.b16 %v3661, %v3657
        %v4118 = vpack.c.b16 %v3662, %v3658
        %v4119 = vpack.c.b16 %v3667, %v3663
        %v4120 = vpack.c.b16 %v3668, %v3664
        %v4121 = vpack.c.b16 %v3669, %v3665
        %v4122 = vpack.c.b16 %v3670, %v3666
        %v4123 = vpack.c.b16 %v3675, %v3671
        %v4124 = vpack.c.b16 %v3676, %v3672
        %v4125 = vpack.c.b16 %v3677, %v3673
        %v4126 = vpack.c.b16 %v3678, %v3674
        %v4127 = vpack.c.b16 %v3683, %v3679
        %v4128 = vpack.c.b16 %v3684, %v3680
        %v4129 = vpack.c.b16 %v3685, %v3681
        %v4130 = vpack.c.b16 %v3686, %v3682
        %v4131 = vpack.c.b16 %v3691, %v3687
        %v4132 = vpack.c.b16 %v3692, %v3688
        %v4133 = vpack.c.b16 %v3693, %v3689
        %v4134 = vpack.c.b16 %v3694, %v3690
        %v4135 = vpack.c.b16 %v3699, %v3695
        %v4136 = vpack.c.b16 %v3700, %v3696
        %v4137 = vpack.c.b16 %v3701, %v3697
        %v4138 = vpack.c.b16 %v3702, %v3698
        %v4139 = vpack.c.b16 %v3707, %v3703
        %v4140 = vpack.c.b16 %v3708, %v3704
        %v4141 = vpack.c.b16 %v3709, %v3705
        %v4142 = vpack.c.b16 %v3710, %v3706
        %v4143 = vpack.c.b16 %v3715, %v3711
        %v4144 = vpack.c.b16 %v3716, %v3712
        %v4145 = vpack.c.b16 %v3717, %v3713
        %v4146 = vpack.c.b16 %v3718, %v3714
        %v4147 = vpack.c.b16 %v3723, %v3719
        %v4148 = vpack.c.b16 %v3724, %v3720
        %v4149 = vpack.c.b16 %v3725, %v3721
        %v4150 = vpack.c.b16 %v3726, %v3722
        %v4151 = vpack.c.b16 %v3731, %v3727
        %v4152 = vpack.c.b16 %v3732, %v3728
        %v4153 = vpack.c.b16 %v3733, %v3729
        %v4154 = vpack.c.b16 %v3734, %v3730
        %v4155 = vpack.c.b16 %v3739, %v3735
        %v4156 = vpack.c.b16 %v3740, %v3736
        %v4157 = vpack.c.b16 %v3741, %v3737
        %v4158 = vpack.c.b16 %v3742, %v3738
        %v4159 = vpack.c.b16 %v3747, %v3743
        %v4160 = vpack.c.b16 %v3748, %v3744
        %v4161 = vpack.c.b16 %v3749, %v3745
        %v4162 = vpack.c.b16 %v3750, %v3746
        %v4163 = vpack.c.b16 %v3755, %v3751
        %v4164 = vpack.c.b16 %v3756, %v3752
        %v4165 = vpack.c.b16 %v3757, %v3753
        %v4166 = vpack.c.b16 %v3758, %v3754
        %v4167 = vpack.c.b16 %v3763, %v3759
        %v4168 = vpack.c.b16 %v3764, %v3760
        %v4169 = vpack.c.b16 %v3765, %v3761
        %v4170 = vpack.c.b16 %v3766, %v3762
        %v4171 = vpack.c.b16 %v3771, %v3767
        %v4172 = vpack.c.b16 %v3772, %v3768
        %v4173 = vpack.c.b16 %v3773, %v3769
        %v4174 = vpack.c.b16 %v3774, %v3770
        %v4175 = vpack.c.b16 %v3779, %v3775
        %v4176 = vpack.c.b16 %v3780, %v3776
        %v4177 = vpack.c.b16 %v3781, %v3777
        %v4178 = vpack.c.b16 %v3782, %v3778
        %v4179 = vpack.c.b16 %v3787, %v3783
        %v4180 = vpack.c.b16 %v3788, %v3784
        %v4181 = vpack.c.b16 %v3789, %v3785
        %v4182 = vpack.c.b16 %v3790, %v3786
        %v4183 = vpack.c.b16 %v3795, %v3791
        %v4184 = vpack.c.b16 %v3796, %v3792
        %v4185 = vpack.c.b16 %v3797, %v3793
        %v4186 = vpack.c.b16 %v3798, %v3794
        %v4187 = vpack.c.b16 %v3803, %v3799
        %v4188 = vpack.c.b16 %v3804, %v3800
        %v4189 = vpack.c.b16 %v3805, %v3801
        %v4190 = vpack.c.b16 %v3806, %v3802
        %v4191 = vpack.c.b16 %v3811, %v3807
        %v4192 = vpack.c.b16 %v3812, %v3808
        %v4193 = vpack.c.b16 %v3813, %v3809
        %v4194 = vpack.c.b16 %v3814, %v3810
        %v4195 = vpack.c.b16 %v3819, %v3815
        %v4196 = vpack.c.b16 %v3820, %v3816
        %v4197 = vpack.c.b16 %v3821, %v3817
        %v4198 = vpack.c.b16 %v3822, %v3818
        %v4199 = vpack.c.b16 %v3827, %v3823
        %v4200 = vpack.c.b16 %v3828, %v3824
        %v4201 = vpack.c.b16 %v3829, %v3825
        %v4202 = vpack.c.b16 %v3830, %v3826
        %v4203 = vpack.c.b16 %v3835, %v3831
        %v4204 = vpack.c.b16 %v3836, %v3832
        %v4205 = vpack.c.b16 %v3837, %v3833
        %v4206 = vpack.c.b16 %v3838, %v3834
        %v4207 = vpack.c.b16 %v3843, %v3839
        %v4208 = vpack.c.b16 %v3844, %v3840
        %v4209 = vpack.c.b16 %v3845, %v3841
        %v4210 = vpack.c.b16 %v3846, %v3842
        %v4211 = vpack.c.b16 %v3851, %v3847
        %v4212 = vpack.c.b16 %v3852, %v3848
        %v4213 = vpack.c.b16 %v3853, %v3849
        %v4214 = vpack.c.b16 %v3854, %v3850
        %v4215 = vpack.c.b16 %v3859, %v3855
        %v4216 = vpack.c.b16 %v3860, %v3856
        %v4217 = vpack.c.b16 %v3861, %v3857
        %v4218 = vpack.c.b16 %v3862, %v3858
        %v4219 = vpack.c.b16 %v3867, %v3863
        %v4220 = vpack.c.b16 %v3868, %v3864
        %v4221 = vpack.c.b16 %v3869, %v3865
        %v4222 = vpack.c.b16 %v3870, %v3866
        %v4223 = vpack.c.b16 %v3875, %v3871
        %v4224 = vpack.c.b16 %v3876, %v3872
        %v4225 = vpack.c.b16 %v3877, %v3873
        %v4226 = vpack.c.b16 %v3878, %v3874
        %v4227 = vpack.c.b16 %v3883, %v3879
        %v4228 = vpack.c.b16 %v3884, %v3880
        %v4229 = vpack.c.b16 %v3885, %v3881
        %v4230 = vpack.c.b16 %v3886, %v3882
        %v4231 = vpack.c.b16 %v3891, %v3887
        %v4232 = vpack.c.b16 %v3892, %v3888
        %v4233 = vpack.c.b16 %v3893, %v3889
        %v4234 = vpack.c.b16 %v3894, %v3890
        %v4235 = vpack.c.b16 %v3899, %v3895
        %v4236 = vpack.c.b16 %v3900, %v3896
        %v4237 = vpack.c.b16 %v3901, %v3897
        %v4238 = vpack.c.b16 %v3902, %v3898
        %v4239 = vpack.c.b16 %v3907, %v3903
        %v4240 = vpack.c.b16 %v3908, %v3904
        %v4241 = vpack.c.b16 %v3909, %v3905
        %v4242 = vpack.c.b16 %v3910, %v3906
        %v4243 = vpack.c.b16 %v3915, %v3911
        %v4244 = vpack.c.b16 %v3916, %v3912
        %v4245 = vpack.c.b16 %v3917, %v3913
        %v4246 = vpack.c.b16 %v3918, %v3914
        %v4247 = vpack.c.b16 %v3923, %v3919
        %v4248 = vpack.c.b16 %v3924, %v3920
        %v4249 = vpack.c.b16 %v3925, %v3921
        %v4250 = vpack.c.b16 %v3926, %v3922
        %v4251 = vpack.c.b16 %v3931, %v3927
        %v4252 = vpack.c.b16 %v3932, %v3928
        %v4253 = vpack.c.b16 %v3933, %v3929
        %v4254 = vpack.c.b16 %v3934, %v3930
        %v4255 = vpack.c.b16 %v3939, %v3935
        %v4256 = vpack.c.b16 %v3940, %v3936
        %v4257 = vpack.c.b16 %v3941, %v3937
        %v4258 = vpack.c.b16 %v3942, %v3938
        %v4259 = vpack.c.b16 %v3947, %v3943
        %v4260 = vpack.c.b16 %v3948, %v3944
        %v4261 = vpack.c.b16 %v3949, %v3945
        %v4262 = vpack.c.b16 %v3950, %v3946
        %v4263 = vpack.c.b16 %v3955, %v3951
        %v4264 = vpack.c.b16 %v3956, %v3952
        %v4265 = vpack.c.b16 %v3957, %v3953
        %v4266 = vpack.c.b16 %v3958, %v3954
        %v4267 = vpack.c.b16 %v3963, %v3959
        %v4268 = vpack.c.b16 %v3964, %v3960
        %v4269 = vpack.c.b16 %v3965, %v3961
        %v4270 = vpack.c.b16 %v3966, %v3962
        %v4271 = vpack.c.b16 %v3971, %v3967
        %v4272 = vpack.c.b16 %v3972, %v3968
        %v4273 = vpack.c.b16 %v3973, %v3969
        %v4274 = vpack.c.b16 %v3974, %v3970
        %v4275 = vpack.c.b16 %v3979, %v3975
        %v4276 = vpack.c.b16 %v3980, %v3976
        %v4277 = vpack.c.b16 %v3981, %v3977
        %v4278 = vpack.c.b16 %v3982, %v3978
        %v4279 = vpack.c.b16 %v3987, %v3983
        %v4280 = vpack.c.b16 %v3988, %v3984
        %v4281 = vpack.c.b16 %v3989, %v3985
        %v4282 = vpack.c.b16 %v3990, %v3986
        %v4283 = vpack.c.b16 %v3995, %v3991
        %v4284 = vpack.c.b16 %v3996, %v3992
        %v4285 = vpack.c.b16 %v3997, %v3993
        %v4286 = vpack.c.b16 %v3998, %v3994
        %v4287 = vpack.c.b16 %v4003, %v3999
        %v4288 = vpack.c.b16 %v4004, %v4000
        %v4289 = vpack.c.b16 %v4005, %v4001
        %v4290 = vpack.c.b16 %v4006, %v4002
        %v4291 = vpack.c.b16 %v4011, %v4007
        %v4292 = vpack.c.b16 %v4012, %v4008
        %v4293 = vpack.c.b16 %v4013, %v4009
        %v4294 = vpack.c.b16 %v4014, %v4010
        %v4295 = vpack.c.b16 %v4019, %v4015
        %v4296 = vpack.c.b16 %v4020, %v4016
        %v4297 = vpack.c.b16 %v4021, %v4017
        %v4298 = vpack.c.b16 %v4022, %v4018
        %v4299 = vpack.c.b16 %v4027, %v4023
        %v4300 = vpack.c.b16 %v4028, %v4024
        %v4301 = vpack.c.b16 %v4029, %v4025
        %v4302 = vpack.c.b16 %v4030, %v4026
        %v4303 = vpack.c.b16 %v4035, %v4031
        %v4304 = vpack.c.b16 %v4036, %v4032
        %v4305 = vpack.c.b16 %v4037, %v4033
        %v4306 = vpack.c.b16 %v4038, %v4034
        %v4307 = vpack.c.b16 %v4043, %v4039
        %v4308 = vpack.c.b16 %v4044, %v4040
        %v4309 = vpack.c.b16 %v4045, %v4041
        %v4310 = vpack.c.b16 %v4046, %v4042
        %v4311 = vpack.c.b16 %v4051, %v4047
        %v4312 = vpack.c.b16 %v4052, %v4048
        %v4313 = vpack.c.b16 %v4053, %v4049
        %v4314 = vpack.c.b16 %v4054, %v4050
        %v4315 = vpack.c.b16 %v4059, %v4055
        %v4316 = vpack.c.b16 %v4060, %v4056
        %v4317 = vpack.c.b16 %v4061, %v4057
        %v4318 = vpack.c.b16 %v4062, %v4058
        %4575 = vmatprep.subr.bf16.mxu0 %v4092
        %4576 = vmatpush1.bf16.msra.mxu0 %v4091
        %4577 = vmatprep.subr.bf16.mxu0 %v4088
        %4578 = vmatpush1.bf16.msra.mxu0 %v4087
        %4579 = vmatprep.subr.bf16.mxu0 %v4084
        %4580 = vmatpush1.bf16.msra.mxu0 %v4083
        %4581 = vmatprep.subr.bf16.mxu0 %v4080
        %4582 = vmatpush1.bf16.msra.mxu0 %v4079
        %4583 = vmatprep.subr.bf16.mxu0 %v4076
        %4584 = vmatpush1.bf16.msra.mxu0 %v4075
        %4585 = vmatprep.subr.bf16.mxu0 %v4072
        %4586 = vmatpush1.bf16.msra.mxu0 %v4071
        %4587 = vmatprep.subr.bf16.mxu0 %v4068
        %4588 = vmatpush1.bf16.msra.mxu0 %v4067
        %4589 = vmatprep.subr.bf16.mxu0 %v4064
        %4590 = vmatpush1.bf16.msra.mxu0 %v4063
        %4591 = vmatprep.subr.bf16.mxu0 %v4124
        %4592 = vmatpush2.bf16.msra.mxu0 %v4123
        %4593 = vmatprep.subr.bf16.mxu0 %v4120
        %4594 = vmatpush2.bf16.msra.mxu0 %v4119
        %4595 = vmatprep.subr.bf16.mxu0 %v4116
        %4596 = vmatpush2.bf16.msra.mxu0 %v4115
        %4597 = vmatprep.subr.bf16.mxu0 %v4112
        %4598 = vmatpush2.bf16.msra.mxu0 %v4111
        %4599 = vmatprep.subr.bf16.mxu0 %v4108
        %4600 = vmatpush2.bf16.msra.mxu0 %v4107
        %4601 = vmatprep.subr.bf16.mxu0 %v4104
        %4602 = vmatpush2.bf16.msra.mxu0 %v4103
        %4603 = vmatprep.subr.bf16.mxu0 %v4100
        %4604 = vmatpush2.bf16.msra.mxu0 %v4099
        %4605 = vmatprep.subr.bf16.mxu0 %v4096
        %4606 = vmatpush2.bf16.msra.mxu0 %v4095
        %4607 = vmatprep.mubr.bf16.mxu0 %v3010
        %4608 = vmatmul.mubr.bf16.gmra.mxu0 %v3009
        %v4609 = vpop.f32.mrf.mxu0
        %v4610 = vadd.f32 %v3278, %v4609
        %v4611 = vpop.f32.mrf.mxu0
        %v4612 = vadd.f32 %v3282, %v4611
        %v4613 = vpop.f32.mrf.mxu0
        %v4614 = vpop.f32.mrf.mxu0
        %4615 = vdwg.mxu0
        %4616 = vmatprep.subr.bf16.mxu0 %v4156
        %4617 = vmatpush1.bf16.msra.mxu0 %v4155
        %4618 = vmatprep.subr.bf16.mxu0 %v4152
        %4619 = vmatpush1.bf16.msra.mxu0 %v4151
        %4620 = vmatprep.subr.bf16.mxu0 %v4148
        %4621 = vmatpush1.bf16.msra.mxu0 %v4147
        %4622 = vmatprep.subr.bf16.mxu0 %v4144
        %4623 = vmatpush1.bf16.msra.mxu0 %v4143
        %4624 = vmatprep.subr.bf16.mxu0 %v4140
        %4625 = vmatpush1.bf16.msra.mxu0 %v4139
        %4626 = vmatprep.subr.bf16.mxu0 %v4136
        %4627 = vmatpush1.bf16.msra.mxu0 %v4135
        %4628 = vmatprep.subr.bf16.mxu0 %v4132
        %4629 = vmatpush1.bf16.msra.mxu0 %v4131
        %4630 = vmatprep.subr.bf16.mxu0 %v4128
        %4631 = vmatpush1.bf16.msra.mxu0 %v4127
        %4632 = vmatprep.subr.bf16.mxu0 %v4188
        %4633 = vmatpush2.bf16.msra.mxu0 %v4187
        %4634 = vmatprep.subr.bf16.mxu0 %v4184
        %4635 = vmatpush2.bf16.msra.mxu0 %v4183
        %4636 = vmatprep.subr.bf16.mxu0 %v4180
        %4637 = vmatpush2.bf16.msra.mxu0 %v4179
        %4638 = vmatprep.subr.bf16.mxu0 %v4176
        %4639 = vmatpush2.bf16.msra.mxu0 %v4175
        %4640 = vmatprep.subr.bf16.mxu0 %v4172
        %4641 = vmatpush2.bf16.msra.mxu0 %v4171
        %4642 = vmatprep.subr.bf16.mxu0 %v4168
        %4643 = vmatpush2.bf16.msra.mxu0 %v4167
        %4644 = vmatprep.subr.bf16.mxu0 %v4164
        %4645 = vmatpush2.bf16.msra.mxu0 %v4163
        %4646 = vmatprep.subr.bf16.mxu0 %v4160
        %4647 = vmatpush2.bf16.msra.mxu0 %v4159
        %4648 = vmatprep.mubr.bf16.mxu0 %v3012
        %4649 = vmatmul.mubr.bf16.gmra.mxu0 %v3011
        %v4650 = vpop.f32.mrf.mxu0
        %v4651 = vadd.f32 %v4610, %v4650
        %v4652 = vpop.f32.mrf.mxu0
        %v4653 = vadd.f32 %v4612, %v4652
        %v4654 = vpop.f32.mrf.mxu0
        %v4655 = vpop.f32.mrf.mxu0
        %4656 = vdwg.mxu0
        %4657 = vmatprep.subr.bf16.mxu0 %v4220
        %4658 = vmatpush1.bf16.msra.mxu0 %v4219
        %4659 = vmatprep.subr.bf16.mxu0 %v4216
        %4660 = vmatpush1.bf16.msra.mxu0 %v4215
        %4661 = vmatprep.subr.bf16.mxu0 %v4212
        %4662 = vmatpush1.bf16.msra.mxu0 %v4211
        %4663 = vmatprep.subr.bf16.mxu0 %v4208
        %4664 = vmatpush1.bf16.msra.mxu0 %v4207
        %4665 = vmatprep.subr.bf16.mxu0 %v4204
        %4666 = vmatpush1.bf16.msra.mxu0 %v4203
        %4667 = vmatprep.subr.bf16.mxu0 %v4200
        %4668 = vmatpush1.bf16.msra.mxu0 %v4199
        %4669 = vmatprep.subr.bf16.mxu0 %v4196
        %4670 = vmatpush1.bf16.msra.mxu0 %v4195
        %4671 = vmatprep.subr.bf16.mxu0 %v4192
        %4672 = vmatpush1.bf16.msra.mxu0 %v4191
        %4673 = vmatprep.subr.bf16.mxu0 %v4252
        %4674 = vmatpush2.bf16.msra.mxu0 %v4251
        %4675 = vmatprep.subr.bf16.mxu0 %v4248
        %4676 = vmatpush2.bf16.msra.mxu0 %v4247
        %4677 = vmatprep.subr.bf16.mxu0 %v4244
        %4678 = vmatpush2.bf16.msra.mxu0 %v4243
        %4679 = vmatprep.subr.bf16.mxu0 %v4240
        %4680 = vmatpush2.bf16.msra.mxu0 %v4239
        %4681 = vmatprep.subr.bf16.mxu0 %v4236
        %4682 = vmatpush2.bf16.msra.mxu0 %v4235
        %4683 = vmatprep.subr.bf16.mxu0 %v4232
        %4684 = vmatpush2.bf16.msra.mxu0 %v4231
        %4685 = vmatprep.subr.bf16.mxu0 %v4228
        %4686 = vmatpush2.bf16.msra.mxu0 %v4227
        %4687 = vmatprep.subr.bf16.mxu0 %v4224
        %4688 = vmatpush2.bf16.msra.mxu0 %v4223
        %4689 = vmatprep.mubr.bf16.mxu0 %v3014
        %4690 = vmatmul.mubr.bf16.gmra.mxu0 %v3013
        %v4691 = vpop.f32.mrf.mxu0
        %v4692 = vadd.f32 %v4651, %v4691
        %v4693 = vpop.f32.mrf.mxu0
        %v4694 = vadd.f32 %v4653, %v4693
        %v4695 = vpop.f32.mrf.mxu0
        %v4696 = vpop.f32.mrf.mxu0
        %4697 = vdwg.mxu0
        %4698 = vmatprep.subr.bf16.mxu0 %v4284
        %4699 = vmatpush1.bf16.msra.mxu0 %v4283
        %4700 = vmatprep.subr.bf16.mxu0 %v4280
        %4701 = vmatpush1.bf16.msra.mxu0 %v4279
        %4702 = vmatprep.subr.bf16.mxu0 %v4276
        %4703 = vmatpush1.bf16.msra.mxu0 %v4275
        %4704 = vmatprep.subr.bf16.mxu0 %v4272
        %4705 = vmatpush1.bf16.msra.mxu0 %v4271
        %4706 = vmatprep.subr.bf16.mxu0 %v4268
        %4707 = vmatpush1.bf16.msra.mxu0 %v4267
        %4708 = vmatprep.subr.bf16.mxu0 %v4264
        %4709 = vmatpush1.bf16.msra.mxu0 %v4263
        %4710 = vmatprep.subr.bf16.mxu0 %v4260
        %4711 = vmatpush1.bf16.msra.mxu0 %v4259
        %4712 = vmatprep.subr.bf16.mxu0 %v4256
        %4713 = vmatpush1.bf16.msra.mxu0 %v4255
        %4714 = vmatprep.subr.bf16.mxu0 %v4316
        %4715 = vmatpush2.bf16.msra.mxu0 %v4315
        %4716 = vmatprep.subr.bf16.mxu0 %v4312
        %4717 = vmatpush2.bf16.msra.mxu0 %v4311
        %4718 = vmatprep.subr.bf16.mxu0 %v4308
        %4719 = vmatpush2.bf16.msra.mxu0 %v4307
        %4720 = vmatprep.subr.bf16.mxu0 %v4304
        %4721 = vmatpush2.bf16.msra.mxu0 %v4303
        %4722 = vmatprep.subr.bf16.mxu0 %v4300
        %4723 = vmatpush2.bf16.msra.mxu0 %v4299
        %4724 = vmatprep.subr.bf16.mxu0 %v4296
        %4725 = vmatpush2.bf16.msra.mxu0 %v4295
        %4726 = vmatprep.subr.bf16.mxu0 %v4292
        %4727 = vmatpush2.bf16.msra.mxu0 %v4291
        %4728 = vmatprep.subr.bf16.mxu0 %v4288
        %4729 = vmatpush2.bf16.msra.mxu0 %v4287
        %4730 = vmatprep.mubr.bf16.mxu0 %v3016
        %4731 = vmatmul.mubr.bf16.gmra.mxu0 %v3015
        %v4732 = vpop.f32.mrf.mxu0
        %v4733 = vadd.f32 %v4692, %v4732
        %v4734 = vpop.f32.mrf.mxu0
        %v4735 = vadd.f32 %v4694, %v4734
        %v4736 = vpop.f32.mrf.mxu0
        %v4737 = vpop.f32.mrf.mxu0
        %4738 = vdwg.mxu0
        %4739 = vmatprep.subr.bf16.mxu0 %v4094
        %4740 = vmatpush1.bf16.msra.mxu0 %v4093
        %4741 = vmatprep.subr.bf16.mxu0 %v4090
        %4742 = vmatpush1.bf16.msra.mxu0 %v4089
        %4743 = vmatprep.subr.bf16.mxu0 %v4086
        %4744 = vmatpush1.bf16.msra.mxu0 %v4085
        %4745 = vmatprep.subr.bf16.mxu0 %v4082
        %4746 = vmatpush1.bf16.msra.mxu0 %v4081
        %4747 = vmatprep.subr.bf16.mxu0 %v4078
        %4748 = vmatpush1.bf16.msra.mxu0 %v4077
        %4749 = vmatprep.subr.bf16.mxu0 %v4074
        %4750 = vmatpush1.bf16.msra.mxu0 %v4073
        %4751 = vmatprep.subr.bf16.mxu0 %v4070
        %4752 = vmatpush1.bf16.msra.mxu0 %v4069
        %4753 = vmatprep.subr.bf16.mxu0 %v4066
        %4754 = vmatpush1.bf16.msra.mxu0 %v4065
        %4755 = vmatprep.subr.bf16.mxu0 %v4126
        %4756 = vmatpush2.bf16.msra.mxu0 %v4125
        %4757 = vmatprep.subr.bf16.mxu0 %v4122
        %4758 = vmatpush2.bf16.msra.mxu0 %v4121
        %4759 = vmatprep.subr.bf16.mxu0 %v4118
        %4760 = vmatpush2.bf16.msra.mxu0 %v4117
        %4761 = vmatprep.subr.bf16.mxu0 %v4114
        %4762 = vmatpush2.bf16.msra.mxu0 %v4113
        %4763 = vmatprep.subr.bf16.mxu0 %v4110
        %4764 = vmatpush2.bf16.msra.mxu0 %v4109
        %4765 = vmatprep.subr.bf16.mxu0 %v4106
        %4766 = vmatpush2.bf16.msra.mxu0 %v4105
        %4767 = vmatprep.subr.bf16.mxu0 %v4102
        %4768 = vmatpush2.bf16.msra.mxu0 %v4101
        %4769 = vmatprep.subr.bf16.mxu0 %v4098
        %4770 = vmatpush2.bf16.msra.mxu0 %v4097
        %4771 = vmatprep.mubr.bf16.mxu0 %v3010
        %4772 = vmatmul.mubr.bf16.gmra.mxu0 %v3009
        %v4773 = vpop.f32.mrf.mxu0
        %v4774 = vadd.f32 %v3286, %v4773
        %v4775 = vpop.f32.mrf.mxu0
        %v4776 = vadd.f32 %v3290, %v4775
        %v4777 = vpop.f32.mrf.mxu0
        %v4778 = vpop.f32.mrf.mxu0
        %4779 = vdwg.mxu0
        %4780 = vmatprep.subr.bf16.mxu0 %v4158
        %4781 = vmatpush1.bf16.msra.mxu0 %v4157
        %4782 = vmatprep.subr.bf16.mxu0 %v4154
        %4783 = vmatpush1.bf16.msra.mxu0 %v4153
        %4784 = vmatprep.subr.bf16.mxu0 %v4150
        %4785 = vmatpush1.bf16.msra.mxu0 %v4149
        %4786 = vmatprep.subr.bf16.mxu0 %v4146
        %4787 = vmatpush1.bf16.msra.mxu0 %v4145
        %4788 = vmatprep.subr.bf16.mxu0 %v4142
        %4789 = vmatpush1.bf16.msra.mxu0 %v4141
        %4790 = vmatprep.subr.bf16.mxu0 %v4138
        %4791 = vmatpush1.bf16.msra.mxu0 %v4137
        %4792 = vmatprep.subr.bf16.mxu0 %v4134
        %4793 = vmatpush1.bf16.msra.mxu0 %v4133
        %4794 = vmatprep.subr.bf16.mxu0 %v4130
        %4795 = vmatpush1.bf16.msra.mxu0 %v4129
        %4796 = vmatprep.subr.bf16.mxu0 %v4190
        %4797 = vmatpush2.bf16.msra.mxu0 %v4189
        %4798 = vmatprep.subr.bf16.mxu0 %v4186
        %4799 = vmatpush2.bf16.msra.mxu0 %v4185
        %4800 = vmatprep.subr.bf16.mxu0 %v4182
        %4801 = vmatpush2.bf16.msra.mxu0 %v4181
        %4802 = vmatprep.subr.bf16.mxu0 %v4178
        %4803 = vmatpush2.bf16.msra.mxu0 %v4177
        %4804 = vmatprep.subr.bf16.mxu0 %v4174
        %4805 = vmatpush2.bf16.msra.mxu0 %v4173
        %4806 = vmatprep.subr.bf16.mxu0 %v4170
        %4807 = vmatpush2.bf16.msra.mxu0 %v4169
        %4808 = vmatprep.subr.bf16.mxu0 %v4166
        %4809 = vmatpush2.bf16.msra.mxu0 %v4165
        %4810 = vmatprep.subr.bf16.mxu0 %v4162
        %4811 = vmatpush2.bf16.msra.mxu0 %v4161
        %4812 = vmatprep.mubr.bf16.mxu0 %v3012
        %4813 = vmatmul.mubr.bf16.gmra.mxu0 %v3011
        %v4814 = vpop.f32.mrf.mxu0
        %v4815 = vadd.f32 %v4774, %v4814
        %v4816 = vpop.f32.mrf.mxu0
        %v4817 = vadd.f32 %v4776, %v4816
        %v4818 = vpop.f32.mrf.mxu0
        %v4819 = vpop.f32.mrf.mxu0
        %4820 = vdwg.mxu0
        %4821 = vmatprep.subr.bf16.mxu0 %v4222
        %4822 = vmatpush1.bf16.msra.mxu0 %v4221
        %4823 = vmatprep.subr.bf16.mxu0 %v4218
        %4824 = vmatpush1.bf16.msra.mxu0 %v4217
        %4825 = vmatprep.subr.bf16.mxu0 %v4214
        %4826 = vmatpush1.bf16.msra.mxu0 %v4213
        %4827 = vmatprep.subr.bf16.mxu0 %v4210
        %4828 = vmatpush1.bf16.msra.mxu0 %v4209
        %4829 = vmatprep.subr.bf16.mxu0 %v4206
        %4830 = vmatpush1.bf16.msra.mxu0 %v4205
        %4831 = vmatprep.subr.bf16.mxu0 %v4202
        %4832 = vmatpush1.bf16.msra.mxu0 %v4201
        %4833 = vmatprep.subr.bf16.mxu0 %v4198
        %4834 = vmatpush1.bf16.msra.mxu0 %v4197
        %4835 = vmatprep.subr.bf16.mxu0 %v4194
        %4836 = vmatpush1.bf16.msra.mxu0 %v4193
        %4837 = vmatprep.subr.bf16.mxu0 %v4254
        %4838 = vmatpush2.bf16.msra.mxu0 %v4253
        %4839 = vmatprep.subr.bf16.mxu0 %v4250
        %4840 = vmatpush2.bf16.msra.mxu0 %v4249
        %4841 = vmatprep.subr.bf16.mxu0 %v4246
        %4842 = vmatpush2.bf16.msra.mxu0 %v4245
        %4843 = vmatprep.subr.bf16.mxu0 %v4242
        %4844 = vmatpush2.bf16.msra.mxu0 %v4241
        %4845 = vmatprep.subr.bf16.mxu0 %v4238
        %4846 = vmatpush2.bf16.msra.mxu0 %v4237
        %4847 = vmatprep.subr.bf16.mxu0 %v4234
        %4848 = vmatpush2.bf16.msra.mxu0 %v4233
        %4849 = vmatprep.subr.bf16.mxu0 %v4230
        %4850 = vmatpush2.bf16.msra.mxu0 %v4229
        %4851 = vmatprep.subr.bf16.mxu0 %v4226
        %4852 = vmatpush2.bf16.msra.mxu0 %v4225
        %4853 = vmatprep.mubr.bf16.mxu0 %v3014
        %4854 = vmatmul.mubr.bf16.gmra.mxu0 %v3013
        %v4855 = vpop.f32.mrf.mxu0
        %v4856 = vadd.f32 %v4815, %v4855
        %v4857 = vpop.f32.mrf.mxu0
        %v4858 = vadd.f32 %v4817, %v4857
        %v4859 = vpop.f32.mrf.mxu0
        %v4860 = vpop.f32.mrf.mxu0
        %4861 = vdwg.mxu0
        %4862 = vmatprep.subr.bf16.mxu0 %v4286
        %4863 = vmatpush1.bf16.msra.mxu0 %v4285
        %4864 = vmatprep.subr.bf16.mxu0 %v4282
        %4865 = vmatpush1.bf16.msra.mxu0 %v4281
        %4866 = vmatprep.subr.bf16.mxu0 %v4278
        %4867 = vmatpush1.bf16.msra.mxu0 %v4277
        %4868 = vmatprep.subr.bf16.mxu0 %v4274
        %4869 = vmatpush1.bf16.msra.mxu0 %v4273
        %4870 = vmatprep.subr.bf16.mxu0 %v4270
        %4871 = vmatpush1.bf16.msra.mxu0 %v4269
        %4872 = vmatprep.subr.bf16.mxu0 %v4266
        %4873 = vmatpush1.bf16.msra.mxu0 %v4265
        %4874 = vmatprep.subr.bf16.mxu0 %v4262
        %4875 = vmatpush1.bf16.msra.mxu0 %v4261
        %4876 = vmatprep.subr.bf16.mxu0 %v4258
        %4877 = vmatpush1.bf16.msra.mxu0 %v4257
        %4878 = vmatprep.subr.bf16.mxu0 %v4318
        %4879 = vmatpush2.bf16.msra.mxu0 %v4317
        %4880 = vmatprep.subr.bf16.mxu0 %v4314
        %4881 = vmatpush2.bf16.msra.mxu0 %v4313
        %4882 = vmatprep.subr.bf16.mxu0 %v4310
        %4883 = vmatpush2.bf16.msra.mxu0 %v4309
        %4884 = vmatprep.subr.bf16.mxu0 %v4306
        %4885 = vmatpush2.bf16.msra.mxu0 %v4305
        %4886 = vmatprep.subr.bf16.mxu0 %v4302
        %4887 = vmatpush2.bf16.msra.mxu0 %v4301
        %4888 = vmatprep.subr.bf16.mxu0 %v4298
        %4889 = vmatpush2.bf16.msra.mxu0 %v4297
        %4890 = vmatprep.subr.bf16.mxu0 %v4294
        %4891 = vmatpush2.bf16.msra.mxu0 %v4293
        %4892 = vmatprep.subr.bf16.mxu0 %v4290
        %4893 = vmatpush2.bf16.msra.mxu0 %v4289
        %4894 = vmatprep.mubr.bf16.mxu0 %v3016
        %4895 = vmatmul.mubr.bf16.gmra.mxu0 %v3015
        %v4896 = vpop.f32.mrf.mxu0
        %v4897 = vadd.f32 %v4856, %v4896
        %v4898 = vpop.f32.mrf.mxu0
        %v4899 = vadd.f32 %v4858, %v4898
        %v4900 = vpop.f32.mrf.mxu0
        %v4901 = vpop.f32.mrf.mxu0
        %4902 = vdwg.mxu0
        %v4903 = vtanh.pop %v4733
        %v4904 = vtanh.pop %v4735
        %v4905 = vtanh.pop %v4897
        %v4906 = vtanh.pop %v4899
        %4907 = vst [vmem:[%s479] sm:$0xff] %v4903
        %4908 = vst [vmem:[%s479 + $0x8] sm:$0xff] %v4904
        %4909 = vst [vmem:[%s479 + $0x10] sm:$0xff] %v4905
        %4910 = vst [vmem:[%s479 + $0x18] sm:$0xff] %v4906
        %s4911 = sand.u32 %s237, 1
        %s4912 = scalar_lea.sflag [#allocation4], %s4911
        %s4913 = sand.u32 %s237, 1
        %s4914 = smul.addr %s4913, 32
        %s4915 = scalar_lea.vmem [#allocation17], %s4914
        // Predicated region
        $region93: #{tpu_custom_call.1} parent=55 // pred_check
          %p4916 = pneg %p247
        $region94: #{tpu_custom_call.1} parent=55 // pred_check_branch
          %4918 = sbr.rel (%p4916) target = $region96
        $region95: #{tpu_custom_call.1} parent=55 // pred_region
          %s4919 = smul.u32 4, %s30
          %s4921 = ssub.s32 512, 512
          %4922 = vsyncadd %s4912, %s4921
          %s4923 = smul.addr %s4919, 128
          %s4924 = scalar_lea.hbm %s9, %s4923
          %s4926 = sshll.u32 %s4915, 4
          %s4927 = int_to_ptr.vmem [resolvable:$true] %s4926
          %4929 = dma.vmem_to_hbm [thread:$0]  %s4927, 512, %s4924, %s4912
        $region96: #{tpu_custom_call.1} parent=55 // pred_fallthru
          _
      $region56: #{tpu_custom_call.1} parent=5 // pred_fallthru
        _
      %p4930 = scmp.le.s32.totalorder 2, %s25
      // Predicated region
      $region97: #{tpu_custom_call.1} parent=5 // pred_check
        %p4931 = pneg %p4930
      $region98: #{tpu_custom_call.1} parent=5 // pred_check_branch
        %4933 = sbr.rel (%p4931) target = $region100
      $region99: #{tpu_custom_call.1} parent=5 // pred_region
        %s4934 = ssub.s32 %s25, 2
        // Predicated region
        $region101: #{tpu_custom_call.1} parent=99 // pred_check
          %p4935 = pneg %p253
        $region102: #{tpu_custom_call.1} parent=99 // pred_check_branch
          %4937 = sbr.rel (%p4935) target = $region104
        $region103: #{tpu_custom_call.1} parent=99 // pred_region
          %s4938 = sand.u32 %s238, 1
          %s4939 = scalar_lea.sflag [#allocation4], %s4938
          %s4940 = sand.u32 %s238, 1
          %s4941 = smul.addr %s4940, 32
          %s4942 = scalar_lea.vmem [#allocation17], %s4941
          %4943 = dma.done %s4939, 512
        $region104: #{tpu_custom_call.1} parent=99 // pred_fallthru
          _
      $region100: #{tpu_custom_call.1} parent=5 // pred_fallthru
        _
    $region6: #{tpu_custom_call.1} parent=1 // loop_footer
      %s29 = sadd.s32 1, %s25
    $region7: #{tpu_custom_call.1} parent=1 // loop_footer_branch
      %24 = sbr.rel target = $region3
    $region8: #{tpu_custom_call.1} parent=1 // loop_exit
      _
    %4944 = vsyncpa [#allocation3], 1
    %s4945 = scalar_lea.sflag [#allocation3], 1
    %4946 = vsyncpa %s4945, 1
    %4947 = vsyncpa [#allocation6], 1
    %4948 = vsyncpa [#allocation9], 1
    %4949 = vsyncpa [#allocation12], 1
    %4950 = vsyncpa [#allocation15], 1
    %s4951 = scalar_lea.sflag [#allocation15], 1
    %4952 = vsyncpa %s4951, 1
    %4953 = vsyncpa [#allocation4], 1
    %s4954 = scalar_lea.sflag [#allocation4], 1
    %4955 = vsyncpa %s4954, 1

</llo_original>
